<compile_context>
chip_gen: v5e
topology: v5e:2x2
jax: 0.10.0
libtpu: 0.0.40
codegen_flags: <defaults>
</compile_context>

<pallas_src>
import jax
import jax.numpy as jnp
from jax import lax
from jax.experimental import pallas as pl
from jax.experimental.pallas import tpu as pltpu

N_LAYERS = 4
BN_EPS = 1e-5

# Keep A_hat resident in VMEM when its bf16 copy fits this budget; otherwise
# stream it from HBM as double-buffered row tiles.
A_RESIDENT_BYTES = 12 << 20


# ------------------------- kernel -------------------------

def make_gcn_kernel(n_real, n_pad, row_tile, n_layers, a_resident):
    num_tiles = n_pad // row_tile

    def kernel(x_ref, pool_ref,
               wemb_ref, bemb_ref,
               wl_ref, bl_ref, gamma_ref, beta_ref,
               w1_ref, b1_ref, w2_ref, b2_ref, w3_ref, b3_ref,
               a_ref,
               out_ref,
               *scratch):
        if a_resident:
            h_s, xw_s, agg_s = scratch
        else:
            h_s, xw_s, agg_s, a_buf, sem = scratch

        # embedding_h: Linear(in_dim, hidden) -- bf16 operands, f32 accumulate
        h_s[...] = jnp.dot(x_ref[...], wemb_ref[...],
                           preferred_element_type=jnp.float32) + bemb_ref[...]

        inv_n = jnp.float32(1.0 / n_real)
        if n_pad != n_real:
            # mask so padded (zero) node rows do not pollute BN batch statistics
            row_ids = lax.broadcasted_iota(jnp.int32, (n_pad, 1), 0)
            valid = (row_ids < n_real).astype(jnp.float32)
        else:
            valid = None

        if not a_resident:
            def fetch(t, slot):
                row0 = t * row_tile
                pltpu.make_async_copy(a_ref.at[pl.ds(row0, row_tile), :],
                                      a_buf.at[slot], sem.at[slot]).start()

        for l in range(n_layers):
            if not a_resident:
                # issue the first A row-tile DMA so it overlaps the h @ W matmul
                fetch(0, 0)

            # hoist per-layer (1, H) parameter rows once (no repeated broadcasts)
            w_l = wl_ref[l]                            # (H, H)  bf16
            bias_l = bl_ref[pl.ds(l, 1), :]            # (1, H)  f32
            gamma_l = gamma_ref[pl.ds(l, 1), :]        # (1, H)  f32
            beta_l = beta_ref[pl.ds(l, 1), :]          # (1, H)  f32

            # xw = h @ W  (bf16 MXU, f32 accumulate; stored bf16 for A @ xw)
            xw_s[...] = jnp.dot(h_s[...].astype(jnp.bfloat16), w_l,
                                preferred_element_type=jnp.float32
                                ).astype(jnp.bfloat16)

            if a_resident:
                # A_hat lives in VMEM for the whole kernel -> one big MXU pass
                agg_s[...] = jnp.dot(a_ref[...], xw_s[...],
                                     preferred_element_type=jnp.float32) + bias_l
            else:
                # agg = A_hat @ xw + b : stream A row-tiles HBM->VMEM, double-buffered
                @pl.loop(0, num_tiles)
                def _(t):
                    slot = t % 2
                    pltpu.make_async_copy(a_ref.at[pl.ds(0, row_tile), :],
                                          a_buf.at[slot], sem.at[slot]).wait()

                    @pl.when(t + 1 < num_tiles)
                    def _():
                        fetch(t + 1, 1 - slot)

                    row0 = pl.multiple_of(t * row_tile, row_tile)
                    tile = jnp.dot(a_buf[slot], xw_s[...],
                                   preferred_element_type=jnp.float32)
                    agg_s[pl.ds(row0, row_tile), :] = tile + bias_l

            # BatchNorm1d (training mode, biased variance), single-pass stats
            agg = agg_s[...]
            if valid is None:
                s1 = jnp.sum(agg, axis=0, keepdims=True)
                s2 = jnp.sum(agg * agg, axis=0, keepdims=True)
            else:
                am = agg * valid
                s1 = jnp.sum(am, axis=0, keepdims=True)
                s2 = jnp.sum(am * agg, axis=0, keepdims=True)
            mean = s1 * inv_n
            var = jnp.maximum(s2 * inv_n - mean * mean, 0.0)   # clamp f32 cancellation
            scale = gamma_l * lax.rsqrt(var + BN_EPS)
            shift = beta_l - mean * scale

            # ReLU + residual (all f32)
            h_s[...] = jnp.maximum(agg * scale + shift, 0.0) + h_s[...]

        # global_mean_pool as a matmul with the (B, N) pooling matrix
        pooled = jnp.dot(pool_ref[...], h_s[...].astype(jnp.bfloat16),
                         preferred_element_type=jnp.float32)

        # MLP head: Linear -> ReLU -> Linear -> ReLU -> Linear
        z = jnp.maximum(
            jnp.dot(pooled.astype(jnp.bfloat16), w1_ref[...],
                    preferred_element_type=jnp.float32) + b1_ref[...], 0.0)
        z = jnp.maximum(
            jnp.dot(z.astype(jnp.bfloat16), w2_ref[...],
                    preferred_element_type=jnp.float32) + b2_ref[...], 0.0)
        out_ref[...] = jnp.dot(z.astype(jnp.bfloat16), w3_ref[...],
                               preferred_element_type=jnp.float32) + b3_ref[...]

    return kernel


# ------------------------- plain-JAX glue -------------------------

def _round_up(v, m):
    return ((v + m - 1) // m) * m


def _pad2(a, r, c, dtype):
    out = jnp.zeros((r, c), dtype)
    return out.at[:a.shape[0], :a.shape[1]].set(a.astype(dtype))


def _pad3(a, d0, d1, d2, dtype):
    out = jnp.zeros((d0, d1, d2), dtype)
    return out.at[:a.shape[0], :a.shape[1], :a.shape[2]].set(a.astype(dtype))


def build_normalized_adjacency(edge_index, num_nodes):
    """Dense D^-1/2 (A + I) D^-1/2 following PyG GCNConv (add_self_loops=True)."""
    src, dst = edge_index[0], edge_index[1]
    loop = jnp.arange(num_nodes, dtype=src.dtype)
    src = jnp.concatenate([src, loop])
    dst = jnp.concatenate([dst, loop])
    w = jnp.ones(src.shape[0], jnp.float32)
    deg = jnp.zeros(num_nodes, jnp.float32).at[dst].add(w)
    dinv = jnp.where(deg > 0, 1.0 / jnp.sqrt(deg), 0.0)
    norm = dinv[src] * w * dinv[dst]
    a = jnp.zeros((num_nodes, num_nodes), jnp.float32).at[dst, src].add(norm)
    return a


def build_pool_matrix(batch, num_graphs):
    """(B, N) matrix s.t. P @ h == global_mean_pool(h, batch)."""
    onehot = (batch[None, :] == jnp.arange(num_graphs)[:, None]).astype(jnp.float32)
    counts = jnp.sum(onehot, axis=1, keepdims=True)
    return onehot / jnp.maximum(counts, 1.0)


def preprocess_graph(edge_index, batch, num_nodes, num_graphs):
    """One-time per-topology cost: hoisted out of the per-forward path."""
    a = build_normalized_adjacency(edge_index, num_nodes)
    pool = build_pool_matrix(batch, num_graphs)
    if num_nodes <= 256:
        n_pad = _round_up(num_nodes, 128)
        row_tile = n_pad                     # single lane-dense row slab
    else:
        n_pad = _round_up(num_nodes, 256)
        row_tile = 256                       # 256-aligned A row-tiles
    a_resident = (n_pad * n_pad * 2) <= A_RESIDENT_BYTES
    b_pad = _round_up(num_graphs, 8)
    a_p = _pad2(a, n_pad, n_pad, jnp.bfloat16)
    pool_p = _pad2(pool, b_pad, n_pad, jnp.bfloat16)
    return a_p, pool_p, n_pad, row_tile, b_pad, a_resident


def init_params(key, in_dim, hidden_dim, n_classes):
    h2, h4 = hidden_dim >> 1, hidden_dim >> 2
    ks = jax.random.split(key, 12)

    def lin_w(k, fan_in, fan_out):
        bound = 1.0 / jnp.sqrt(fan_in)
        return jax.random.uniform(k, (fan_in, fan_out), jnp.float32, -bound, bound)

    def lin_b(k, fan_in, fan_out):
        bound = 1.0 / jnp.sqrt(fan_in)
        return jax.random.uniform(k, (1, fan_out), jnp.float32, -bound, bound)

    return {
        "w_emb": lin_w(ks[0], in_dim, hidden_dim),
        "b_emb": lin_b(ks[1], in_dim, hidden_dim),
        "w_layers": jax.random.normal(ks[2], (N_LAYERS, hidden_dim, hidden_dim),
                                      jnp.float32) * (1.0 / jnp.sqrt(hidden_dim)),
        "b_layers": jnp.zeros((N_LAYERS, hidden_dim), jnp.float32),
        "gamma": jnp.ones((N_LAYERS, hidden_dim), jnp.float32),
        "beta": jnp.zeros((N_LAYERS, hidden_dim), jnp.float32),
        "w1": lin_w(ks[3], hidden_dim, h2), "b1": lin_b(ks[4], hidden_dim, h2),
        "w2": lin_w(ks[5], h2, h4),         "b2": lin_b(ks[6], h2, h4),
        "w3": lin_w(ks[7], h4, n_classes),  "b3": lin_b(ks[8], h4, n_classes),
    }


def pad_params(params):
    """Zero-pad every lane dim to a multiple of 128; bf16 weights, f32 biases."""
    in_dim, hidden = params["w_emb"].shape
    h2 = params["w1"].shape[1]
    h4 = params["w2"].shape[1]
    n_classes = params["w3"].shape[1]
    n_layers = params["w_layers"].shape[0]

    f_pad = _round_up(in_dim, 128)
    h_pad = _round_up(hidden, 128)
    h2_pad = _round_up(h2, 128)
    h4_pad = _round_up(h4, 128)
    c_pad = _round_up(n_classes, 128)

    return {
        "w_emb": _pad2(params["w_emb"], f_pad, h_pad, jnp.bfloat16),
        "b_emb": _pad2(params["b_emb"], 1, h_pad, jnp.float32),
        "w_layers": _pad3(params["w_layers"], n_layers, h_pad, h_pad, jnp.bfloat16),
        "b_layers": _pad2(params["b_layers"], n_layers, h_pad, jnp.float32),
        "gamma": _pad2(params["gamma"], n_layers, h_pad, jnp.float32),
        "beta": _pad2(params["beta"], n_layers, h_pad, jnp.float32),
        "w1": _pad2(params["w1"], h_pad, h2_pad, jnp.bfloat16),
        "b1": _pad2(params["b1"], 1, h2_pad, jnp.float32),
        "w2": _pad2(params["w2"], h2_pad, h4_pad, jnp.bfloat16),
        "b2": _pad2(params["b2"], 1, h4_pad, jnp.float32),
        "w3": _pad2(params["w3"], h4_pad, c_pad, jnp.bfloat16),
        "b3": _pad2(params["b3"], 1, c_pad, jnp.float32),
    }


def gcn_apply(x, graph, pp, num_graphs, n_classes):
    a_p, pool_p, n_pad, row_tile, b_pad, a_resident = graph
    n_real = x.shape[0]
    n_layers = pp["w_layers"].shape[0]
    f_pad, h_pad = pp["w_emb"].shape
    h2_pad = pp["w1"].shape[1]
    h4_pad = pp["w2"].shape[1]
    c_pad = pp["w3"].shape[1]

    x_p = _pad2(x, n_pad, f_pad, jnp.bfloat16)

    args = (x_p, pool_p,
            pp["w_emb"], pp["b_emb"],
            pp["w_layers"], pp["b_layers"], pp["gamma"], pp["beta"],
            pp["w1"], pp["b1"], pp["w2"], pp["b2"], pp["w3"], pp["b3"],
            a_p)

    # A_hat: VMEM-resident when small (reused by all layers), else kept in HBM
    # and streamed in-kernel; everything else is small -> VMEM.
    a_space = pltpu.MemorySpace.VMEM if a_resident else pl.ANY
    in_specs = ([pl.BlockSpec(memory_space=pltpu.MemorySpace.VMEM)
                 for _ in args[:-1]]
                + [pl.BlockSpec(memory_space=a_space)])

    scratch_shapes = [
        pltpu.VMEM((n_pad, h_pad), jnp.float32),        # h (residual, f32)
        pltpu.VMEM((n_pad, h_pad), jnp.bfloat16),       # xw (bf16 MXU operand)
        pltpu.VMEM((n_pad, h_pad), jnp.float32),        # agg (f32 accumulator)
    ]
    if not a_resident:
        scratch_shapes += [
            pltpu.VMEM((2, row_tile, n_pad), jnp.bfloat16),  # A row-tile double buffer
            pltpu.SemaphoreType.DMA((2,)),
        ]

    def _nbytes(a):
        return int(a.size) * int(a.dtype.itemsize)

    scratch_bytes = n_pad * h_pad * (4 + 2 + 4)
    if not a_resident:
        scratch_bytes += 2 * row_tile * n_pad * 2
    resident = sum(_nbytes(a) for a in args[:-1]) + b_pad * c_pad * 4
    if a_resident:
        resident += _nbytes(a_p)
    vmem_limit = min(int((resident + scratch_bytes) * 1.5) + (4 << 20), 64 << 20)

    a_reads = 1 if a_resident else n_layers
    flops = (2 * n_pad * f_pad * h_pad
             + n_layers * (2 * n_pad * h_pad * h_pad
                           + 2 * n_pad * n_pad * h_pad
                           + 10 * n_pad * h_pad)
             + 2 * b_pad * n_pad * h_pad
             + 2 * b_pad * (h_pad * h2_pad + h2_pad * h4_pad + h4_pad * c_pad))
    bytes_accessed = (a_reads * n_pad * n_pad * 2
                      + sum(_nbytes(a) for a in args[:-1])
                      + b_pad * c_pad * 4)

    out_p = pl.pallas_call(
        make_gcn_kernel(n_real, n_pad, row_tile, n_layers, a_resident),
        out_shape=jax.ShapeDtypeStruct((b_pad, c_pad), jnp.float32),
        in_specs=in_specs,
        out_specs=pl.BlockSpec(memory_space=pltpu.MemorySpace.VMEM),
        scratch_shapes=scratch_shapes,
        compiler_params=pltpu.CompilerParams(vmem_limit_bytes=vmem_limit),
        cost_estimate=pl.CostEstimate(flops=flops,
                                      transcendentals=n_layers * h_pad,
                                      bytes_accessed=bytes_accessed),
    )(*args)

    return out_p[:num_graphs, :n_classes]


# ------------------------- demo -------------------------

if __name__ == "__main__":
    key = jax.random.PRNGKey(0)
    N, IN_DIM, HIDDEN, N_CLASSES, N_GRAPHS = 32, 16, 32, 4, 2
    k_x, k_p = jax.random.split(key, 2)

    # node features
    x = jax.random.normal(k_x, (N, IN_DIM), jnp.float32)

    # batch assignment: 16 nodes per graph
    batch = jnp.concatenate([jnp.zeros(16, jnp.int32), jnp.ones(16, jnp.int32)])

    # undirected ring graph inside each of the two graphs (edges both directions)
    def ring_edges(offset, n):
        s = jnp.arange(n, dtype=jnp.int32) + offset
        d = (jnp.arange(n, dtype=jnp.int32) + 1) % n + offset
        return jnp.stack([jnp.concatenate([s, d]), jnp.concatenate([d, s])])

    edge_index = jnp.concatenate([ring_edges(0, 16), ring_edges(16, 16)], axis=1)

    params = init_params(k_p, IN_DIM, HIDDEN, N_CLASSES)

    # one-time (per-topology / per-model) preprocessing, hoisted out of forward
    graph = preprocess_graph(edge_index, batch, N, N_GRAPHS)
    pparams = pad_params(params)

    out = gcn_apply(x, graph, pparams, N_GRAPHS, N_CLASSES)
    out = jax.block_until_ready(out)
    assert out.shape == (N_GRAPHS, N_CLASSES)
    assert bool(jnp.all(jnp.isfinite(out)))
    print("KERNEL_OK")
</pallas_src>

<mosaic_0001>
module attributes {stable_mosaic.version = 11 : i64} {
  func.func @kernel(%arg0: memref<128x128xbf16, #tpu.memory_space<vmem>>, %arg1: memref<8x128xbf16, #tpu.memory_space<vmem>>, %arg2: memref<128x128xbf16, #tpu.memory_space<vmem>>, %arg3: memref<1x128xf32, #tpu.memory_space<vmem>>, %arg4: memref<4x128x128xbf16, #tpu.memory_space<vmem>>, %arg5: memref<4x128xf32, #tpu.memory_space<vmem>>, %arg6: memref<4x128xf32, #tpu.memory_space<vmem>>, %arg7: memref<4x128xf32, #tpu.memory_space<vmem>>, %arg8: memref<128x128xbf16, #tpu.memory_space<vmem>>, %arg9: memref<1x128xf32, #tpu.memory_space<vmem>>, %arg10: memref<128x128xbf16, #tpu.memory_space<vmem>>, %arg11: memref<1x128xf32, #tpu.memory_space<vmem>>, %arg12: memref<128x128xbf16, #tpu.memory_space<vmem>>, %arg13: memref<1x128xf32, #tpu.memory_space<vmem>>, %arg14: memref<128x128xbf16, #tpu.memory_space<vmem>>, %arg15: memref<8x128xf32, #tpu.memory_space<vmem>>, %arg16: memref<128x128xf32, #tpu.memory_space<vmem>>, %arg17: memref<128x128xbf16, #tpu.memory_space<vmem>>, %arg18: memref<128x128xf32, #tpu.memory_space<vmem>>) attributes {dimension_semantics = [], scalar_prefetch = 0 : i64, scratch_operands = 3 : i64, tpu.core_type = #tpu.core_type<tc>} {
    %c0 = arith.constant 0 : index
    %c0_0 = arith.constant 0 : index
    %0 = vector.load %arg0[%c0, %c0_0] : memref<128x128xbf16, #tpu.memory_space<vmem>>, vector<128x128xbf16>
    %c0_1 = arith.constant 0 : index
    %c0_2 = arith.constant 0 : index
    %1 = vector.load %arg2[%c0_1, %c0_2] : memref<128x128xbf16, #tpu.memory_space<vmem>>, vector<128x128xbf16>
    %cst = arith.constant dense<0.000000e+00> : vector<128x128xf32>
    %2 = tpu.matmul %0, %1, %cst {dimension_numbers = #tpu.dot_dimension_numbers<[1], [0], [0], [1], [0, 0, 1, 1], [], []>} : vector<128x128xbf16>, vector<128x128xbf16>, vector<128x128xf32> -> vector<128x128xf32>
    %c0_3 = arith.constant 0 : index
    %c0_4 = arith.constant 0 : index
    %3 = vector.load %arg3[%c0_3, %c0_4] : memref<1x128xf32, #tpu.memory_space<vmem>>, vector<1x128xf32>
    %4 = vector.broadcast %3 : vector<1x128xf32> to vector<128x128xf32>
    %5 = arith.addf %2, %4 : vector<128x128xf32>
    %c0_5 = arith.constant 0 : index
    %c0_6 = arith.constant 0 : index
    %6 = vector.load %arg16[%c0_5, %c0_6] : memref<128x128xf32, #tpu.memory_space<vmem>>, vector<128x128xf32>
    tpu.vector_store %arg16[%c0_5, %c0_6], %5 {strides = array<i32>} : memref<128x128xf32, #tpu.memory_space<vmem>>, vector<128x128xf32>,
    %7 = tpu.iota {dimensions = array<i32: 0>} : vector<128x1xi32>
    %c32_i32 = arith.constant 32 : i32
    %8 = vector.broadcast %c32_i32 : i32 to vector<128x1xi32>
    %9 = arith.cmpi slt, %7, %8 : vector<128x1xi32>
    %10 = arith.extui %9 : vector<128x1xi1> to vector<128x1xi32>
    %11 = arith.sitofp %10 : vector<128x1xi32> to vector<128x1xf32>
    %c0_7 = arith.constant 0 : index
    %c0_8 = arith.constant 0 : index
    %c0_9 = arith.constant 0 : index
    %12 = vector.load %arg4[%c0_7, %c0_8, %c0_9] : memref<4x128x128xbf16, #tpu.memory_space<vmem>>, vector<1x128x128xbf16>
    %13 = vector.shape_cast %12 : vector<1x128x128xbf16> to vector<128x128xbf16>
    %c0_10 = arith.constant 0 : index
    %c0_11 = arith.constant 0 : index
    %14 = vector.load %arg5[%c0_10, %c0_11] : memref<4x128xf32, #tpu.memory_space<vmem>>, vector<1x128xf32>
    %c0_12 = arith.constant 0 : index
    %c0_13 = arith.constant 0 : index
    %15 = vector.load %arg6[%c0_12, %c0_13] : memref<4x128xf32, #tpu.memory_space<vmem>>, vector<1x128xf32>
    %c0_14 = arith.constant 0 : index
    %c0_15 = arith.constant 0 : index
    %16 = vector.load %arg7[%c0_14, %c0_15] : memref<4x128xf32, #tpu.memory_space<vmem>>, vector<1x128xf32>
    %c0_16 = arith.constant 0 : index
    %c0_17 = arith.constant 0 : index
    %17 = vector.load %arg16[%c0_16, %c0_17] : memref<128x128xf32, #tpu.memory_space<vmem>>, vector<128x128xf32>
    %18 = arith.truncf %17 : vector<128x128xf32> to vector<128x128xbf16>
    %cst_18 = arith.constant dense<0.000000e+00> : vector<128x128xf32>
    %19 = tpu.matmul %18, %13, %cst_18 {dimension_numbers = #tpu.dot_dimension_numbers<[1], [0], [0], [1], [0, 0, 1, 1], [], []>} : vector<128x128xbf16>, vector<128x128xbf16>, vector<128x128xf32> -> vector<128x128xf32>
    %20 = arith.truncf %19 : vector<128x128xf32> to vector<128x128xbf16>
    %c0_19 = arith.constant 0 : index
    %c0_20 = arith.constant 0 : index
    %21 = vector.load %arg17[%c0_19, %c0_20] : memref<128x128xbf16, #tpu.memory_space<vmem>>, vector<128x128xbf16>
    tpu.vector_store %arg17[%c0_19, %c0_20], %20 {strides = array<i32>} : memref<128x128xbf16, #tpu.memory_space<vmem>>, vector<128x128xbf16>,
    %c0_21 = arith.constant 0 : index
    %c0_22 = arith.constant 0 : index
    %22 = vector.load %arg14[%c0_21, %c0_22] : memref<128x128xbf16, #tpu.memory_space<vmem>>, vector<128x128xbf16>
    %c0_23 = arith.constant 0 : index
    %c0_24 = arith.constant 0 : index
    %23 = vector.load %arg17[%c0_23, %c0_24] : memref<128x128xbf16, #tpu.memory_space<vmem>>, vector<128x128xbf16>
    %cst_25 = arith.constant dense<0.000000e+00> : vector<128x128xf32>
    %24 = tpu.matmul %22, %23, %cst_25 {dimension_numbers = #tpu.dot_dimension_numbers<[1], [0], [0], [1], [0, 0, 1, 1], [], []>} : vector<128x128xbf16>, vector<128x128xbf16>, vector<128x128xf32> -> vector<128x128xf32>
    %25 = vector.broadcast %14 : vector<1x128xf32> to vector<128x128xf32>
    %26 = arith.addf %24, %25 : vector<128x128xf32>
    %c0_26 = arith.constant 0 : index
    %c0_27 = arith.constant 0 : index
    %27 = vector.load %arg18[%c0_26, %c0_27] : memref<128x128xf32, #tpu.memory_space<vmem>>, vector<128x128xf32>
    tpu.vector_store %arg18[%c0_26, %c0_27], %26 {strides = array<i32>} : memref<128x128xf32, #tpu.memory_space<vmem>>, vector<128x128xf32>,
    %c0_28 = arith.constant 0 : index
    %c0_29 = arith.constant 0 : index
    %28 = vector.load %arg18[%c0_28, %c0_29] : memref<128x128xf32, #tpu.memory_space<vmem>>, vector<128x128xf32>
    %29 = vector.broadcast %11 : vector<128x1xf32> to vector<128x128xf32>
    %30 = arith.mulf %28, %29 : vector<128x128xf32>
    %cst_30 = arith.constant dense<0.000000e+00> : vector<128xf32>
    %31 = vector.multi_reduction <add>, %30, %cst_30 [0] : vector<128x128xf32> to vector<128xf32>
    %32 = vector.shape_cast %31 : vector<128xf32> to vector<1x128xf32>
    %33 = arith.mulf %30, %28 : vector<128x128xf32>
    %cst_31 = arith.constant dense<0.000000e+00> : vector<128xf32>
    %34 = vector.multi_reduction <add>, %33, %cst_31 [0] : vector<128x128xf32> to vector<128xf32>
    %35 = vector.shape_cast %34 : vector<128xf32> to vector<1x128xf32>
    %cst_32 = arith.constant 3.125000e-02 : f32
    %36 = vector.broadcast %cst_32 : f32 to vector<1x128xf32>
    %37 = arith.mulf %32, %36 : vector<1x128xf32>
    %cst_33 = arith.constant 3.125000e-02 : f32
    %38 = vector.broadcast %cst_33 : f32 to vector<1x128xf32>
    %39 = arith.mulf %35, %38 : vector<1x128xf32>
    %40 = arith.mulf %37, %37 : vector<1x128xf32>
    %41 = arith.subf %39, %40 : vector<1x128xf32>
    %cst_34 = arith.constant 0.000000e+00 : f32
    %42 = vector.broadcast %cst_34 : f32 to vector<1x128xf32>
    %43 = arith.maximumf %41, %42 : vector<1x128xf32>
    %cst_35 = arith.constant 9.99999974E-6 : f32
    %44 = vector.broadcast %cst_35 : f32 to vector<1x128xf32>
    %45 = arith.addf %43, %44 : vector<1x128xf32>
    %46 = math.rsqrt %45 : vector<1x128xf32>
    %47 = arith.mulf %15, %46 : vector<1x128xf32>
    %48 = arith.mulf %37, %47 : vector<1x128xf32>
    %49 = arith.subf %16, %48 : vector<1x128xf32>
    %50 = vector.broadcast %47 : vector<1x128xf32> to vector<128x128xf32>
    %51 = arith.mulf %28, %50 : vector<128x128xf32>
    %52 = vector.broadcast %49 : vector<1x128xf32> to vector<128x128xf32>
    %53 = arith.addf %51, %52 : vector<128x128xf32>
    %cst_36 = arith.constant 0.000000e+00 : f32
    %54 = vector.broadcast %cst_36 : f32 to vector<128x128xf32>
    %55 = arith.maximumf %53, %54 : vector<128x128xf32>
    %c0_37 = arith.constant 0 : index
    %c0_38 = arith.constant 0 : index
    %56 = vector.load %arg16[%c0_37, %c0_38] : memref<128x128xf32, #tpu.memory_space<vmem>>, vector<128x128xf32>
    %57 = arith.addf %55, %56 : vector<128x128xf32>
    %c0_39 = arith.constant 0 : index
    %c0_40 = arith.constant 0 : index
    %58 = vector.load %arg16[%c0_39, %c0_40] : memref<128x128xf32, #tpu.memory_space<vmem>>, vector<128x128xf32>
    tpu.vector_store %arg16[%c0_39, %c0_40], %57 {strides = array<i32>} : memref<128x128xf32, #tpu.memory_space<vmem>>, vector<128x128xf32>,
    %c1 = arith.constant 1 : index
    %c0_41 = arith.constant 0 : index
    %c0_42 = arith.constant 0 : index
    %59 = vector.load %arg4[%c1, %c0_41, %c0_42] : memref<4x128x128xbf16, #tpu.memory_space<vmem>>, vector<1x128x128xbf16>
    %60 = vector.shape_cast %59 : vector<1x128x128xbf16> to vector<128x128xbf16>
    %c1_43 = arith.constant 1 : index
    %c0_44 = arith.constant 0 : index
    %61 = vector.load %arg5[%c1_43, %c0_44] : memref<4x128xf32, #tpu.memory_space<vmem>>, vector<1x128xf32>
    %c1_45 = arith.constant 1 : index
    %c0_46 = arith.constant 0 : index
    %62 = vector.load %arg6[%c1_45, %c0_46] : memref<4x128xf32, #tpu.memory_space<vmem>>, vector<1x128xf32>
    %c1_47 = arith.constant 1 : index
    %c0_48 = arith.constant 0 : index
    %63 = vector.load %arg7[%c1_47, %c0_48] : memref<4x128xf32, #tpu.memory_space<vmem>>, vector<1x128xf32>
    %c0_49 = arith.constant 0 : index
    %c0_50 = arith.constant 0 : index
    %64 = vector.load %arg16[%c0_49, %c0_50] : memref<128x128xf32, #tpu.memory_space<vmem>>, vector<128x128xf32>
    %65 = arith.truncf %64 : vector<128x128xf32> to vector<128x128xbf16>
    %cst_51 = arith.constant dense<0.000000e+00> : vector<128x128xf32>
    %66 = tpu.matmul %65, %60, %cst_51 {dimension_numbers = #tpu.dot_dimension_numbers<[1], [0], [0], [1], [0, 0, 1, 1], [], []>} : vector<128x128xbf16>, vector<128x128xbf16>, vector<128x128xf32> -> vector<128x128xf32>
    %67 = arith.truncf %66 : vector<128x128xf32> to vector<128x128xbf16>
    %c0_52 = arith.constant 0 : index
    %c0_53 = arith.constant 0 : index
    %68 = vector.load %arg17[%c0_52, %c0_53] : memref<128x128xbf16, #tpu.memory_space<vmem>>, vector<128x128xbf16>
    tpu.vector_store %arg17[%c0_52, %c0_53], %67 {strides = array<i32>} : memref<128x128xbf16, #tpu.memory_space<vmem>>, vector<128x128xbf16>,
    %c0_54 = arith.constant 0 : index
    %c0_55 = arith.constant 0 : index
    %69 = vector.load %arg14[%c0_54, %c0_55] : memref<128x128xbf16, #tpu.memory_space<vmem>>, vector<128x128xbf16>
    %c0_56 = arith.constant 0 : index
    %c0_57 = arith.constant 0 : index
    %70 = vector.load %arg17[%c0_56, %c0_57] : memref<128x128xbf16, #tpu.memory_space<vmem>>, vector<128x128xbf16>
    %cst_58 = arith.constant dense<0.000000e+00> : vector<128x128xf32>
    %71 = tpu.matmul %69, %70, %cst_58 {dimension_numbers = #tpu.dot_dimension_numbers<[1], [0], [0], [1], [0, 0, 1, 1], [], []>} : vector<128x128xbf16>, vector<128x128xbf16>, vector<128x128xf32> -> vector<128x128xf32>
    %72 = vector.broadcast %61 : vector<1x128xf32> to vector<128x128xf32>
    %73 = arith.addf %71, %72 : vector<128x128xf32>
    %c0_59 = arith.constant 0 : index
    %c0_60 = arith.constant 0 : index
    %74 = vector.load %arg18[%c0_59, %c0_60] : memref<128x128xf32, #tpu.memory_space<vmem>>, vector<128x128xf32>
    tpu.vector_store %arg18[%c0_59, %c0_60], %73 {strides = array<i32>} : memref<128x128xf32, #tpu.memory_space<vmem>>, vector<128x128xf32>,
    %c0_61 = arith.constant 0 : index
    %c0_62 = arith.constant 0 : index
    %75 = vector.load %arg18[%c0_61, %c0_62] : memref<128x128xf32, #tpu.memory_space<vmem>>, vector<128x128xf32>
    %76 = vector.broadcast %11 : vector<128x1xf32> to vector<128x128xf32>
    %77 = arith.mulf %75, %76 : vector<128x128xf32>
    %cst_63 = arith.constant dense<0.000000e+00> : vector<128xf32>
    %78 = vector.multi_reduction <add>, %77, %cst_63 [0] : vector<128x128xf32> to vector<128xf32>
    %79 = vector.shape_cast %78 : vector<128xf32> to vector<1x128xf32>
    %80 = arith.mulf %77, %75 : vector<128x128xf32>
    %cst_64 = arith.constant dense<0.000000e+00> : vector<128xf32>
    %81 = vector.multi_reduction <add>, %80, %cst_64 [0] : vector<128x128xf32> to vector<128xf32>
    %82 = vector.shape_cast %81 : vector<128xf32> to vector<1x128xf32>
    %cst_65 = arith.constant 3.125000e-02 : f32
    %83 = vector.broadcast %cst_65 : f32 to vector<1x128xf32>
    %84 = arith.mulf %79, %83 : vector<1x128xf32>
    %cst_66 = arith.constant 3.125000e-02 : f32
    %85 = vector.broadcast %cst_66 : f32 to vector<1x128xf32>
    %86 = arith.mulf %82, %85 : vector<1x128xf32>
    %87 = arith.mulf %84, %84 : vector<1x128xf32>
    %88 = arith.subf %86, %87 : vector<1x128xf32>
    %cst_67 = arith.constant 0.000000e+00 : f32
    %89 = vector.broadcast %cst_67 : f32 to vector<1x128xf32>
    %90 = arith.maximumf %88, %89 : vector<1x128xf32>
    %cst_68 = arith.constant 9.99999974E-6 : f32
    %91 = vector.broadcast %cst_68 : f32 to vector<1x128xf32>
    %92 = arith.addf %90, %91 : vector<1x128xf32>
    %93 = math.rsqrt %92 : vector<1x128xf32>
    %94 = arith.mulf %62, %93 : vector<1x128xf32>
    %95 = arith.mulf %84, %94 : vector<1x128xf32>
    %96 = arith.subf %63, %95 : vector<1x128xf32>
    %97 = vector.broadcast %94 : vector<1x128xf32> to vector<128x128xf32>
    %98 = arith.mulf %75, %97 : vector<128x128xf32>
    %99 = vector.broadcast %96 : vector<1x128xf32> to vector<128x128xf32>
    %100 = arith.addf %98, %99 : vector<128x128xf32>
    %cst_69 = arith.constant 0.000000e+00 : f32
    %101 = vector.broadcast %cst_69 : f32 to vector<128x128xf32>
    %102 = arith.maximumf %100, %101 : vector<128x128xf32>
    %c0_70 = arith.constant 0 : index
    %c0_71 = arith.constant 0 : index
    %103 = vector.load %arg16[%c0_70, %c0_71] : memref<128x128xf32, #tpu.memory_space<vmem>>, vector<128x128xf32>
    %104 = arith.addf %102, %103 : vector<128x128xf32>
    %c0_72 = arith.constant 0 : index
    %c0_73 = arith.constant 0 : index
    %105 = vector.load %arg16[%c0_72, %c0_73] : memref<128x128xf32, #tpu.memory_space<vmem>>, vector<128x128xf32>
    tpu.vector_store %arg16[%c0_72, %c0_73], %104 {strides = array<i32>} : memref<128x128xf32, #tpu.memory_space<vmem>>, vector<128x128xf32>,
    %c2 = arith.constant 2 : index
    %c0_74 = arith.constant 0 : index
    %c0_75 = arith.constant 0 : index
    %106 = vector.load %arg4[%c2, %c0_74, %c0_75] : memref<4x128x128xbf16, #tpu.memory_space<vmem>>, vector<1x128x128xbf16>
    %107 = vector.shape_cast %106 : vector<1x128x128xbf16> to vector<128x128xbf16>
    %c2_76 = arith.constant 2 : index
    %c0_77 = arith.constant 0 : index
    %108 = vector.load %arg5[%c2_76, %c0_77] : memref<4x128xf32, #tpu.memory_space<vmem>>, vector<1x128xf32>
    %c2_78 = arith.constant 2 : index
    %c0_79 = arith.constant 0 : index
    %109 = vector.load %arg6[%c2_78, %c0_79] : memref<4x128xf32, #tpu.memory_space<vmem>>, vector<1x128xf32>
    %c2_80 = arith.constant 2 : index
    %c0_81 = arith.constant 0 : index
    %110 = vector.load %arg7[%c2_80, %c0_81] : memref<4x128xf32, #tpu.memory_space<vmem>>, vector<1x128xf32>
    %c0_82 = arith.constant 0 : index
    %c0_83 = arith.constant 0 : index
    %111 = vector.load %arg16[%c0_82, %c0_83] : memref<128x128xf32, #tpu.memory_space<vmem>>, vector<128x128xf32>
    %112 = arith.truncf %111 : vector<128x128xf32> to vector<128x128xbf16>
    %cst_84 = arith.constant dense<0.000000e+00> : vector<128x128xf32>
    %113 = tpu.matmul %112, %107, %cst_84 {dimension_numbers = #tpu.dot_dimension_numbers<[1], [0], [0], [1], [0, 0, 1, 1], [], []>} : vector<128x128xbf16>, vector<128x128xbf16>, vector<128x128xf32> -> vector<128x128xf32>
    %114 = arith.truncf %113 : vector<128x128xf32> to vector<128x128xbf16>
    %c0_85 = arith.constant 0 : index
    %c0_86 = arith.constant 0 : index
    %115 = vector.load %arg17[%c0_85, %c0_86] : memref<128x128xbf16, #tpu.memory_space<vmem>>, vector<128x128xbf16>
    tpu.vector_store %arg17[%c0_85, %c0_86], %114 {strides = array<i32>} : memref<128x128xbf16, #tpu.memory_space<vmem>>, vector<128x128xbf16>,
    %c0_87 = arith.constant 0 : index
    %c0_88 = arith.constant 0 : index
    %116 = vector.load %arg14[%c0_87, %c0_88] : memref<128x128xbf16, #tpu.memory_space<vmem>>, vector<128x128xbf16>
    %c0_89 = arith.constant 0 : index
    %c0_90 = arith.constant 0 : index
    %117 = vector.load %arg17[%c0_89, %c0_90] : memref<128x128xbf16, #tpu.memory_space<vmem>>, vector<128x128xbf16>
    %cst_91 = arith.constant dense<0.000000e+00> : vector<128x128xf32>
    %118 = tpu.matmul %116, %117, %cst_91 {dimension_numbers = #tpu.dot_dimension_numbers<[1], [0], [0], [1], [0, 0, 1, 1], [], []>} : vector<128x128xbf16>, vector<128x128xbf16>, vector<128x128xf32> -> vector<128x128xf32>
    %119 = vector.broadcast %108 : vector<1x128xf32> to vector<128x128xf32>
    %120 = arith.addf %118, %119 : vector<128x128xf32>
    %c0_92 = arith.constant 0 : index
    %c0_93 = arith.constant 0 : index
    %121 = vector.load %arg18[%c0_92, %c0_93] : memref<128x128xf32, #tpu.memory_space<vmem>>, vector<128x128xf32>
    tpu.vector_store %arg18[%c0_92, %c0_93], %120 {strides = array<i32>} : memref<128x128xf32, #tpu.memory_space<vmem>>, vector<128x128xf32>,
    %c0_94 = arith.constant 0 : index
    %c0_95 = arith.constant 0 : index
    %122 = vector.load %arg18[%c0_94, %c0_95] : memref<128x128xf32, #tpu.memory_space<vmem>>, vector<128x128xf32>
    %123 = vector.broadcast %11 : vector<128x1xf32> to vector<128x128xf32>
    %124 = arith.mulf %122, %123 : vector<128x128xf32>
    %cst_96 = arith.constant dense<0.000000e+00> : vector<128xf32>
    %125 = vector.multi_reduction <add>, %124, %cst_96 [0] : vector<128x128xf32> to vector<128xf32>
    %126 = vector.shape_cast %125 : vector<128xf32> to vector<1x128xf32>
    %127 = arith.mulf %124, %122 : vector<128x128xf32>
    %cst_97 = arith.constant dense<0.000000e+00> : vector<128xf32>
    %128 = vector.multi_reduction <add>, %127, %cst_97 [0] : vector<128x128xf32> to vector<128xf32>
    %129 = vector.shape_cast %128 : vector<128xf32> to vector<1x128xf32>
    %cst_98 = arith.constant 3.125000e-02 : f32
    %130 = vector.broadcast %cst_98 : f32 to vector<1x128xf32>
    %131 = arith.mulf %126, %130 : vector<1x128xf32>
    %cst_99 = arith.constant 3.125000e-02 : f32
    %132 = vector.broadcast %cst_99 : f32 to vector<1x128xf32>
    %133 = arith.mulf %129, %132 : vector<1x128xf32>
    %134 = arith.mulf %131, %131 : vector<1x128xf32>
    %135 = arith.subf %133, %134 : vector<1x128xf32>
    %cst_100 = arith.constant 0.000000e+00 : f32
    %136 = vector.broadcast %cst_100 : f32 to vector<1x128xf32>
    %137 = arith.maximumf %135, %136 : vector<1x128xf32>
    %cst_101 = arith.constant 9.99999974E-6 : f32
    %138 = vector.broadcast %cst_101 : f32 to vector<1x128xf32>
    %139 = arith.addf %137, %138 : vector<1x128xf32>
    %140 = math.rsqrt %139 : vector<1x128xf32>
    %141 = arith.mulf %109, %140 : vector<1x128xf32>
    %142 = arith.mulf %131, %141 : vector<1x128xf32>
    %143 = arith.subf %110, %142 : vector<1x128xf32>
    %144 = vector.broadcast %141 : vector<1x128xf32> to vector<128x128xf32>
    %145 = arith.mulf %122, %144 : vector<128x128xf32>
    %146 = vector.broadcast %143 : vector<1x128xf32> to vector<128x128xf32>
    %147 = arith.addf %145, %146 : vector<128x128xf32>
    %cst_102 = arith.constant 0.000000e+00 : f32
    %148 = vector.broadcast %cst_102 : f32 to vector<128x128xf32>
    %149 = arith.maximumf %147, %148 : vector<128x128xf32>
    %c0_103 = arith.constant 0 : index
    %c0_104 = arith.constant 0 : index
    %150 = vector.load %arg16[%c0_103, %c0_104] : memref<128x128xf32, #tpu.memory_space<vmem>>, vector<128x128xf32>
    %151 = arith.addf %149, %150 : vector<128x128xf32>
    %c0_105 = arith.constant 0 : index
    %c0_106 = arith.constant 0 : index
    %152 = vector.load %arg16[%c0_105, %c0_106] : memref<128x128xf32, #tpu.memory_space<vmem>>, vector<128x128xf32>
    tpu.vector_store %arg16[%c0_105, %c0_106], %151 {strides = array<i32>} : memref<128x128xf32, #tpu.memory_space<vmem>>, vector<128x128xf32>,
    %c3 = arith.constant 3 : index
    %c0_107 = arith.constant 0 : index
    %c0_108 = arith.constant 0 : index
    %153 = vector.load %arg4[%c3, %c0_107, %c0_108] : memref<4x128x128xbf16, #tpu.memory_space<vmem>>, vector<1x128x128xbf16>
    %154 = vector.shape_cast %153 : vector<1x128x128xbf16> to vector<128x128xbf16>
    %c3_109 = arith.constant 3 : index
    %c0_110 = arith.constant 0 : index
    %155 = vector.load %arg5[%c3_109, %c0_110] : memref<4x128xf32, #tpu.memory_space<vmem>>, vector<1x128xf32>
    %c3_111 = arith.constant 3 : index
    %c0_112 = arith.constant 0 : index
    %156 = vector.load %arg6[%c3_111, %c0_112] : memref<4x128xf32, #tpu.memory_space<vmem>>, vector<1x128xf32>
    %c3_113 = arith.constant 3 : index
    %c0_114 = arith.constant 0 : index
    %157 = vector.load %arg7[%c3_113, %c0_114] : memref<4x128xf32, #tpu.memory_space<vmem>>, vector<1x128xf32>
    %c0_115 = arith.constant 0 : index
    %c0_116 = arith.constant 0 : index
    %158 = vector.load %arg16[%c0_115, %c0_116] : memref<128x128xf32, #tpu.memory_space<vmem>>, vector<128x128xf32>
    %159 = arith.truncf %158 : vector<128x128xf32> to vector<128x128xbf16>
    %cst_117 = arith.constant dense<0.000000e+00> : vector<128x128xf32>
    %160 = tpu.matmul %159, %154, %cst_117 {dimension_numbers = #tpu.dot_dimension_numbers<[1], [0], [0], [1], [0, 0, 1, 1], [], []>} : vector<128x128xbf16>, vector<128x128xbf16>, vector<128x128xf32> -> vector<128x128xf32>
    %161 = arith.truncf %160 : vector<128x128xf32> to vector<128x128xbf16>
    %c0_118 = arith.constant 0 : index
    %c0_119 = arith.constant 0 : index
    %162 = vector.load %arg17[%c0_118, %c0_119] : memref<128x128xbf16, #tpu.memory_space<vmem>>, vector<128x128xbf16>
    tpu.vector_store %arg17[%c0_118, %c0_119], %161 {strides = array<i32>} : memref<128x128xbf16, #tpu.memory_space<vmem>>, vector<128x128xbf16>,
    %c0_120 = arith.constant 0 : index
    %c0_121 = arith.constant 0 : index
    %163 = vector.load %arg14[%c0_120, %c0_121] : memref<128x128xbf16, #tpu.memory_space<vmem>>, vector<128x128xbf16>
    %c0_122 = arith.constant 0 : index
    %c0_123 = arith.constant 0 : index
    %164 = vector.load %arg17[%c0_122, %c0_123] : memref<128x128xbf16, #tpu.memory_space<vmem>>, vector<128x128xbf16>
    %cst_124 = arith.constant dense<0.000000e+00> : vector<128x128xf32>
    %165 = tpu.matmul %163, %164, %cst_124 {dimension_numbers = #tpu.dot_dimension_numbers<[1], [0], [0], [1], [0, 0, 1, 1], [], []>} : vector<128x128xbf16>, vector<128x128xbf16>, vector<128x128xf32> -> vector<128x128xf32>
    %166 = vector.broadcast %155 : vector<1x128xf32> to vector<128x128xf32>
    %167 = arith.addf %165, %166 : vector<128x128xf32>
    %c0_125 = arith.constant 0 : index
    %c0_126 = arith.constant 0 : index
    %168 = vector.load %arg18[%c0_125, %c0_126] : memref<128x128xf32, #tpu.memory_space<vmem>>, vector<128x128xf32>
    tpu.vector_store %arg18[%c0_125, %c0_126], %167 {strides = array<i32>} : memref<128x128xf32, #tpu.memory_space<vmem>>, vector<128x128xf32>,
    %c0_127 = arith.constant 0 : index
    %c0_128 = arith.constant 0 : index
    %169 = vector.load %arg18[%c0_127, %c0_128] : memref<128x128xf32, #tpu.memory_space<vmem>>, vector<128x128xf32>
    %170 = vector.broadcast %11 : vector<128x1xf32> to vector<128x128xf32>
    %171 = arith.mulf %169, %170 : vector<128x128xf32>
    %cst_129 = arith.constant dense<0.000000e+00> : vector<128xf32>
    %172 = vector.multi_reduction <add>, %171, %cst_129 [0] : vector<128x128xf32> to vector<128xf32>
    %173 = vector.shape_cast %172 : vector<128xf32> to vector<1x128xf32>
    %174 = arith.mulf %171, %169 : vector<128x128xf32>
    %cst_130 = arith.constant dense<0.000000e+00> : vector<128xf32>
    %175 = vector.multi_reduction <add>, %174, %cst_130 [0] : vector<128x128xf32> to vector<128xf32>
    %176 = vector.shape_cast %175 : vector<128xf32> to vector<1x128xf32>
    %cst_131 = arith.constant 3.125000e-02 : f32
    %177 = vector.broadcast %cst_131 : f32 to vector<1x128xf32>
    %178 = arith.mulf %173, %177 : vector<1x128xf32>
    %cst_132 = arith.constant 3.125000e-02 : f32
    %179 = vector.broadcast %cst_132 : f32 to vector<1x128xf32>
    %180 = arith.mulf %176, %179 : vector<1x128xf32>
    %181 = arith.mulf %178, %178 : vector<1x128xf32>
    %182 = arith.subf %180, %181 : vector<1x128xf32>
    %cst_133 = arith.constant 0.000000e+00 : f32
    %183 = vector.broadcast %cst_133 : f32 to vector<1x128xf32>
    %184 = arith.maximumf %182, %183 : vector<1x128xf32>
    %cst_134 = arith.constant 9.99999974E-6 : f32
    %185 = vector.broadcast %cst_134 : f32 to vector<1x128xf32>
    %186 = arith.addf %184, %185 : vector<1x128xf32>
    %187 = math.rsqrt %186 : vector<1x128xf32>
    %188 = arith.mulf %156, %187 : vector<1x128xf32>
    %189 = arith.mulf %178, %188 : vector<1x128xf32>
    %190 = arith.subf %157, %189 : vector<1x128xf32>
    %191 = vector.broadcast %188 : vector<1x128xf32> to vector<128x128xf32>
    %192 = arith.mulf %169, %191 : vector<128x128xf32>
    %193 = vector.broadcast %190 : vector<1x128xf32> to vector<128x128xf32>
    %194 = arith.addf %192, %193 : vector<128x128xf32>
    %cst_135 = arith.constant 0.000000e+00 : f32
    %195 = vector.broadcast %cst_135 : f32 to vector<128x128xf32>
    %196 = arith.maximumf %194, %195 : vector<128x128xf32>
    %c0_136 = arith.constant 0 : index
    %c0_137 = arith.constant 0 : index
    %197 = vector.load %arg16[%c0_136, %c0_137] : memref<128x128xf32, #tpu.memory_space<vmem>>, vector<128x128xf32>
    %198 = arith.addf %196, %197 : vector<128x128xf32>
    %c0_138 = arith.constant 0 : index
    %c0_139 = arith.constant 0 : index
    %199 = vector.load %arg16[%c0_138, %c0_139] : memref<128x128xf32, #tpu.memory_space<vmem>>, vector<128x128xf32>
    tpu.vector_store %arg16[%c0_138, %c0_139], %198 {strides = array<i32>} : memref<128x128xf32, #tpu.memory_space<vmem>>, vector<128x128xf32>,
    %c0_140 = arith.constant 0 : index
    %c0_141 = arith.constant 0 : index
    %200 = vector.load %arg1[%c0_140, %c0_141] : memref<8x128xbf16, #tpu.memory_space<vmem>>, vector<8x128xbf16>
    %c0_142 = arith.constant 0 : index
    %c0_143 = arith.constant 0 : index
    %201 = vector.load %arg16[%c0_142, %c0_143] : memref<128x128xf32, #tpu.memory_space<vmem>>, vector<128x128xf32>
    %202 = arith.truncf %201 : vector<128x128xf32> to vector<128x128xbf16>
    %cst_144 = arith.constant dense<0.000000e+00> : vector<8x128xf32>
    %203 = tpu.matmul %200, %202, %cst_144 {dimension_numbers = #tpu.dot_dimension_numbers<[1], [0], [0], [1], [0, 0, 1, 1], [], []>} : vector<8x128xbf16>, vector<128x128xbf16>, vector<8x128xf32> -> vector<8x128xf32>
    %204 = arith.truncf %203 : vector<8x128xf32> to vector<8x128xbf16>
    %c0_145 = arith.constant 0 : index
    %c0_146 = arith.constant 0 : index
    %205 = vector.load %arg8[%c0_145, %c0_146] : memref<128x128xbf16, #tpu.memory_space<vmem>>, vector<128x128xbf16>
    %cst_147 = arith.constant dense<0.000000e+00> : vector<8x128xf32>
    %206 = tpu.matmul %204, %205, %cst_147 {dimension_numbers = #tpu.dot_dimension_numbers<[1], [0], [0], [1], [0, 0, 1, 1], [], []>} : vector<8x128xbf16>, vector<128x128xbf16>, vector<8x128xf32> -> vector<8x128xf32>
    %c0_148 = arith.constant 0 : index
    %c0_149 = arith.constant 0 : index
    %207 = vector.load %arg9[%c0_148, %c0_149] : memref<1x128xf32, #tpu.memory_space<vmem>>, vector<1x128xf32>
    %208 = vector.broadcast %207 : vector<1x128xf32> to vector<8x128xf32>
    %209 = arith.addf %206, %208 : vector<8x128xf32>
    %cst_150 = arith.constant 0.000000e+00 : f32
    %210 = vector.broadcast %cst_150 : f32 to vector<8x128xf32>
    %211 = arith.maximumf %209, %210 : vector<8x128xf32>
    %212 = arith.truncf %211 : vector<8x128xf32> to vector<8x128xbf16>
    %c0_151 = arith.constant 0 : index
    %c0_152 = arith.constant 0 : index
    %213 = vector.load %arg10[%c0_151, %c0_152] : memref<128x128xbf16, #tpu.memory_space<vmem>>, vector<128x128xbf16>
    %cst_153 = arith.constant dense<0.000000e+00> : vector<8x128xf32>
    %214 = tpu.matmul %212, %213, %cst_153 {dimension_numbers = #tpu.dot_dimension_numbers<[1], [0], [0], [1], [0, 0, 1, 1], [], []>} : vector<8x128xbf16>, vector<128x128xbf16>, vector<8x128xf32> -> vector<8x128xf32>
    %c0_154 = arith.constant 0 : index
    %c0_155 = arith.constant 0 : index
    %215 = vector.load %arg11[%c0_154, %c0_155] : memref<1x128xf32, #tpu.memory_space<vmem>>, vector<1x128xf32>
    %216 = vector.broadcast %215 : vector<1x128xf32> to vector<8x128xf32>
    %217 = arith.addf %214, %216 : vector<8x128xf32>
    %cst_156 = arith.constant 0.000000e+00 : f32
    %218 = vector.broadcast %cst_156 : f32 to vector<8x128xf32>
    %219 = arith.maximumf %217, %218 : vector<8x128xf32>
    %220 = arith.truncf %219 : vector<8x128xf32> to vector<8x128xbf16>
    %c0_157 = arith.constant 0 : index
    %c0_158 = arith.constant 0 : index
    %221 = vector.load %arg12[%c0_157, %c0_158] : memref<128x128xbf16, #tpu.memory_space<vmem>>, vector<128x128xbf16>
    %cst_159 = arith.constant dense<0.000000e+00> : vector<8x128xf32>
    %222 = tpu.matmul %220, %221, %cst_159 {dimension_numbers = #tpu.dot_dimension_numbers<[1], [0], [0], [1], [0, 0, 1, 1], [], []>} : vector<8x128xbf16>, vector<128x128xbf16>, vector<8x128xf32> -> vector<8x128xf32>
    %c0_160 = arith.constant 0 : index
    %c0_161 = arith.constant 0 : index
    %223 = vector.load %arg13[%c0_160, %c0_161] : memref<1x128xf32, #tpu.memory_space<vmem>>, vector<1x128xf32>
    %224 = vector.broadcast %223 : vector<1x128xf32> to vector<8x128xf32>
    %225 = arith.addf %222, %224 : vector<8x128xf32>
    %c0_162 = arith.constant 0 : index
    %c0_163 = arith.constant 0 : index
    %226 = vector.load %arg15[%c0_162, %c0_163] : memref<8x128xf32, #tpu.memory_space<vmem>>, vector<8x128xf32>
    tpu.vector_store %arg15[%c0_162, %c0_163], %225 {strides = array<i32>} : memref<8x128xf32, #tpu.memory_space<vmem>>, vector<8x128xf32>,
    return
  }
}

</mosaic_0001>

<llo_original>
// kernel: tpu_custom_call.1
$region0: #{tpu_custom_call.1}
  #allocation0 [shape = 'u32[]', space=smem, size = 0x4, offset = 0x4, fixed_abs, tag = 'smem constant byte address 0x4 - core index']
  #allocation1 [shape = 'u32[72,128]{1,0:T(1,128)}', space=vmem, size = 0x9000, scoped, tag = 'internal scratch']
  #allocation2 [shape = 'f32[128,128]{1,0:T(8,128)}', space=vmem, size = 0x10000, scoped, tag = 'scratch operand']
  #allocation3 [shape = 'bf16[128,128]{1,0:T(8,128)(2,1)}', space=vmem, size = 0x8000, scoped, tag = 'scratch operand']
  #allocation4 [shape = 'f32[128,128]{1,0:T(8,128)}', space=vmem, size = 0x10000, scoped, tag = 'scratch operand']
  %s0 = inlined_call_operand.hbm [shape: bf16[128,128], index: 0, kind: input, shape index: {}]
  %s1 = inlined_call_operand.hbm [shape: bf16[8,128], index: 1, kind: input, shape index: {}]
  %s2 = inlined_call_operand.hbm [shape: bf16[128,128], index: 2, kind: input, shape index: {}]
  %s3 = inlined_call_operand.hbm [shape: f32[1,128], index: 3, kind: input, shape index: {}]
  %s4 = inlined_call_operand.hbm [shape: bf16[4,128,128], index: 4, kind: input, shape index: {}]
  %s5 = inlined_call_operand.vmem [shape: f32[4,128], index: 5, kind: input, shape index: {}]
  %s6 = inlined_call_operand.hbm [shape: f32[4,128], index: 6, kind: input, shape index: {}]
  %s7 = inlined_call_operand.hbm [shape: f32[4,128], index: 7, kind: input, shape index: {}]
  %s8 = inlined_call_operand.hbm [shape: bf16[128,128], index: 8, kind: input, shape index: {}]
  %s9 = inlined_call_operand.vmem [shape: f32[1,128], index: 9, kind: input, shape index: {}]
  %s10 = inlined_call_operand.hbm [shape: bf16[128,128], index: 10, kind: input, shape index: {}]
  %s11 = inlined_call_operand.vmem [shape: f32[1,128], index: 11, kind: input, shape index: {}]
  %s12 = inlined_call_operand.hbm [shape: bf16[128,128], index: 12, kind: input, shape index: {}]
  %s13 = inlined_call_operand.vmem [shape: f32[1,128], index: 13, kind: input, shape index: {}]
  %s14 = inlined_call_operand.hbm [shape: bf16[128,128], index: 14, kind: input, shape index: {}]
  %s15 = inlined_call_operand.hbm [shape: f32[8,128], index: 15, kind: output, shape index: {}]
  %s16 = sld [smem:[#allocation0]]
  $region114: #{tpu_custom_call.1} parent=0
    _
  %s18 = ssub.s32 1, %s16
  %s19 = scalar_select 0, %s18, %s16
  $region1: #{tpu_custom_call.1} parent=0
    #allocation5 [shape = 'u8[32768]{0}', space=vmem, size = 0x8000, scoped, tag = 'input window, operand 0, single buffered']
    #allocation6 [shape = 's32[1]{0}', space=sflag, size = 0x4, scoped, tag = 'scoped memory for tpu_custom_call.1']
    #allocation7 [shape = 's32[1]{0}', space=sflag, size = 0x4, scoped, tag = 'scoped memory for tpu_custom_call.1']
    #allocation8 [shape = 'u8[2048]{0}', space=vmem, size = 0x800, scoped, tag = 'input window, operand 1, single buffered']
    #allocation9 [shape = 's32[1]{0}', space=sflag, size = 0x4, scoped, tag = 'scoped memory for tpu_custom_call.1']
    #allocation10 [shape = 'u8[32768]{0}', space=vmem, size = 0x8000, scoped, tag = 'input window, operand 2, single buffered']
    #allocation11 [shape = 'u8[512]{0}', space=vmem, size = 0x400, scoped, tag = 'input window, operand 3, single buffered']
    #allocation12 [shape = 's32[1]{0}', space=sflag, size = 0x4, scoped, tag = 'scoped memory for tpu_custom_call.1']
    #allocation13 [shape = 'u8[131072]{0}', space=vmem, size = 0x20000, scoped, tag = 'input window, operand 4, single buffered']
    #allocation14 [shape = 'u8[2048]{0}', space=vmem, size = 0x800, scoped, tag = 'input window, operand 6, single buffered']
    #allocation15 [shape = 's32[1]{0}', space=sflag, size = 0x4, scoped, tag = 'scoped memory for tpu_custom_call.1']
    #allocation16 [shape = 'u8[2048]{0}', space=vmem, size = 0x800, scoped, tag = 'input window, operand 7, single buffered']
    #allocation17 [shape = 'u8[32768]{0}', space=vmem, size = 0x8000, scoped, tag = 'input window, operand 8, single buffered']
    #allocation18 [shape = 's32[1]{0}', space=sflag, size = 0x4, scoped, tag = 'scoped memory for tpu_custom_call.1']
    #allocation19 [shape = 'u8[32768]{0}', space=vmem, size = 0x8000, scoped, tag = 'input window, operand 10, single buffered']
    #allocation20 [shape = 'u8[32768]{0}', space=vmem, size = 0x8000, scoped, tag = 'input window, operand 12, single buffered']
    #allocation21 [shape = 's32[1]{0}', space=sflag, size = 0x4, scoped, tag = 'scoped memory for tpu_custom_call.1']
    #allocation22 [shape = 'u8[32768]{0}', space=vmem, size = 0x8000, scoped, tag = 'input window, operand 14, single buffered']
    #allocation23 [shape = 'u8[4096]{0}', space=vmem, size = 0x1000, scoped, tag = 'output window, operand 0, single buffered']
    %20 = vsyncpa [#allocation6], 0
    %21 = vsyncpa [#allocation9], 0
    %22 = vsyncpa [#allocation12], 0
    %23 = vsyncpa [#allocation15], 0
    %24 = vsyncpa [#allocation18], 0
    %25 = vsyncpa [#allocation21], 0
    %26 = vsyncpa [#allocation7], 0
    // Predicated region
    $region2: #{tpu_custom_call.1} parent=1 // pred_check
      _
    $region3: #{tpu_custom_call.1} parent=1 // pred_check_branch
      %28 = sbr.rel (0) target = $region5
    $region4: #{tpu_custom_call.1} parent=1 // pred_region
      %30 = vsyncadd [#allocation6], 0
      %s31 = sshll.u32 %s0, 4
      %s32 = int_to_ptr.hbm [resolvable:$true] %s31
      %s33 = sshll.u32 [#allocation5], 4
      %s34 = int_to_ptr.vmem [resolvable:$true] %s33
      %39 = dma.hbm_to_vmem [thread:$0]  %s32, 1024, %s34, [#allocation6], 64, 64, 4
    $region5: #{tpu_custom_call.1} parent=1 // pred_fallthru
      _
    // Predicated region
    $region6: #{tpu_custom_call.1} parent=1 // pred_check
      _
    $region7: #{tpu_custom_call.1} parent=1 // pred_check_branch
      %41 = sbr.rel (0) target = $region9
    $region8: #{tpu_custom_call.1} parent=1 // pred_region
      %43 = vsyncadd [#allocation9], 0
      %s45 = sshll.u32 %s1, 4
      %s46 = int_to_ptr.hbm [resolvable:$true] %s45
      %s47 = sshll.u32 [#allocation8], 4
      %s48 = int_to_ptr.vmem [resolvable:$true] %s47
      %50 = dma.hbm_to_vmem [thread:$0]  %s46, 64, %s48, [#allocation9]
    $region9: #{tpu_custom_call.1} parent=1 // pred_fallthru
      _
    // Predicated region
    $region10: #{tpu_custom_call.1} parent=1 // pred_check
      _
    $region11: #{tpu_custom_call.1} parent=1 // pred_check_branch
      %52 = sbr.rel (0) target = $region13
    $region12: #{tpu_custom_call.1} parent=1 // pred_region
      %54 = vsyncadd [#allocation9], 0
      %s55 = sshll.u32 %s2, 4
      %s56 = int_to_ptr.hbm [resolvable:$true] %s55
      %s57 = sshll.u32 [#allocation10], 4
      %s58 = int_to_ptr.vmem [resolvable:$true] %s57
      %63 = dma.hbm_to_vmem [thread:$0]  %s56, 1024, %s58, [#allocation9], 64, 64, 4
    $region13: #{tpu_custom_call.1} parent=1 // pred_fallthru
      _
    // Predicated region
    $region14: #{tpu_custom_call.1} parent=1 // pred_check
      _
    $region15: #{tpu_custom_call.1} parent=1 // pred_check_branch
      %65 = sbr.rel (0) target = $region17
    $region16: #{tpu_custom_call.1} parent=1 // pred_region
      %67 = vsyncadd [#allocation12], 0
      %s69 = sshll.u32 %s3, 4
      %s70 = int_to_ptr.hbm [resolvable:$true] %s69
      %s71 = sshll.u32 [#allocation11], 4
      %s72 = int_to_ptr.vmem [resolvable:$true] %s71
      %74 = dma.hbm_to_vmem [thread:$0]  %s70, 16, %s72, [#allocation12]
    $region17: #{tpu_custom_call.1} parent=1 // pred_fallthru
      _
    // Predicated region
    $region18: #{tpu_custom_call.1} parent=1 // pred_check
      _
    $region19: #{tpu_custom_call.1} parent=1 // pred_check_branch
      %76 = sbr.rel (0) target = $region21
    $region20: #{tpu_custom_call.1} parent=1 // pred_region
      %78 = vsyncadd [#allocation12], 0
      %s79 = sshll.u32 %s4, 4
      %s80 = int_to_ptr.hbm [resolvable:$true] %s79
      %s81 = sshll.u32 [#allocation13], 4
      %s82 = int_to_ptr.vmem [resolvable:$true] %s81
      %87 = dma.hbm_to_vmem [thread:$0]  %s80, 4096, %s82, [#allocation12], 64, 64, 4
    $region21: #{tpu_custom_call.1} parent=1 // pred_fallthru
      _
    // Predicated region
    $region22: #{tpu_custom_call.1} parent=1 // pred_check
      _
    $region23: #{tpu_custom_call.1} parent=1 // pred_check_branch
      %89 = sbr.rel (0) target = $region25
    $region24: #{tpu_custom_call.1} parent=1 // pred_region
      _
    $region25: #{tpu_custom_call.1} parent=1 // pred_fallthru
      _
    // Predicated region
    $region26: #{tpu_custom_call.1} parent=1 // pred_check
      _
    $region27: #{tpu_custom_call.1} parent=1 // pred_check_branch
      %91 = sbr.rel (0) target = $region29
    $region28: #{tpu_custom_call.1} parent=1 // pred_region
      %93 = vsyncadd [#allocation15], 0
      %s95 = sshll.u32 %s6, 4
      %s96 = int_to_ptr.hbm [resolvable:$true] %s95
      %s97 = sshll.u32 [#allocation14], 4
      %s98 = int_to_ptr.vmem [resolvable:$true] %s97
      %100 = dma.hbm_to_vmem [thread:$0]  %s96, 64, %s98, [#allocation15]
    $region29: #{tpu_custom_call.1} parent=1 // pred_fallthru
      _
    // Predicated region
    $region30: #{tpu_custom_call.1} parent=1 // pred_check
      _
    $region31: #{tpu_custom_call.1} parent=1 // pred_check_branch
      %102 = sbr.rel (0) target = $region33
    $region32: #{tpu_custom_call.1} parent=1 // pred_region
      %104 = vsyncadd [#allocation15], 0
      %s106 = sshll.u32 %s7, 4
      %s107 = int_to_ptr.hbm [resolvable:$true] %s106
      %s108 = sshll.u32 [#allocation16], 4
      %s109 = int_to_ptr.vmem [resolvable:$true] %s108
      %111 = dma.hbm_to_vmem [thread:$0]  %s107, 64, %s109, [#allocation15]
    $region33: #{tpu_custom_call.1} parent=1 // pred_fallthru
      _
    // Predicated region
    $region34: #{tpu_custom_call.1} parent=1 // pred_check
      _
    $region35: #{tpu_custom_call.1} parent=1 // pred_check_branch
      %113 = sbr.rel (0) target = $region37
    $region36: #{tpu_custom_call.1} parent=1 // pred_region
      %115 = vsyncadd [#allocation18], 0
      %s116 = sshll.u32 %s8, 4
      %s117 = int_to_ptr.hbm [resolvable:$true] %s116
      %s118 = sshll.u32 [#allocation17], 4
      %s119 = int_to_ptr.vmem [resolvable:$true] %s118
      %124 = dma.hbm_to_vmem [thread:$0]  %s117, 1024, %s119, [#allocation18], 64, 64, 4
    $region37: #{tpu_custom_call.1} parent=1 // pred_fallthru
      _
    // Predicated region
    $region38: #{tpu_custom_call.1} parent=1 // pred_check
      _
    $region39: #{tpu_custom_call.1} parent=1 // pred_check_branch
      %126 = sbr.rel (0) target = $region41
    $region40: #{tpu_custom_call.1} parent=1 // pred_region
      _
    $region41: #{tpu_custom_call.1} parent=1 // pred_fallthru
      _
    // Predicated region
    $region42: #{tpu_custom_call.1} parent=1 // pred_check
      _
    $region43: #{tpu_custom_call.1} parent=1 // pred_check_branch
      %128 = sbr.rel (0) target = $region45
    $region44: #{tpu_custom_call.1} parent=1 // pred_region
      %130 = vsyncadd [#allocation18], 0
      %s131 = sshll.u32 %s10, 4
      %s132 = int_to_ptr.hbm [resolvable:$true] %s131
      %s133 = sshll.u32 [#allocation19], 4
      %s134 = int_to_ptr.vmem [resolvable:$true] %s133
      %139 = dma.hbm_to_vmem [thread:$0]  %s132, 1024, %s134, [#allocation18], 64, 64, 4
    $region45: #{tpu_custom_call.1} parent=1 // pred_fallthru
      _
    // Predicated region
    $region46: #{tpu_custom_call.1} parent=1 // pred_check
      _
    $region47: #{tpu_custom_call.1} parent=1 // pred_check_branch
      %141 = sbr.rel (0) target = $region49
    $region48: #{tpu_custom_call.1} parent=1 // pred_region
      _
    $region49: #{tpu_custom_call.1} parent=1 // pred_fallthru
      _
    // Predicated region
    $region50: #{tpu_custom_call.1} parent=1 // pred_check
      _
    $region51: #{tpu_custom_call.1} parent=1 // pred_check_branch
      %143 = sbr.rel (0) target = $region53
    $region52: #{tpu_custom_call.1} parent=1 // pred_region
      %145 = vsyncadd [#allocation21], 0
      %s146 = sshll.u32 %s12, 4
      %s147 = int_to_ptr.hbm [resolvable:$true] %s146
      %s148 = sshll.u32 [#allocation20], 4
      %s149 = int_to_ptr.vmem [resolvable:$true] %s148
      %154 = dma.hbm_to_vmem [thread:$0]  %s147, 1024, %s149, [#allocation21], 64, 64, 4
    $region53: #{tpu_custom_call.1} parent=1 // pred_fallthru
      _
    // Predicated region
    $region54: #{tpu_custom_call.1} parent=1 // pred_check
      _
    $region55: #{tpu_custom_call.1} parent=1 // pred_check_branch
      %156 = sbr.rel (0) target = $region57
    $region56: #{tpu_custom_call.1} parent=1 // pred_region
      _
    $region57: #{tpu_custom_call.1} parent=1 // pred_fallthru
      _
    // Predicated region
    $region58: #{tpu_custom_call.1} parent=1 // pred_check
      _
    $region59: #{tpu_custom_call.1} parent=1 // pred_check_branch
      %158 = sbr.rel (0) target = $region61
    $region60: #{tpu_custom_call.1} parent=1 // pred_region
      %160 = vsyncadd [#allocation21], 0
      %s161 = sshll.u32 %s14, 4
      %s162 = int_to_ptr.hbm [resolvable:$true] %s161
      %s163 = sshll.u32 [#allocation22], 4
      %s164 = int_to_ptr.vmem [resolvable:$true] %s163
      %169 = dma.hbm_to_vmem [thread:$0]  %s162, 1024, %s164, [#allocation21], 64, 64, 4
    $region61: #{tpu_custom_call.1} parent=1 // pred_fallthru
      _
    // Predicated region
    $region62: #{tpu_custom_call.1} parent=1 // pred_check
      _
    $region63: #{tpu_custom_call.1} parent=1 // pred_check_branch
      %171 = sbr.rel (0) target = $region65
    $region64: #{tpu_custom_call.1} parent=1 // pred_region
      %173 = dma.done [#allocation6], 1024
    $region65: #{tpu_custom_call.1} parent=1 // pred_fallthru
      _
    // Predicated region
    $region66: #{tpu_custom_call.1} parent=1 // pred_check
      _
    $region67: #{tpu_custom_call.1} parent=1 // pred_check_branch
      %175 = sbr.rel (0) target = $region69
    $region68: #{tpu_custom_call.1} parent=1 // pred_region
      %177 = dma.done [#allocation9], 64
    $region69: #{tpu_custom_call.1} parent=1 // pred_fallthru
      _
    // Predicated region
    $region70: #{tpu_custom_call.1} parent=1 // pred_check
      _
    $region71: #{tpu_custom_call.1} parent=1 // pred_check_branch
      %179 = sbr.rel (0) target = $region73
    $region72: #{tpu_custom_call.1} parent=1 // pred_region
      %181 = dma.done [#allocation9], 1024
    $region73: #{tpu_custom_call.1} parent=1 // pred_fallthru
      _
    // Predicated region
    $region74: #{tpu_custom_call.1} parent=1 // pred_check
      _
    $region75: #{tpu_custom_call.1} parent=1 // pred_check_branch
      %183 = sbr.rel (0) target = $region77
    $region76: #{tpu_custom_call.1} parent=1 // pred_region
      %185 = dma.done [#allocation12], 16
    $region77: #{tpu_custom_call.1} parent=1 // pred_fallthru
      _
    // Predicated region
    $region78: #{tpu_custom_call.1} parent=1 // pred_check
      _
    $region79: #{tpu_custom_call.1} parent=1 // pred_check_branch
      %187 = sbr.rel (0) target = $region81
    $region80: #{tpu_custom_call.1} parent=1 // pred_region
      %189 = dma.done [#allocation12], 4096
    $region81: #{tpu_custom_call.1} parent=1 // pred_fallthru
      _
    // Predicated region
    $region82: #{tpu_custom_call.1} parent=1 // pred_check
      _
    $region83: #{tpu_custom_call.1} parent=1 // pred_check_branch
      %191 = sbr.rel (0) target = $region85
    $region84: #{tpu_custom_call.1} parent=1 // pred_region
      %193 = dma.done [#allocation15], 64
    $region85: #{tpu_custom_call.1} parent=1 // pred_fallthru
      _
    // Predicated region
    $region86: #{tpu_custom_call.1} parent=1 // pred_check
      _
    $region87: #{tpu_custom_call.1} parent=1 // pred_check_branch
      %195 = sbr.rel (0) target = $region89
    $region88: #{tpu_custom_call.1} parent=1 // pred_region
      %197 = dma.done [#allocation15], 64
    $region89: #{tpu_custom_call.1} parent=1 // pred_fallthru
      _
    // Predicated region
    $region90: #{tpu_custom_call.1} parent=1 // pred_check
      _
    $region91: #{tpu_custom_call.1} parent=1 // pred_check_branch
      %199 = sbr.rel (0) target = $region93
    $region92: #{tpu_custom_call.1} parent=1 // pred_region
      %201 = dma.done [#allocation18], 1024
    $region93: #{tpu_custom_call.1} parent=1 // pred_fallthru
      _
    // Predicated region
    $region94: #{tpu_custom_call.1} parent=1 // pred_check
      _
    $region95: #{tpu_custom_call.1} parent=1 // pred_check_branch
      %203 = sbr.rel (0) target = $region97
    $region96: #{tpu_custom_call.1} parent=1 // pred_region
      %205 = dma.done [#allocation18], 1024
    $region97: #{tpu_custom_call.1} parent=1 // pred_fallthru
      _
    // Predicated region
    $region98: #{tpu_custom_call.1} parent=1 // pred_check
      _
    $region99: #{tpu_custom_call.1} parent=1 // pred_check_branch
      %207 = sbr.rel (0) target = $region101
    $region100: #{tpu_custom_call.1} parent=1 // pred_region
      %209 = dma.done [#allocation21], 1024
    $region101: #{tpu_custom_call.1} parent=1 // pred_fallthru
      _
    // Predicated region
    $region102: #{tpu_custom_call.1} parent=1 // pred_check
      _
    $region103: #{tpu_custom_call.1} parent=1 // pred_check_branch
      %211 = sbr.rel (0) target = $region105
    $region104: #{tpu_custom_call.1} parent=1 // pred_region
      %213 = dma.done [#allocation21], 1024
    $region105: #{tpu_custom_call.1} parent=1 // pred_fallthru
      _
    %v214 = vld [vmem:[#allocation5] sm:$0xf]
    %v215 = vld [vmem:[#allocation5 + $0x4] sm:$0xf]
    %v216 = vld [vmem:[#allocation5 + $0x8] sm:$0xf]
    %v217 = vld [vmem:[#allocation5 + $0xc] sm:$0xf]
    %v218 = vld [vmem:[#allocation5 + $0x10] sm:$0xf]
    %v219 = vld [vmem:[#allocation5 + $0x14] sm:$0xf]
    %v220 = vld [vmem:[#allocation5 + $0x18] sm:$0xf]
    %v221 = vld [vmem:[#allocation5 + $0x1c] sm:$0xf]
    %v222 = vld [vmem:[#allocation5 + $0x20] sm:$0xf]
    %v223 = vld [vmem:[#allocation5 + $0x24] sm:$0xf]
    %v224 = vld [vmem:[#allocation5 + $0x28] sm:$0xf]
    %v225 = vld [vmem:[#allocation5 + $0x2c] sm:$0xf]
    %v226 = vld [vmem:[#allocation5 + $0x30] sm:$0xf]
    %v227 = vld [vmem:[#allocation5 + $0x34] sm:$0xf]
    %v228 = vld [vmem:[#allocation5 + $0x38] sm:$0xf]
    %v229 = vld [vmem:[#allocation5 + $0x3c] sm:$0xf]
    %v230 = vld [vmem:[#allocation10] sm:$0xf]
    %v231 = vld [vmem:[#allocation10 + $0x4] sm:$0xf]
    %v232 = vld [vmem:[#allocation10 + $0x8] sm:$0xf]
    %v233 = vld [vmem:[#allocation10 + $0xc] sm:$0xf]
    %v234 = vld [vmem:[#allocation10 + $0x10] sm:$0xf]
    %v235 = vld [vmem:[#allocation10 + $0x14] sm:$0xf]
    %v236 = vld [vmem:[#allocation10 + $0x18] sm:$0xf]
    %v237 = vld [vmem:[#allocation10 + $0x1c] sm:$0xf]
    %v238 = vld [vmem:[#allocation10 + $0x20] sm:$0xf]
    %v239 = vld [vmem:[#allocation10 + $0x24] sm:$0xf]
    %v240 = vld [vmem:[#allocation10 + $0x28] sm:$0xf]
    %v241 = vld [vmem:[#allocation10 + $0x2c] sm:$0xf]
    %v242 = vld [vmem:[#allocation10 + $0x30] sm:$0xf]
    %v243 = vld [vmem:[#allocation10 + $0x34] sm:$0xf]
    %v244 = vld [vmem:[#allocation10 + $0x38] sm:$0xf]
    %v245 = vld [vmem:[#allocation10 + $0x3c] sm:$0xf]
    %v246 = vld [vmem:[#allocation11] sm:$0x1]
    %v248 = vperm.slane %v246, 0
    %v266 = vunpack.c.l.b16 %v214
    %v267 = vunpack.c.l.b16 %v215
    %v268 = vunpack.c.l.b16 %v216
    %v269 = vunpack.c.l.b16 %v217
    %v270 = vunpack.c.l.b16 %v218
    %v271 = vunpack.c.l.b16 %v219
    %v272 = vunpack.c.l.b16 %v220
    %v273 = vunpack.c.l.b16 %v221
    %v274 = vunpack.c.l.b16 %v222
    %v275 = vunpack.c.l.b16 %v223
    %v276 = vunpack.c.l.b16 %v224
    %v277 = vunpack.c.l.b16 %v225
    %v278 = vunpack.c.l.b16 %v226
    %v279 = vunpack.c.l.b16 %v227
    %v280 = vunpack.c.l.b16 %v228
    %v281 = vunpack.c.l.b16 %v229
    %v282 = vpack.c.b16 %v267, %v266
    %v283 = vpack.c.b16 %v269, %v268
    %v284 = vpack.c.b16 %v271, %v270
    %v285 = vpack.c.b16 %v273, %v272
    %v286 = vpack.c.b16 %v275, %v274
    %v287 = vpack.c.b16 %v277, %v276
    %v288 = vpack.c.b16 %v279, %v278
    %v289 = vpack.c.b16 %v281, %v280
    %v314 = vunpack.c.l.b16 %v230
    %v315 = vunpack.c.l.b16 %v231
    %v316 = vunpack.c.l.b16 %v232
    %v317 = vunpack.c.l.b16 %v233
    %v318 = vunpack.c.l.b16 %v234
    %v319 = vunpack.c.l.b16 %v235
    %v320 = vunpack.c.l.b16 %v236
    %v321 = vunpack.c.l.b16 %v237
    %v322 = vunpack.c.l.b16 %v238
    %v323 = vunpack.c.l.b16 %v239
    %v324 = vunpack.c.l.b16 %v240
    %v325 = vunpack.c.l.b16 %v241
    %v326 = vunpack.c.l.b16 %v242
    %v327 = vunpack.c.l.b16 %v243
    %v328 = vunpack.c.l.b16 %v244
    %v329 = vunpack.c.l.b16 %v245
    %v330 = vpack.c.b16 %v315, %v314
    %v331 = vpack.c.b16 %v317, %v316
    %v332 = vpack.c.b16 %v319, %v318
    %v333 = vpack.c.b16 %v321, %v320
    %v334 = vpack.c.b16 %v323, %v322
    %v335 = vpack.c.b16 %v325, %v324
    %v336 = vpack.c.b16 %v327, %v326
    %v337 = vpack.c.b16 %v329, %v328
    %346 = vmatpush.bf16.msra.mxu0 %v337
    %347 = vmatpush.bf16.msra.mxu0 %v336
    %348 = vmatpush.bf16.msra.mxu0 %v335
    %349 = vmatpush.bf16.msra.mxu0 %v334
    %350 = vmatpush.bf16.msra.mxu0 %v333
    %351 = vmatpush.bf16.msra.mxu0 %v332
    %352 = vmatpush.bf16.msra.mxu0 %v331
    %353 = vmatpush.bf16.msra.mxu0 %v330
    %354 = vmatmul.bf16.gmra.mxu0 %v282
    %v355 = vpop.f32.mrf.mxu0
    %v356 = vadd.f32 %v248, %v355
    %v357 = vpop.f32.mrf.mxu0
    %v358 = vadd.f32 %v248, %v357
    %359 = vmatmul.bf16.gmra.mxu0 %v283
    %v360 = vpop.f32.mrf.mxu0
    %v361 = vadd.f32 %v248, %v360
    %v362 = vpop.f32.mrf.mxu0
    %v363 = vadd.f32 %v248, %v362
    %364 = vmatmul.bf16.gmra.mxu0 %v284
    %v365 = vpop.f32.mrf.mxu0
    %v366 = vadd.f32 %v248, %v365
    %v367 = vpop.f32.mrf.mxu0
    %v368 = vadd.f32 %v248, %v367
    %369 = vmatmul.bf16.gmra.mxu0 %v285
    %v370 = vpop.f32.mrf.mxu0
    %v371 = vadd.f32 %v248, %v370
    %v372 = vpop.f32.mrf.mxu0
    %v373 = vadd.f32 %v248, %v372
    %374 = vmatmul.bf16.gmra.mxu0 %v286
    %v375 = vpop.f32.mrf.mxu0
    %v376 = vadd.f32 %v248, %v375
    %v377 = vpop.f32.mrf.mxu0
    %v378 = vadd.f32 %v248, %v377
    %379 = vmatmul.bf16.gmra.mxu0 %v287
    %v380 = vpop.f32.mrf.mxu0
    %v381 = vadd.f32 %v248, %v380
    %v382 = vpop.f32.mrf.mxu0
    %v383 = vadd.f32 %v248, %v382
    %384 = vmatmul.bf16.gmra.mxu0 %v288
    %v385 = vpop.f32.mrf.mxu0
    %v386 = vadd.f32 %v248, %v385
    %v387 = vpop.f32.mrf.mxu0
    %v388 = vadd.f32 %v248, %v387
    %389 = vmatmul.bf16.gmra.mxu0 %v289
    %v390 = vpop.f32.mrf.mxu0
    %v391 = vadd.f32 %v248, %v390
    %v392 = vpop.f32.mrf.mxu0
    %v393 = vadd.f32 %v248, %v392
    %394 = vdwg.mxu0
    %395 = vst [vmem:[#allocation2] sm:$0xff] %v356
    %396 = vst [vmem:[#allocation2 + $0x8] sm:$0xff] %v358
    %397 = vst [vmem:[#allocation2 + $0x10] sm:$0xff] %v361
    %398 = vst [vmem:[#allocation2 + $0x18] sm:$0xff] %v363
    %399 = vst [vmem:[#allocation2 + $0x20] sm:$0xff] %v366
    %400 = vst [vmem:[#allocation2 + $0x28] sm:$0xff] %v368
    %401 = vst [vmem:[#allocation2 + $0x30] sm:$0xff] %v371
    %402 = vst [vmem:[#allocation2 + $0x38] sm:$0xff] %v373
    %403 = vst [vmem:[#allocation2 + $0x40] sm:$0xff] %v376
    %404 = vst [vmem:[#allocation2 + $0x48] sm:$0xff] %v378
    %405 = vst [vmem:[#allocation2 + $0x50] sm:$0xff] %v381
    %406 = vst [vmem:[#allocation2 + $0x58] sm:$0xff] %v383
    %407 = vst [vmem:[#allocation2 + $0x60] sm:$0xff] %v386
    %408 = vst [vmem:[#allocation2 + $0x68] sm:$0xff] %v388
    %409 = vst [vmem:[#allocation2 + $0x70] sm:$0xff] %v391
    %410 = vst [vmem:[#allocation2 + $0x78] sm:$0xff] %v393
    %v411 = vlaneseq
    %v412 = vshrl.u32 %v411, 7
    %v413 = vadd.s32 %v412, 8
    %v414 = vadd.s32 %v412, 16
    %v415 = vadd.s32 %v412, 24
    %v416 = vadd.s32 %v412, 32
    %v417 = vadd.s32 %v412, 40
    %v418 = vadd.s32 %v412, 48
    %v419 = vadd.s32 %v412, 56
    %v420 = vadd.s32 %v412, 64
    %v421 = vadd.s32 %v412, 72
    %v422 = vadd.s32 %v412, 80
    %v423 = vadd.s32 %v412, 88
    %v424 = vadd.s32 %v412, 96
    %v425 = vadd.s32 %v412, 104
    %v426 = vadd.s32 %v412, 112
    %v427 = vadd.s32 %v412, 120
    %vm428 = vcmp.lt.s32.totalorder %v412, 32
    %vm429 = vcmp.lt.s32.totalorder %v413, 32
    %vm430 = vcmp.lt.s32.totalorder %v414, 32
    %vm431 = vcmp.lt.s32.totalorder %v415, 32
    %vm432 = vcmp.lt.s32.totalorder %v416, 32
    %vm433 = vcmp.lt.s32.totalorder %v417, 32
    %vm434 = vcmp.lt.s32.totalorder %v418, 32
    %vm435 = vcmp.lt.s32.totalorder %v419, 32
    %vm436 = vcmp.lt.s32.totalorder %v420, 32
    %vm437 = vcmp.lt.s32.totalorder %v421, 32
    %vm438 = vcmp.lt.s32.totalorder %v422, 32
    %vm439 = vcmp.lt.s32.totalorder %v423, 32
    %vm440 = vcmp.lt.s32.totalorder %v424, 32
    %vm441 = vcmp.lt.s32.totalorder %v425, 32
    %vm442 = vcmp.lt.s32.totalorder %v426, 32
    %vm443 = vcmp.lt.s32.totalorder %v427, 32
    %v444 = vsel %vm428, 1, 0
    %v445 = vsel %vm429, 1, 0
    %v446 = vsel %vm430, 1, 0
    %v447 = vsel %vm431, 1, 0
    %v448 = vsel %vm432, 1, 0
    %v449 = vsel %vm433, 1, 0
    %v450 = vsel %vm434, 1, 0
    %v451 = vsel %vm435, 1, 0
    %v452 = vsel %vm436, 1, 0
    %v453 = vsel %vm437, 1, 0
    %v454 = vsel %vm438, 1, 0
    %v455 = vsel %vm439, 1, 0
    %v456 = vsel %vm440, 1, 0
    %v457 = vsel %vm441, 1, 0
    %v458 = vsel %vm442, 1, 0
    %v459 = vsel %vm443, 1, 0
    %v460 = vcvt.s32.f32 %v444
    %v461 = vcvt.s32.f32 %v445
    %v462 = vcvt.s32.f32 %v446
    %v463 = vcvt.s32.f32 %v447
    %v464 = vcvt.s32.f32 %v448
    %v465 = vcvt.s32.f32 %v449
    %v466 = vcvt.s32.f32 %v450
    %v467 = vcvt.s32.f32 %v451
    %v468 = vcvt.s32.f32 %v452
    %v469 = vcvt.s32.f32 %v453
    %v470 = vcvt.s32.f32 %v454
    %v471 = vcvt.s32.f32 %v455
    %v472 = vcvt.s32.f32 %v456
    %v473 = vcvt.s32.f32 %v457
    %v474 = vcvt.s32.f32 %v458
    %v475 = vcvt.s32.f32 %v459
    %v476 = vld [vmem:[#allocation13] sm:$0xf]
    %v477 = vld [vmem:[#allocation13 + $0x4] sm:$0xf]
    %v478 = vld [vmem:[#allocation13 + $0x8] sm:$0xf]
    %v479 = vld [vmem:[#allocation13 + $0xc] sm:$0xf]
    %v480 = vld [vmem:[#allocation13 + $0x10] sm:$0xf]
    %v481 = vld [vmem:[#allocation13 + $0x14] sm:$0xf]
    %v482 = vld [vmem:[#allocation13 + $0x18] sm:$0xf]
    %v483 = vld [vmem:[#allocation13 + $0x1c] sm:$0xf]
    %v484 = vld [vmem:[#allocation13 + $0x20] sm:$0xf]
    %v485 = vld [vmem:[#allocation13 + $0x24] sm:$0xf]
    %v486 = vld [vmem:[#allocation13 + $0x28] sm:$0xf]
    %v487 = vld [vmem:[#allocation13 + $0x2c] sm:$0xf]
    %v488 = vld [vmem:[#allocation13 + $0x30] sm:$0xf]
    %v489 = vld [vmem:[#allocation13 + $0x34] sm:$0xf]
    %v490 = vld [vmem:[#allocation13 + $0x38] sm:$0xf]
    %v491 = vld [vmem:[#allocation13 + $0x3c] sm:$0xf]
    %v492 = vld [vmem:[%s5] sm:$0x1]
    %v493 = vld [vmem:[#allocation14] sm:$0x1]
    %v494 = vld [vmem:[#allocation16] sm:$0x1]
    %v495 = vld [vmem:[#allocation2] sm:$0xff]
    %v496 = vld [vmem:[#allocation2 + $0x8] sm:$0xff]
    %v497 = vld [vmem:[#allocation2 + $0x10] sm:$0xff]
    %v498 = vld [vmem:[#allocation2 + $0x18] sm:$0xff]
    %v499 = vld [vmem:[#allocation2 + $0x20] sm:$0xff]
    %v500 = vld [vmem:[#allocation2 + $0x28] sm:$0xff]
    %v501 = vld [vmem:[#allocation2 + $0x30] sm:$0xff]
    %v502 = vld [vmem:[#allocation2 + $0x38] sm:$0xff]
    %v503 = vld [vmem:[#allocation2 + $0x40] sm:$0xff]
    %v504 = vld [vmem:[#allocation2 + $0x48] sm:$0xff]
    %v505 = vld [vmem:[#allocation2 + $0x50] sm:$0xff]
    %v506 = vld [vmem:[#allocation2 + $0x58] sm:$0xff]
    %v507 = vld [vmem:[#allocation2 + $0x60] sm:$0xff]
    %v508 = vld [vmem:[#allocation2 + $0x68] sm:$0xff]
    %v509 = vld [vmem:[#allocation2 + $0x70] sm:$0xff]
    %v510 = vld [vmem:[#allocation2 + $0x78] sm:$0xff]
    %v511 = vpack.c.bf16 %v496, %v495
    %v512 = vpack.c.bf16 %v498, %v497
    %v513 = vpack.c.bf16 %v500, %v499
    %v514 = vpack.c.bf16 %v502, %v501
    %v515 = vpack.c.bf16 %v504, %v503
    %v516 = vpack.c.bf16 %v506, %v505
    %v517 = vpack.c.bf16 %v508, %v507
    %v518 = vpack.c.bf16 %v510, %v509
    %v535 = vunpack.c.l.b16 %v476
    %v536 = vunpack.c.l.b16 %v477
    %v537 = vunpack.c.l.b16 %v478
    %v538 = vunpack.c.l.b16 %v479
    %v539 = vunpack.c.l.b16 %v480
    %v540 = vunpack.c.l.b16 %v481
    %v541 = vunpack.c.l.b16 %v482
    %v542 = vunpack.c.l.b16 %v483
    %v543 = vunpack.c.l.b16 %v484
    %v544 = vunpack.c.l.b16 %v485
    %v545 = vunpack.c.l.b16 %v486
    %v546 = vunpack.c.l.b16 %v487
    %v547 = vunpack.c.l.b16 %v488
    %v548 = vunpack.c.l.b16 %v489
    %v549 = vunpack.c.l.b16 %v490
    %v550 = vunpack.c.l.b16 %v491
    %v551 = vpack.c.b16 %v536, %v535
    %v552 = vpack.c.b16 %v538, %v537
    %v553 = vpack.c.b16 %v540, %v539
    %v554 = vpack.c.b16 %v542, %v541
    %v555 = vpack.c.b16 %v544, %v543
    %v556 = vpack.c.b16 %v546, %v545
    %v557 = vpack.c.b16 %v548, %v547
    %v558 = vpack.c.b16 %v550, %v549
    %567 = vmatpush.bf16.msra.mxu0 %v558
    %568 = vmatpush.bf16.msra.mxu0 %v557
    %569 = vmatpush.bf16.msra.mxu0 %v556
    %570 = vmatpush.bf16.msra.mxu0 %v555
    %571 = vmatpush.bf16.msra.mxu0 %v554
    %572 = vmatpush.bf16.msra.mxu0 %v553
    %573 = vmatpush.bf16.msra.mxu0 %v552
    %574 = vmatpush.bf16.msra.mxu0 %v551
    %575 = vmatmul.bf16.gmra.mxu0 %v511
    %v576 = vpop.f32.mrf.mxu0
    %v577 = vadd.f32 0.0, %v576
    %v578 = vpop.f32.mrf.mxu0
    %v579 = vadd.f32 0.0, %v578
    %580 = vmatmul.bf16.gmra.mxu0 %v512
    %v581 = vpop.f32.mrf.mxu0
    %v582 = vadd.f32 0.0, %v581
    %v583 = vpop.f32.mrf.mxu0
    %v584 = vadd.f32 0.0, %v583
    %585 = vmatmul.bf16.gmra.mxu0 %v513
    %v586 = vpop.f32.mrf.mxu0
    %v587 = vadd.f32 0.0, %v586
    %v588 = vpop.f32.mrf.mxu0
    %v589 = vadd.f32 0.0, %v588
    %590 = vmatmul.bf16.gmra.mxu0 %v514
    %v591 = vpop.f32.mrf.mxu0
    %v592 = vadd.f32 0.0, %v591
    %v593 = vpop.f32.mrf.mxu0
    %v594 = vadd.f32 0.0, %v593
    %595 = vmatmul.bf16.gmra.mxu0 %v515
    %v596 = vpop.f32.mrf.mxu0
    %v597 = vadd.f32 0.0, %v596
    %v598 = vpop.f32.mrf.mxu0
    %v599 = vadd.f32 0.0, %v598
    %600 = vmatmul.bf16.gmra.mxu0 %v516
    %v601 = vpop.f32.mrf.mxu0
    %v602 = vadd.f32 0.0, %v601
    %v603 = vpop.f32.mrf.mxu0
    %v604 = vadd.f32 0.0, %v603
    %605 = vmatmul.bf16.gmra.mxu0 %v517
    %v606 = vpop.f32.mrf.mxu0
    %v607 = vadd.f32 0.0, %v606
    %v608 = vpop.f32.mrf.mxu0
    %v609 = vadd.f32 0.0, %v608
    %610 = vmatmul.bf16.gmra.mxu0 %v518
    %v611 = vpop.f32.mrf.mxu0
    %v612 = vadd.f32 0.0, %v611
    %v613 = vpop.f32.mrf.mxu0
    %v614 = vadd.f32 0.0, %v613
    %615 = vdwg.mxu0
    %v616 = vpack.c.bf16 %v577, %v577
    %v617 = vpack.c.bf16 %v579, %v579
    %v618 = vpack.c.bf16 %v582, %v582
    %v619 = vpack.c.bf16 %v584, %v584
    %v620 = vpack.c.bf16 %v587, %v587
    %v621 = vpack.c.bf16 %v589, %v589
    %v622 = vpack.c.bf16 %v592, %v592
    %v623 = vpack.c.bf16 %v594, %v594
    %v624 = vpack.c.bf16 %v597, %v597
    %v625 = vpack.c.bf16 %v599, %v599
    %v626 = vpack.c.bf16 %v602, %v602
    %v627 = vpack.c.bf16 %v604, %v604
    %v628 = vpack.c.bf16 %v607, %v607
    %v629 = vpack.c.bf16 %v609, %v609
    %v630 = vpack.c.bf16 %v612, %v612
    %v631 = vpack.c.bf16 %v614, %v614
    %632 = vst [vmem:[#allocation3] sm:$0xf] %v616
    %633 = vst [vmem:[#allocation3 + $0x4] sm:$0xf] %v617
    %634 = vst [vmem:[#allocation3 + $0x8] sm:$0xf] %v618
    %635 = vst [vmem:[#allocation3 + $0xc] sm:$0xf] %v619
    %636 = vst [vmem:[#allocation3 + $0x10] sm:$0xf] %v620
    %637 = vst [vmem:[#allocation3 + $0x14] sm:$0xf] %v621
    %638 = vst [vmem:[#allocation3 + $0x18] sm:$0xf] %v622
    %639 = vst [vmem:[#allocation3 + $0x1c] sm:$0xf] %v623
    %640 = vst [vmem:[#allocation3 + $0x20] sm:$0xf] %v624
    %641 = vst [vmem:[#allocation3 + $0x24] sm:$0xf] %v625
    %642 = vst [vmem:[#allocation3 + $0x28] sm:$0xf] %v626
    %643 = vst [vmem:[#allocation3 + $0x2c] sm:$0xf] %v627
    %644 = vst [vmem:[#allocation3 + $0x30] sm:$0xf] %v628
    %645 = vst [vmem:[#allocation3 + $0x34] sm:$0xf] %v629
    %646 = vst [vmem:[#allocation3 + $0x38] sm:$0xf] %v630
    %647 = vst [vmem:[#allocation3 + $0x3c] sm:$0xf] %v631
    %v648 = vld [vmem:[#allocation22] sm:$0xf]
    %v649 = vld [vmem:[#allocation22 + $0x4] sm:$0xf]
    %v650 = vld [vmem:[#allocation22 + $0x8] sm:$0xf]
    %v651 = vld [vmem:[#allocation22 + $0xc] sm:$0xf]
    %v652 = vld [vmem:[#allocation22 + $0x10] sm:$0xf]
    %v653 = vld [vmem:[#allocation22 + $0x14] sm:$0xf]
    %v654 = vld [vmem:[#allocation22 + $0x18] sm:$0xf]
    %v655 = vld [vmem:[#allocation22 + $0x1c] sm:$0xf]
    %v656 = vld [vmem:[#allocation22 + $0x20] sm:$0xf]
    %v657 = vld [vmem:[#allocation22 + $0x24] sm:$0xf]
    %v658 = vld [vmem:[#allocation22 + $0x28] sm:$0xf]
    %v659 = vld [vmem:[#allocation22 + $0x2c] sm:$0xf]
    %v660 = vld [vmem:[#allocation22 + $0x30] sm:$0xf]
    %v661 = vld [vmem:[#allocation22 + $0x34] sm:$0xf]
    %v662 = vld [vmem:[#allocation22 + $0x38] sm:$0xf]
    %v663 = vld [vmem:[#allocation22 + $0x3c] sm:$0xf]
    %v664 = vld [vmem:[#allocation3] sm:$0xf]
    %v665 = vld [vmem:[#allocation3 + $0x4] sm:$0xf]
    %v666 = vld [vmem:[#allocation3 + $0x8] sm:$0xf]
    %v667 = vld [vmem:[#allocation3 + $0xc] sm:$0xf]
    %v668 = vld [vmem:[#allocation3 + $0x10] sm:$0xf]
    %v669 = vld [vmem:[#allocation3 + $0x14] sm:$0xf]
    %v670 = vld [vmem:[#allocation3 + $0x18] sm:$0xf]
    %v671 = vld [vmem:[#allocation3 + $0x1c] sm:$0xf]
    %v672 = vld [vmem:[#allocation3 + $0x20] sm:$0xf]
    %v673 = vld [vmem:[#allocation3 + $0x24] sm:$0xf]
    %v674 = vld [vmem:[#allocation3 + $0x28] sm:$0xf]
    %v675 = vld [vmem:[#allocation3 + $0x2c] sm:$0xf]
    %v676 = vld [vmem:[#allocation3 + $0x30] sm:$0xf]
    %v677 = vld [vmem:[#allocation3 + $0x34] sm:$0xf]
    %v678 = vld [vmem:[#allocation3 + $0x38] sm:$0xf]
    %v679 = vld [vmem:[#allocation3 + $0x3c] sm:$0xf]
    %v680 = vperm.slane %v492, 0
    %v697 = vunpack.c.l.b16 %v648
    %v698 = vunpack.c.l.b16 %v649
    %v699 = vunpack.c.l.b16 %v650
    %v700 = vunpack.c.l.b16 %v651
    %v701 = vunpack.c.l.b16 %v652
    %v702 = vunpack.c.l.b16 %v653
    %v703 = vunpack.c.l.b16 %v654
    %v704 = vunpack.c.l.b16 %v655
    %v705 = vunpack.c.l.b16 %v656
    %v706 = vunpack.c.l.b16 %v657
    %v707 = vunpack.c.l.b16 %v658
    %v708 = vunpack.c.l.b16 %v659
    %v709 = vunpack.c.l.b16 %v660
    %v710 = vunpack.c.l.b16 %v661
    %v711 = vunpack.c.l.b16 %v662
    %v712 = vunpack.c.l.b16 %v663
    %v713 = vpack.c.b16 %v698, %v697
    %v714 = vpack.c.b16 %v700, %v699
    %v715 = vpack.c.b16 %v702, %v701
    %v716 = vpack.c.b16 %v704, %v703
    %v717 = vpack.c.b16 %v706, %v705
    %v718 = vpack.c.b16 %v708, %v707
    %v719 = vpack.c.b16 %v710, %v709
    %v720 = vpack.c.b16 %v712, %v711
    %v745 = vunpack.c.l.b16 %v664
    %v746 = vunpack.c.l.b16 %v665
    %v747 = vunpack.c.l.b16 %v666
    %v748 = vunpack.c.l.b16 %v667
    %v749 = vunpack.c.l.b16 %v668
    %v750 = vunpack.c.l.b16 %v669
    %v751 = vunpack.c.l.b16 %v670
    %v752 = vunpack.c.l.b16 %v671
    %v753 = vunpack.c.l.b16 %v672
    %v754 = vunpack.c.l.b16 %v673
    %v755 = vunpack.c.l.b16 %v674
    %v756 = vunpack.c.l.b16 %v675
    %v757 = vunpack.c.l.b16 %v676
    %v758 = vunpack.c.l.b16 %v677
    %v759 = vunpack.c.l.b16 %v678
    %v760 = vunpack.c.l.b16 %v679
    %v761 = vpack.c.b16 %v746, %v745
    %v762 = vpack.c.b16 %v748, %v747
    %v763 = vpack.c.b16 %v750, %v749
    %v764 = vpack.c.b16 %v752, %v751
    %v765 = vpack.c.b16 %v754, %v753
    %v766 = vpack.c.b16 %v756, %v755
    %v767 = vpack.c.b16 %v758, %v757
    %v768 = vpack.c.b16 %v760, %v759
    %777 = vmatpush.bf16.msra.mxu0 %v768
    %778 = vmatpush.bf16.msra.mxu0 %v767
    %779 = vmatpush.bf16.msra.mxu0 %v766
    %780 = vmatpush.bf16.msra.mxu0 %v765
    %781 = vmatpush.bf16.msra.mxu0 %v764
    %782 = vmatpush.bf16.msra.mxu0 %v763
    %783 = vmatpush.bf16.msra.mxu0 %v762
    %784 = vmatpush.bf16.msra.mxu0 %v761
    %785 = vmatmul.bf16.gmra.mxu0 %v713
    %v786 = vpop.f32.mrf.mxu0
    %v787 = vadd.f32 %v680, %v786
    %v788 = vpop.f32.mrf.mxu0
    %v789 = vadd.f32 %v680, %v788
    %790 = vmatmul.bf16.gmra.mxu0 %v714
    %v791 = vpop.f32.mrf.mxu0
    %v792 = vadd.f32 %v680, %v791
    %v793 = vpop.f32.mrf.mxu0
    %v794 = vadd.f32 %v680, %v793
    %795 = vmatmul.bf16.gmra.mxu0 %v715
    %v796 = vpop.f32.mrf.mxu0
    %v797 = vadd.f32 %v680, %v796
    %v798 = vpop.f32.mrf.mxu0
    %v799 = vadd.f32 %v680, %v798
    %800 = vmatmul.bf16.gmra.mxu0 %v716
    %v801 = vpop.f32.mrf.mxu0
    %v802 = vadd.f32 %v680, %v801
    %v803 = vpop.f32.mrf.mxu0
    %v804 = vadd.f32 %v680, %v803
    %805 = vmatmul.bf16.gmra.mxu0 %v717
    %v806 = vpop.f32.mrf.mxu0
    %v807 = vadd.f32 %v680, %v806
    %v808 = vpop.f32.mrf.mxu0
    %v809 = vadd.f32 %v680, %v808
    %810 = vmatmul.bf16.gmra.mxu0 %v718
    %v811 = vpop.f32.mrf.mxu0
    %v812 = vadd.f32 %v680, %v811
    %v813 = vpop.f32.mrf.mxu0
    %v814 = vadd.f32 %v680, %v813
    %815 = vmatmul.bf16.gmra.mxu0 %v719
    %v816 = vpop.f32.mrf.mxu0
    %v817 = vadd.f32 %v680, %v816
    %v818 = vpop.f32.mrf.mxu0
    %v819 = vadd.f32 %v680, %v818
    %820 = vmatmul.bf16.gmra.mxu0 %v720
    %v821 = vpop.f32.mrf.mxu0
    %v822 = vadd.f32 %v680, %v821
    %v823 = vpop.f32.mrf.mxu0
    %v824 = vadd.f32 %v680, %v823
    %825 = vdwg.mxu0
    %826 = vst [vmem:[#allocation4] sm:$0xff] %v787
    %827 = vst [vmem:[#allocation4 + $0x8] sm:$0xff] %v789
    %828 = vst [vmem:[#allocation4 + $0x10] sm:$0xff] %v792
    %829 = vst [vmem:[#allocation4 + $0x18] sm:$0xff] %v794
    %830 = vst [vmem:[#allocation4 + $0x20] sm:$0xff] %v797
    %831 = vst [vmem:[#allocation4 + $0x28] sm:$0xff] %v799
    %832 = vst [vmem:[#allocation4 + $0x30] sm:$0xff] %v802
    %833 = vst [vmem:[#allocation4 + $0x38] sm:$0xff] %v804
    %834 = vst [vmem:[#allocation4 + $0x40] sm:$0xff] %v807
    %835 = vst [vmem:[#allocation4 + $0x48] sm:$0xff] %v809
    %836 = vst [vmem:[#allocation4 + $0x50] sm:$0xff] %v812
    %837 = vst [vmem:[#allocation4 + $0x58] sm:$0xff] %v814
    %838 = vst [vmem:[#allocation4 + $0x60] sm:$0xff] %v817
    %839 = vst [vmem:[#allocation4 + $0x68] sm:$0xff] %v819
    %840 = vst [vmem:[#allocation4 + $0x70] sm:$0xff] %v822
    %841 = vst [vmem:[#allocation4 + $0x78] sm:$0xff] %v824
    %v842 = vld [vmem:[#allocation4] sm:$0xff]
    %v843 = vld [vmem:[#allocation4 + $0x8] sm:$0xff]
    %v844 = vld [vmem:[#allocation4 + $0x10] sm:$0xff]
    %v845 = vld [vmem:[#allocation4 + $0x18] sm:$0xff]
    %v846 = vld [vmem:[#allocation4 + $0x20] sm:$0xff]
    %v847 = vld [vmem:[#allocation4 + $0x28] sm:$0xff]
    %v848 = vld [vmem:[#allocation4 + $0x30] sm:$0xff]
    %v849 = vld [vmem:[#allocation4 + $0x38] sm:$0xff]
    %v850 = vld [vmem:[#allocation4 + $0x40] sm:$0xff]
    %v851 = vld [vmem:[#allocation4 + $0x48] sm:$0xff]
    %v852 = vld [vmem:[#allocation4 + $0x50] sm:$0xff]
    %v853 = vld [vmem:[#allocation4 + $0x58] sm:$0xff]
    %v854 = vld [vmem:[#allocation4 + $0x60] sm:$0xff]
    %v855 = vld [vmem:[#allocation4 + $0x68] sm:$0xff]
    %v856 = vld [vmem:[#allocation4 + $0x70] sm:$0xff]
    %v857 = vld [vmem:[#allocation4 + $0x78] sm:$0xff]
    %v858 = vmul.f32 %v842, %v460
    %v859 = vmul.f32 %v843, %v461
    %v860 = vmul.f32 %v844, %v462
    %v861 = vmul.f32 %v845, %v463
    %v862 = vmul.f32 %v846, %v464
    %v863 = vmul.f32 %v847, %v465
    %v864 = vmul.f32 %v848, %v466
    %v865 = vmul.f32 %v849, %v467
    %v866 = vmul.f32 %v850, %v468
    %v867 = vmul.f32 %v851, %v469
    %v868 = vmul.f32 %v852, %v470
    %v869 = vmul.f32 %v853, %v471
    %v870 = vmul.f32 %v854, %v472
    %v871 = vmul.f32 %v855, %v473
    %v872 = vmul.f32 %v856, %v474
    %v873 = vmul.f32 %v857, %v475
    %v874 = vadd.f32 %v858, %v859
    %v875 = vadd.f32 %v874, %v860
    %v876 = vadd.f32 %v875, %v861
    %v877 = vadd.f32 %v876, %v862
    %v878 = vadd.f32 %v877, %v863
    %v879 = vadd.f32 %v878, %v864
    %v880 = vadd.f32 %v879, %v865
    %v881 = vadd.f32 %v880, %v866
    %v882 = vadd.f32 %v881, %v867
    %v883 = vadd.f32 %v882, %v868
    %v884 = vadd.f32 %v883, %v869
    %v885 = vadd.f32 %v884, %v870
    %v886 = vadd.f32 %v885, %v871
    %v887 = vadd.f32 %v886, %v872
    %v888 = vadd.f32 %v887, %v873
    %v889 = vrot.slane %v888, 4
    %v890 = vadd.f32 %v888, %v889
    %v891 = vrot.slane %v890, 2
    %v892 = vadd.f32 %v890, %v891
    %v893 = vrot.slane %v892, 1
    %v894 = vadd.f32 %v892, %v893
    %v895 = vmul.f32 %v858, %v842
    %v896 = vmul.f32 %v859, %v843
    %v897 = vmul.f32 %v860, %v844
    %v898 = vmul.f32 %v861, %v845
    %v899 = vmul.f32 %v862, %v846
    %v900 = vmul.f32 %v863, %v847
    %v901 = vmul.f32 %v864, %v848
    %v902 = vmul.f32 %v865, %v849
    %v903 = vmul.f32 %v866, %v850
    %v904 = vmul.f32 %v867, %v851
    %v905 = vmul.f32 %v868, %v852
    %v906 = vmul.f32 %v869, %v853
    %v907 = vmul.f32 %v870, %v854
    %v908 = vmul.f32 %v871, %v855
    %v909 = vmul.f32 %v872, %v856
    %v910 = vmul.f32 %v873, %v857
    %v911 = vadd.f32 %v895, %v896
    %v912 = vadd.f32 %v911, %v897
    %v913 = vadd.f32 %v912, %v898
    %v914 = vadd.f32 %v913, %v899
    %v915 = vadd.f32 %v914, %v900
    %v916 = vadd.f32 %v915, %v901
    %v917 = vadd.f32 %v916, %v902
    %v918 = vadd.f32 %v917, %v903
    %v919 = vadd.f32 %v918, %v904
    %v920 = vadd.f32 %v919, %v905
    %v921 = vadd.f32 %v920, %v906
    %v922 = vadd.f32 %v921, %v907
    %v923 = vadd.f32 %v922, %v908
    %v924 = vadd.f32 %v923, %v909
    %v925 = vadd.f32 %v924, %v910
    %v926 = vrot.slane %v925, 4
    %v927 = vadd.f32 %v925, %v926
    %v928 = vrot.slane %v927, 2
    %v929 = vadd.f32 %v927, %v928
    %v930 = vrot.slane %v929, 1
    %v931 = vadd.f32 %v929, %v930
    %v932 = vmul.f32 %v894, 0.03125
    %v933 = vmul.f32 %v931, 0.03125
    %v934 = vmul.f32 %v932, %v932
    %v935 = vsub.f32 %v933, %v934
    %v936 = vmax.f32 %v935, 0.0
    %v937 = vadd.f32 %v936, 1e-05
    %v938 = vrsqrt.pop %v937
    %v939 = vmul.f32 %v938, %v937
    %v940 = vmul.f32 %v939, %v938
    %v941 = vmul.f32 0.5, %v940
    %v942 = vsub.f32 1.5, %v941
    %v943 = vmul.f32 %v938, %v942
    %vm944 = vweird.f32 %v937
    %vm945 = vweird.f32 %v938
    %vm946 = vmor %vm944, %vm945
    %v947 = vsel %vm946, %v938, %v943
    %v948 = vmul.f32 %v493, %v947
    %v949 = vmul.f32 %v932, %v948
    %v950 = vsub.f32 %v494, %v949
    %v951 = vperm.slane %v948, 0
    %v952 = vmul.f32 %v842, %v951
    %v953 = vmul.f32 %v843, %v951
    %v954 = vmul.f32 %v844, %v951
    %v955 = vmul.f32 %v845, %v951
    %v956 = vmul.f32 %v846, %v951
    %v957 = vmul.f32 %v847, %v951
    %v958 = vmul.f32 %v848, %v951
    %v959 = vmul.f32 %v849, %v951
    %v960 = vmul.f32 %v850, %v951
    %v961 = vmul.f32 %v851, %v951
    %v962 = vmul.f32 %v852, %v951
    %v963 = vmul.f32 %v853, %v951
    %v964 = vmul.f32 %v854, %v951
    %v965 = vmul.f32 %v855, %v951
    %v966 = vmul.f32 %v856, %v951
    %v967 = vmul.f32 %v857, %v951
    %v968 = vperm.slane %v950, 0
    %v969 = vadd.f32 %v952, %v968
    %v970 = vadd.f32 %v953, %v968
    %v971 = vadd.f32 %v954, %v968
    %v972 = vadd.f32 %v955, %v968
    %v973 = vadd.f32 %v956, %v968
    %v974 = vadd.f32 %v957, %v968
    %v975 = vadd.f32 %v958, %v968
    %v976 = vadd.f32 %v959, %v968
    %v977 = vadd.f32 %v960, %v968
    %v978 = vadd.f32 %v961, %v968
    %v979 = vadd.f32 %v962, %v968
    %v980 = vadd.f32 %v963, %v968
    %v981 = vadd.f32 %v964, %v968
    %v982 = vadd.f32 %v965, %v968
    %v983 = vadd.f32 %v966, %v968
    %v984 = vadd.f32 %v967, %v968
    %v985 = vmax.f32 %v969, 0.0
    %v986 = vmax.f32 %v970, 0.0
    %v987 = vmax.f32 %v971, 0.0
    %v988 = vmax.f32 %v972, 0.0
    %v989 = vmax.f32 %v973, 0.0
    %v990 = vmax.f32 %v974, 0.0
    %v991 = vmax.f32 %v975, 0.0
    %v992 = vmax.f32 %v976, 0.0
    %v993 = vmax.f32 %v977, 0.0
    %v994 = vmax.f32 %v978, 0.0
    %v995 = vmax.f32 %v979, 0.0
    %v996 = vmax.f32 %v980, 0.0
    %v997 = vmax.f32 %v981, 0.0
    %v998 = vmax.f32 %v982, 0.0
    %v999 = vmax.f32 %v983, 0.0
    %v1000 = vmax.f32 %v984, 0.0
    %v1001 = vld [vmem:[#allocation2] sm:$0xff]
    %v1002 = vld [vmem:[#allocation2 + $0x8] sm:$0xff]
    %v1003 = vld [vmem:[#allocation2 + $0x10] sm:$0xff]
    %v1004 = vld [vmem:[#allocation2 + $0x18] sm:$0xff]
    %v1005 = vld [vmem:[#allocation2 + $0x20] sm:$0xff]
    %v1006 = vld [vmem:[#allocation2 + $0x28] sm:$0xff]
    %v1007 = vld [vmem:[#allocation2 + $0x30] sm:$0xff]
    %v1008 = vld [vmem:[#allocation2 + $0x38] sm:$0xff]
    %v1009 = vld [vmem:[#allocation2 + $0x40] sm:$0xff]
    %v1010 = vld [vmem:[#allocation2 + $0x48] sm:$0xff]
    %v1011 = vld [vmem:[#allocation2 + $0x50] sm:$0xff]
    %v1012 = vld [vmem:[#allocation2 + $0x58] sm:$0xff]
    %v1013 = vld [vmem:[#allocation2 + $0x60] sm:$0xff]
    %v1014 = vld [vmem:[#allocation2 + $0x68] sm:$0xff]
    %v1015 = vld [vmem:[#allocation2 + $0x70] sm:$0xff]
    %v1016 = vld [vmem:[#allocation2 + $0x78] sm:$0xff]
    %v1017 = vadd.f32 %v985, %v1001
    %v1018 = vadd.f32 %v986, %v1002
    %v1019 = vadd.f32 %v987, %v1003
    %v1020 = vadd.f32 %v988, %v1004
    %v1021 = vadd.f32 %v989, %v1005
    %v1022 = vadd.f32 %v990, %v1006
    %v1023 = vadd.f32 %v991, %v1007
    %v1024 = vadd.f32 %v992, %v1008
    %v1025 = vadd.f32 %v993, %v1009
    %v1026 = vadd.f32 %v994, %v1010
    %v1027 = vadd.f32 %v995, %v1011
    %v1028 = vadd.f32 %v996, %v1012
    %v1029 = vadd.f32 %v997, %v1013
    %v1030 = vadd.f32 %v998, %v1014
    %v1031 = vadd.f32 %v999, %v1015
    %v1032 = vadd.f32 %v1000, %v1016
    %1033 = vst [vmem:[#allocation2] sm:$0xff] %v1017
    %1034 = vst [vmem:[#allocation2 + $0x8] sm:$0xff] %v1018
    %1035 = vst [vmem:[#allocation2 + $0x10] sm:$0xff] %v1019
    %1036 = vst [vmem:[#allocation2 + $0x18] sm:$0xff] %v1020
    %1037 = vst [vmem:[#allocation2 + $0x20] sm:$0xff] %v1021
    %1038 = vst [vmem:[#allocation2 + $0x28] sm:$0xff] %v1022
    %1039 = vst [vmem:[#allocation2 + $0x30] sm:$0xff] %v1023
    %1040 = vst [vmem:[#allocation2 + $0x38] sm:$0xff] %v1024
    %1041 = vst [vmem:[#allocation2 + $0x40] sm:$0xff] %v1025
    %1042 = vst [vmem:[#allocation2 + $0x48] sm:$0xff] %v1026
    %1043 = vst [vmem:[#allocation2 + $0x50] sm:$0xff] %v1027
    %1044 = vst [vmem:[#allocation2 + $0x58] sm:$0xff] %v1028
    %1045 = vst [vmem:[#allocation2 + $0x60] sm:$0xff] %v1029
    %1046 = vst [vmem:[#allocation2 + $0x68] sm:$0xff] %v1030
    %1047 = vst [vmem:[#allocation2 + $0x70] sm:$0xff] %v1031
    %1048 = vst [vmem:[#allocation2 + $0x78] sm:$0xff] %v1032
    %s1049 = scalar_lea.vmem [#allocation13], 64
    %v1050 = vld [vmem:[%s1049] sm:$0xf]
    %v1051 = vld [vmem:[%s1049 + $0x4] sm:$0xf]
    %v1052 = vld [vmem:[%s1049 + $0x8] sm:$0xf]
    %v1053 = vld [vmem:[%s1049 + $0xc] sm:$0xf]
    %v1054 = vld [vmem:[%s1049 + $0x10] sm:$0xf]
    %v1055 = vld [vmem:[%s1049 + $0x14] sm:$0xf]
    %v1056 = vld [vmem:[%s1049 + $0x18] sm:$0xf]
    %v1057 = vld [vmem:[%s1049 + $0x1c] sm:$0xf]
    %v1058 = vld [vmem:[%s1049 + $0x20] sm:$0xf]
    %v1059 = vld [vmem:[%s1049 + $0x24] sm:$0xf]
    %v1060 = vld [vmem:[%s1049 + $0x28] sm:$0xf]
    %v1061 = vld [vmem:[%s1049 + $0x2c] sm:$0xf]
    %v1062 = vld [vmem:[%s1049 + $0x30] sm:$0xf]
    %v1063 = vld [vmem:[%s1049 + $0x34] sm:$0xf]
    %v1064 = vld [vmem:[%s1049 + $0x38] sm:$0xf]
    %v1065 = vld [vmem:[%s1049 + $0x3c] sm:$0xf]
    %v1066 = vld [vmem:[%s5 + $0x1] sm:$0x1]
    %v1067 = vld [vmem:[#allocation14 + $0x1] sm:$0x1]
    %v1068 = vld [vmem:[#allocation16 + $0x1] sm:$0x1]
    %v1069 = vld [vmem:[#allocation2] sm:$0xff]
    %v1070 = vld [vmem:[#allocation2 + $0x8] sm:$0xff]
    %v1071 = vld [vmem:[#allocation2 + $0x10] sm:$0xff]
    %v1072 = vld [vmem:[#allocation2 + $0x18] sm:$0xff]
    %v1073 = vld [vmem:[#allocation2 + $0x20] sm:$0xff]
    %v1074 = vld [vmem:[#allocation2 + $0x28] sm:$0xff]
    %v1075 = vld [vmem:[#allocation2 + $0x30] sm:$0xff]
    %v1076 = vld [vmem:[#allocation2 + $0x38] sm:$0xff]
    %v1077 = vld [vmem:[#allocation2 + $0x40] sm:$0xff]
    %v1078 = vld [vmem:[#allocation2 + $0x48] sm:$0xff]
    %v1079 = vld [vmem:[#allocation2 + $0x50] sm:$0xff]
    %v1080 = vld [vmem:[#allocation2 + $0x58] sm:$0xff]
    %v1081 = vld [vmem:[#allocation2 + $0x60] sm:$0xff]
    %v1082 = vld [vmem:[#allocation2 + $0x68] sm:$0xff]
    %v1083 = vld [vmem:[#allocation2 + $0x70] sm:$0xff]
    %v1084 = vld [vmem:[#allocation2 + $0x78] sm:$0xff]
    %v1085 = vpack.c.bf16 %v1070, %v1069
    %v1086 = vpack.c.bf16 %v1072, %v1071
    %v1087 = vpack.c.bf16 %v1074, %v1073
    %v1088 = vpack.c.bf16 %v1076, %v1075
    %v1089 = vpack.c.bf16 %v1078, %v1077
    %v1090 = vpack.c.bf16 %v1080, %v1079
    %v1091 = vpack.c.bf16 %v1082, %v1081
    %v1092 = vpack.c.bf16 %v1084, %v1083
    %v1109 = vunpack.c.l.b16 %v1050
    %v1110 = vunpack.c.l.b16 %v1051
    %v1111 = vunpack.c.l.b16 %v1052
    %v1112 = vunpack.c.l.b16 %v1053
    %v1113 = vunpack.c.l.b16 %v1054
    %v1114 = vunpack.c.l.b16 %v1055
    %v1115 = vunpack.c.l.b16 %v1056
    %v1116 = vunpack.c.l.b16 %v1057
    %v1117 = vunpack.c.l.b16 %v1058
    %v1118 = vunpack.c.l.b16 %v1059
    %v1119 = vunpack.c.l.b16 %v1060
    %v1120 = vunpack.c.l.b16 %v1061
    %v1121 = vunpack.c.l.b16 %v1062
    %v1122 = vunpack.c.l.b16 %v1063
    %v1123 = vunpack.c.l.b16 %v1064
    %v1124 = vunpack.c.l.b16 %v1065
    %v1125 = vpack.c.b16 %v1110, %v1109
    %v1126 = vpack.c.b16 %v1112, %v1111
    %v1127 = vpack.c.b16 %v1114, %v1113
    %v1128 = vpack.c.b16 %v1116, %v1115
    %v1129 = vpack.c.b16 %v1118, %v1117
    %v1130 = vpack.c.b16 %v1120, %v1119
    %v1131 = vpack.c.b16 %v1122, %v1121
    %v1132 = vpack.c.b16 %v1124, %v1123
    %1141 = vmatpush.bf16.msra.mxu0 %v1132
    %1142 = vmatpush.bf16.msra.mxu0 %v1131
    %1143 = vmatpush.bf16.msra.mxu0 %v1130
    %1144 = vmatpush.bf16.msra.mxu0 %v1129
    %1145 = vmatpush.bf16.msra.mxu0 %v1128
    %1146 = vmatpush.bf16.msra.mxu0 %v1127
    %1147 = vmatpush.bf16.msra.mxu0 %v1126
    %1148 = vmatpush.bf16.msra.mxu0 %v1125
    %1149 = vmatmul.bf16.gmra.mxu0 %v1085
    %v1150 = vpop.f32.mrf.mxu0
    %v1151 = vadd.f32 0.0, %v1150
    %v1152 = vpop.f32.mrf.mxu0
    %v1153 = vadd.f32 0.0, %v1152
    %1154 = vmatmul.bf16.gmra.mxu0 %v1086
    %v1155 = vpop.f32.mrf.mxu0
    %v1156 = vadd.f32 0.0, %v1155
    %v1157 = vpop.f32.mrf.mxu0
    %v1158 = vadd.f32 0.0, %v1157
    %1159 = vmatmul.bf16.gmra.mxu0 %v1087
    %v1160 = vpop.f32.mrf.mxu0
    %v1161 = vadd.f32 0.0, %v1160
    %v1162 = vpop.f32.mrf.mxu0
    %v1163 = vadd.f32 0.0, %v1162
    %1164 = vmatmul.bf16.gmra.mxu0 %v1088
    %v1165 = vpop.f32.mrf.mxu0
    %v1166 = vadd.f32 0.0, %v1165
    %v1167 = vpop.f32.mrf.mxu0
    %v1168 = vadd.f32 0.0, %v1167
    %1169 = vmatmul.bf16.gmra.mxu0 %v1089
    %v1170 = vpop.f32.mrf.mxu0
    %v1171 = vadd.f32 0.0, %v1170
    %v1172 = vpop.f32.mrf.mxu0
    %v1173 = vadd.f32 0.0, %v1172
    %1174 = vmatmul.bf16.gmra.mxu0 %v1090
    %v1175 = vpop.f32.mrf.mxu0
    %v1176 = vadd.f32 0.0, %v1175
    %v1177 = vpop.f32.mrf.mxu0
    %v1178 = vadd.f32 0.0, %v1177
    %1179 = vmatmul.bf16.gmra.mxu0 %v1091
    %v1180 = vpop.f32.mrf.mxu0
    %v1181 = vadd.f32 0.0, %v1180
    %v1182 = vpop.f32.mrf.mxu0
    %v1183 = vadd.f32 0.0, %v1182
    %1184 = vmatmul.bf16.gmra.mxu0 %v1092
    %v1185 = vpop.f32.mrf.mxu0
    %v1186 = vadd.f32 0.0, %v1185
    %v1187 = vpop.f32.mrf.mxu0
    %v1188 = vadd.f32 0.0, %v1187
    %1189 = vdwg.mxu0
    %v1190 = vpack.c.bf16 %v1151, %v1151
    %v1191 = vpack.c.bf16 %v1153, %v1153
    %v1192 = vpack.c.bf16 %v1156, %v1156
    %v1193 = vpack.c.bf16 %v1158, %v1158
    %v1194 = vpack.c.bf16 %v1161, %v1161
    %v1195 = vpack.c.bf16 %v1163, %v1163
    %v1196 = vpack.c.bf16 %v1166, %v1166
    %v1197 = vpack.c.bf16 %v1168, %v1168
    %v1198 = vpack.c.bf16 %v1171, %v1171
    %v1199 = vpack.c.bf16 %v1173, %v1173
    %v1200 = vpack.c.bf16 %v1176, %v1176
    %v1201 = vpack.c.bf16 %v1178, %v1178
    %v1202 = vpack.c.bf16 %v1181, %v1181
    %v1203 = vpack.c.bf16 %v1183, %v1183
    %v1204 = vpack.c.bf16 %v1186, %v1186
    %v1205 = vpack.c.bf16 %v1188, %v1188
    %1206 = vst [vmem:[#allocation3] sm:$0xf] %v1190
    %1207 = vst [vmem:[#allocation3 + $0x4] sm:$0xf] %v1191
    %1208 = vst [vmem:[#allocation3 + $0x8] sm:$0xf] %v1192
    %1209 = vst [vmem:[#allocation3 + $0xc] sm:$0xf] %v1193
    %1210 = vst [vmem:[#allocation3 + $0x10] sm:$0xf] %v1194
    %1211 = vst [vmem:[#allocation3 + $0x14] sm:$0xf] %v1195
    %1212 = vst [vmem:[#allocation3 + $0x18] sm:$0xf] %v1196
    %1213 = vst [vmem:[#allocation3 + $0x1c] sm:$0xf] %v1197
    %1214 = vst [vmem:[#allocation3 + $0x20] sm:$0xf] %v1198
    %1215 = vst [vmem:[#allocation3 + $0x24] sm:$0xf] %v1199
    %1216 = vst [vmem:[#allocation3 + $0x28] sm:$0xf] %v1200
    %1217 = vst [vmem:[#allocation3 + $0x2c] sm:$0xf] %v1201
    %1218 = vst [vmem:[#allocation3 + $0x30] sm:$0xf] %v1202
    %1219 = vst [vmem:[#allocation3 + $0x34] sm:$0xf] %v1203
    %1220 = vst [vmem:[#allocation3 + $0x38] sm:$0xf] %v1204
    %1221 = vst [vmem:[#allocation3 + $0x3c] sm:$0xf] %v1205
    %v1222 = vld [vmem:[#allocation22] sm:$0xf]
    %v1223 = vld [vmem:[#allocation22 + $0x4] sm:$0xf]
    %v1224 = vld [vmem:[#allocation22 + $0x8] sm:$0xf]
    %v1225 = vld [vmem:[#allocation22 + $0xc] sm:$0xf]
    %v1226 = vld [vmem:[#allocation22 + $0x10] sm:$0xf]
    %v1227 = vld [vmem:[#allocation22 + $0x14] sm:$0xf]
    %v1228 = vld [vmem:[#allocation22 + $0x18] sm:$0xf]
    %v1229 = vld [vmem:[#allocation22 + $0x1c] sm:$0xf]
    %v1230 = vld [vmem:[#allocation22 + $0x20] sm:$0xf]
    %v1231 = vld [vmem:[#allocation22 + $0x24] sm:$0xf]
    %v1232 = vld [vmem:[#allocation22 + $0x28] sm:$0xf]
    %v1233 = vld [vmem:[#allocation22 + $0x2c] sm:$0xf]
    %v1234 = vld [vmem:[#allocation22 + $0x30] sm:$0xf]
    %v1235 = vld [vmem:[#allocation22 + $0x34] sm:$0xf]
    %v1236 = vld [vmem:[#allocation22 + $0x38] sm:$0xf]
    %v1237 = vld [vmem:[#allocation22 + $0x3c] sm:$0xf]
    %v1238 = vld [vmem:[#allocation3] sm:$0xf]
    %v1239 = vld [vmem:[#allocation3 + $0x4] sm:$0xf]
    %v1240 = vld [vmem:[#allocation3 + $0x8] sm:$0xf]
    %v1241 = vld [vmem:[#allocation3 + $0xc] sm:$0xf]
    %v1242 = vld [vmem:[#allocation3 + $0x10] sm:$0xf]
    %v1243 = vld [vmem:[#allocation3 + $0x14] sm:$0xf]
    %v1244 = vld [vmem:[#allocation3 + $0x18] sm:$0xf]
    %v1245 = vld [vmem:[#allocation3 + $0x1c] sm:$0xf]
    %v1246 = vld [vmem:[#allocation3 + $0x20] sm:$0xf]
    %v1247 = vld [vmem:[#allocation3 + $0x24] sm:$0xf]
    %v1248 = vld [vmem:[#allocation3 + $0x28] sm:$0xf]
    %v1249 = vld [vmem:[#allocation3 + $0x2c] sm:$0xf]
    %v1250 = vld [vmem:[#allocation3 + $0x30] sm:$0xf]
    %v1251 = vld [vmem:[#allocation3 + $0x34] sm:$0xf]
    %v1252 = vld [vmem:[#allocation3 + $0x38] sm:$0xf]
    %v1253 = vld [vmem:[#allocation3 + $0x3c] sm:$0xf]
    %v1254 = vperm.slane %v1066, 0
    %v1271 = vunpack.c.l.b16 %v1222
    %v1272 = vunpack.c.l.b16 %v1223
    %v1273 = vunpack.c.l.b16 %v1224
    %v1274 = vunpack.c.l.b16 %v1225
    %v1275 = vunpack.c.l.b16 %v1226
    %v1276 = vunpack.c.l.b16 %v1227
    %v1277 = vunpack.c.l.b16 %v1228
    %v1278 = vunpack.c.l.b16 %v1229
    %v1279 = vunpack.c.l.b16 %v1230
    %v1280 = vunpack.c.l.b16 %v1231
    %v1281 = vunpack.c.l.b16 %v1232
    %v1282 = vunpack.c.l.b16 %v1233
    %v1283 = vunpack.c.l.b16 %v1234
    %v1284 = vunpack.c.l.b16 %v1235
    %v1285 = vunpack.c.l.b16 %v1236
    %v1286 = vunpack.c.l.b16 %v1237
    %v1287 = vpack.c.b16 %v1272, %v1271
    %v1288 = vpack.c.b16 %v1274, %v1273
    %v1289 = vpack.c.b16 %v1276, %v1275
    %v1290 = vpack.c.b16 %v1278, %v1277
    %v1291 = vpack.c.b16 %v1280, %v1279
    %v1292 = vpack.c.b16 %v1282, %v1281
    %v1293 = vpack.c.b16 %v1284, %v1283
    %v1294 = vpack.c.b16 %v1286, %v1285
    %v1319 = vunpack.c.l.b16 %v1238
    %v1320 = vunpack.c.l.b16 %v1239
    %v1321 = vunpack.c.l.b16 %v1240
    %v1322 = vunpack.c.l.b16 %v1241
    %v1323 = vunpack.c.l.b16 %v1242
    %v1324 = vunpack.c.l.b16 %v1243
    %v1325 = vunpack.c.l.b16 %v1244
    %v1326 = vunpack.c.l.b16 %v1245
    %v1327 = vunpack.c.l.b16 %v1246
    %v1328 = vunpack.c.l.b16 %v1247
    %v1329 = vunpack.c.l.b16 %v1248
    %v1330 = vunpack.c.l.b16 %v1249
    %v1331 = vunpack.c.l.b16 %v1250
    %v1332 = vunpack.c.l.b16 %v1251
    %v1333 = vunpack.c.l.b16 %v1252
    %v1334 = vunpack.c.l.b16 %v1253
    %v1335 = vpack.c.b16 %v1320, %v1319
    %v1336 = vpack.c.b16 %v1322, %v1321
    %v1337 = vpack.c.b16 %v1324, %v1323
    %v1338 = vpack.c.b16 %v1326, %v1325
    %v1339 = vpack.c.b16 %v1328, %v1327
    %v1340 = vpack.c.b16 %v1330, %v1329
    %v1341 = vpack.c.b16 %v1332, %v1331
    %v1342 = vpack.c.b16 %v1334, %v1333
    %1351 = vmatpush.bf16.msra.mxu0 %v1342
    %1352 = vmatpush.bf16.msra.mxu0 %v1341
    %1353 = vmatpush.bf16.msra.mxu0 %v1340
    %1354 = vmatpush.bf16.msra.mxu0 %v1339
    %1355 = vmatpush.bf16.msra.mxu0 %v1338
    %1356 = vmatpush.bf16.msra.mxu0 %v1337
    %1357 = vmatpush.bf16.msra.mxu0 %v1336
    %1358 = vmatpush.bf16.msra.mxu0 %v1335
    %1359 = vmatmul.bf16.gmra.mxu0 %v1287
    %v1360 = vpop.f32.mrf.mxu0
    %v1361 = vadd.f32 %v1254, %v1360
    %v1362 = vpop.f32.mrf.mxu0
    %v1363 = vadd.f32 %v1254, %v1362
    %1364 = vmatmul.bf16.gmra.mxu0 %v1288
    %v1365 = vpop.f32.mrf.mxu0
    %v1366 = vadd.f32 %v1254, %v1365
    %v1367 = vpop.f32.mrf.mxu0
    %v1368 = vadd.f32 %v1254, %v1367
    %1369 = vmatmul.bf16.gmra.mxu0 %v1289
    %v1370 = vpop.f32.mrf.mxu0
    %v1371 = vadd.f32 %v1254, %v1370
    %v1372 = vpop.f32.mrf.mxu0
    %v1373 = vadd.f32 %v1254, %v1372
    %1374 = vmatmul.bf16.gmra.mxu0 %v1290
    %v1375 = vpop.f32.mrf.mxu0
    %v1376 = vadd.f32 %v1254, %v1375
    %v1377 = vpop.f32.mrf.mxu0
    %v1378 = vadd.f32 %v1254, %v1377
    %1379 = vmatmul.bf16.gmra.mxu0 %v1291
    %v1380 = vpop.f32.mrf.mxu0
    %v1381 = vadd.f32 %v1254, %v1380
    %v1382 = vpop.f32.mrf.mxu0
    %v1383 = vadd.f32 %v1254, %v1382
    %1384 = vmatmul.bf16.gmra.mxu0 %v1292
    %v1385 = vpop.f32.mrf.mxu0
    %v1386 = vadd.f32 %v1254, %v1385
    %v1387 = vpop.f32.mrf.mxu0
    %v1388 = vadd.f32 %v1254, %v1387
    %1389 = vmatmul.bf16.gmra.mxu0 %v1293
    %v1390 = vpop.f32.mrf.mxu0
    %v1391 = vadd.f32 %v1254, %v1390
    %v1392 = vpop.f32.mrf.mxu0
    %v1393 = vadd.f32 %v1254, %v1392
    %1394 = vmatmul.bf16.gmra.mxu0 %v1294
    %v1395 = vpop.f32.mrf.mxu0
    %v1396 = vadd.f32 %v1254, %v1395
    %v1397 = vpop.f32.mrf.mxu0
    %v1398 = vadd.f32 %v1254, %v1397
    %1399 = vdwg.mxu0
    %1400 = vst [vmem:[#allocation4] sm:$0xff] %v1361
    %1401 = vst [vmem:[#allocation4 + $0x8] sm:$0xff] %v1363
    %1402 = vst [vmem:[#allocation4 + $0x10] sm:$0xff] %v1366
    %1403 = vst [vmem:[#allocation4 + $0x18] sm:$0xff] %v1368
    %1404 = vst [vmem:[#allocation4 + $0x20] sm:$0xff] %v1371
    %1405 = vst [vmem:[#allocation4 + $0x28] sm:$0xff] %v1373
    %1406 = vst [vmem:[#allocation4 + $0x30] sm:$0xff] %v1376
    %1407 = vst [vmem:[#allocation4 + $0x38] sm:$0xff] %v1378
    %1408 = vst [vmem:[#allocation4 + $0x40] sm:$0xff] %v1381
    %1409 = vst [vmem:[#allocation4 + $0x48] sm:$0xff] %v1383
    %1410 = vst [vmem:[#allocation4 + $0x50] sm:$0xff] %v1386
    %1411 = vst [vmem:[#allocation4 + $0x58] sm:$0xff] %v1388
    %1412 = vst [vmem:[#allocation4 + $0x60] sm:$0xff] %v1391
    %1413 = vst [vmem:[#allocation4 + $0x68] sm:$0xff] %v1393
    %1414 = vst [vmem:[#allocation4 + $0x70] sm:$0xff] %v1396
    %1415 = vst [vmem:[#allocation4 + $0x78] sm:$0xff] %v1398
    %v1416 = vld [vmem:[#allocation4] sm:$0xff]
    %v1417 = vld [vmem:[#allocation4 + $0x8] sm:$0xff]
    %v1418 = vld [vmem:[#allocation4 + $0x10] sm:$0xff]
    %v1419 = vld [vmem:[#allocation4 + $0x18] sm:$0xff]
    %v1420 = vld [vmem:[#allocation4 + $0x20] sm:$0xff]
    %v1421 = vld [vmem:[#allocation4 + $0x28] sm:$0xff]
    %v1422 = vld [vmem:[#allocation4 + $0x30] sm:$0xff]
    %v1423 = vld [vmem:[#allocation4 + $0x38] sm:$0xff]
    %v1424 = vld [vmem:[#allocation4 + $0x40] sm:$0xff]
    %v1425 = vld [vmem:[#allocation4 + $0x48] sm:$0xff]
    %v1426 = vld [vmem:[#allocation4 + $0x50] sm:$0xff]
    %v1427 = vld [vmem:[#allocation4 + $0x58] sm:$0xff]
    %v1428 = vld [vmem:[#allocation4 + $0x60] sm:$0xff]
    %v1429 = vld [vmem:[#allocation4 + $0x68] sm:$0xff]
    %v1430 = vld [vmem:[#allocation4 + $0x70] sm:$0xff]
    %v1431 = vld [vmem:[#allocation4 + $0x78] sm:$0xff]
    %v1432 = vmul.f32 %v1416, %v460
    %v1433 = vmul.f32 %v1417, %v461
    %v1434 = vmul.f32 %v1418, %v462
    %v1435 = vmul.f32 %v1419, %v463
    %v1436 = vmul.f32 %v1420, %v464
    %v1437 = vmul.f32 %v1421, %v465
    %v1438 = vmul.f32 %v1422, %v466
    %v1439 = vmul.f32 %v1423, %v467
    %v1440 = vmul.f32 %v1424, %v468
    %v1441 = vmul.f32 %v1425, %v469
    %v1442 = vmul.f32 %v1426, %v470
    %v1443 = vmul.f32 %v1427, %v471
    %v1444 = vmul.f32 %v1428, %v472
    %v1445 = vmul.f32 %v1429, %v473
    %v1446 = vmul.f32 %v1430, %v474
    %v1447 = vmul.f32 %v1431, %v475
    %v1448 = vadd.f32 %v1432, %v1433
    %v1449 = vadd.f32 %v1448, %v1434
    %v1450 = vadd.f32 %v1449, %v1435
    %v1451 = vadd.f32 %v1450, %v1436
    %v1452 = vadd.f32 %v1451, %v1437
    %v1453 = vadd.f32 %v1452, %v1438
    %v1454 = vadd.f32 %v1453, %v1439
    %v1455 = vadd.f32 %v1454, %v1440
    %v1456 = vadd.f32 %v1455, %v1441
    %v1457 = vadd.f32 %v1456, %v1442
    %v1458 = vadd.f32 %v1457, %v1443
    %v1459 = vadd.f32 %v1458, %v1444
    %v1460 = vadd.f32 %v1459, %v1445
    %v1461 = vadd.f32 %v1460, %v1446
    %v1462 = vadd.f32 %v1461, %v1447
    %v1463 = vrot.slane %v1462, 4
    %v1464 = vadd.f32 %v1462, %v1463
    %v1465 = vrot.slane %v1464, 2
    %v1466 = vadd.f32 %v1464, %v1465
    %v1467 = vrot.slane %v1466, 1
    %v1468 = vadd.f32 %v1466, %v1467
    %v1469 = vmul.f32 %v1432, %v1416
    %v1470 = vmul.f32 %v1433, %v1417
    %v1471 = vmul.f32 %v1434, %v1418
    %v1472 = vmul.f32 %v1435, %v1419
    %v1473 = vmul.f32 %v1436, %v1420
    %v1474 = vmul.f32 %v1437, %v1421
    %v1475 = vmul.f32 %v1438, %v1422
    %v1476 = vmul.f32 %v1439, %v1423
    %v1477 = vmul.f32 %v1440, %v1424
    %v1478 = vmul.f32 %v1441, %v1425
    %v1479 = vmul.f32 %v1442, %v1426
    %v1480 = vmul.f32 %v1443, %v1427
    %v1481 = vmul.f32 %v1444, %v1428
    %v1482 = vmul.f32 %v1445, %v1429
    %v1483 = vmul.f32 %v1446, %v1430
    %v1484 = vmul.f32 %v1447, %v1431
    %v1485 = vadd.f32 %v1469, %v1470
    %v1486 = vadd.f32 %v1485, %v1471
    %v1487 = vadd.f32 %v1486, %v1472
    %v1488 = vadd.f32 %v1487, %v1473
    %v1489 = vadd.f32 %v1488, %v1474
    %v1490 = vadd.f32 %v1489, %v1475
    %v1491 = vadd.f32 %v1490, %v1476
    %v1492 = vadd.f32 %v1491, %v1477
    %v1493 = vadd.f32 %v1492, %v1478
    %v1494 = vadd.f32 %v1493, %v1479
    %v1495 = vadd.f32 %v1494, %v1480
    %v1496 = vadd.f32 %v1495, %v1481
    %v1497 = vadd.f32 %v1496, %v1482
    %v1498 = vadd.f32 %v1497, %v1483
    %v1499 = vadd.f32 %v1498, %v1484
    %v1500 = vrot.slane %v1499, 4
    %v1501 = vadd.f32 %v1499, %v1500
    %v1502 = vrot.slane %v1501, 2
    %v1503 = vadd.f32 %v1501, %v1502
    %v1504 = vrot.slane %v1503, 1
    %v1505 = vadd.f32 %v1503, %v1504
    %v1506 = vmul.f32 %v1468, 0.03125
    %v1507 = vmul.f32 %v1505, 0.03125
    %v1508 = vmul.f32 %v1506, %v1506
    %v1509 = vsub.f32 %v1507, %v1508
    %v1510 = vmax.f32 %v1509, 0.0
    %v1511 = vadd.f32 %v1510, 1e-05
    %v1512 = vrsqrt.pop %v1511
    %v1513 = vmul.f32 %v1512, %v1511
    %v1514 = vmul.f32 %v1513, %v1512
    %v1515 = vmul.f32 0.5, %v1514
    %v1516 = vsub.f32 1.5, %v1515
    %v1517 = vmul.f32 %v1512, %v1516
    %vm1518 = vweird.f32 %v1511
    %vm1519 = vweird.f32 %v1512
    %vm1520 = vmor %vm1518, %vm1519
    %v1521 = vsel %vm1520, %v1512, %v1517
    %v1522 = vmul.f32 %v1067, %v1521
    %v1523 = vmul.f32 %v1506, %v1522
    %v1524 = vsub.f32 %v1068, %v1523
    %v1525 = vperm.slane %v1522, 0
    %v1526 = vmul.f32 %v1416, %v1525
    %v1527 = vmul.f32 %v1417, %v1525
    %v1528 = vmul.f32 %v1418, %v1525
    %v1529 = vmul.f32 %v1419, %v1525
    %v1530 = vmul.f32 %v1420, %v1525
    %v1531 = vmul.f32 %v1421, %v1525
    %v1532 = vmul.f32 %v1422, %v1525
    %v1533 = vmul.f32 %v1423, %v1525
    %v1534 = vmul.f32 %v1424, %v1525
    %v1535 = vmul.f32 %v1425, %v1525
    %v1536 = vmul.f32 %v1426, %v1525
    %v1537 = vmul.f32 %v1427, %v1525
    %v1538 = vmul.f32 %v1428, %v1525
    %v1539 = vmul.f32 %v1429, %v1525
    %v1540 = vmul.f32 %v1430, %v1525
    %v1541 = vmul.f32 %v1431, %v1525
    %v1542 = vperm.slane %v1524, 0
    %v1543 = vadd.f32 %v1526, %v1542
    %v1544 = vadd.f32 %v1527, %v1542
    %v1545 = vadd.f32 %v1528, %v1542
    %v1546 = vadd.f32 %v1529, %v1542
    %v1547 = vadd.f32 %v1530, %v1542
    %v1548 = vadd.f32 %v1531, %v1542
    %v1549 = vadd.f32 %v1532, %v1542
    %v1550 = vadd.f32 %v1533, %v1542
    %v1551 = vadd.f32 %v1534, %v1542
    %v1552 = vadd.f32 %v1535, %v1542
    %v1553 = vadd.f32 %v1536, %v1542
    %v1554 = vadd.f32 %v1537, %v1542
    %v1555 = vadd.f32 %v1538, %v1542
    %v1556 = vadd.f32 %v1539, %v1542
    %v1557 = vadd.f32 %v1540, %v1542
    %v1558 = vadd.f32 %v1541, %v1542
    %v1559 = vmax.f32 %v1543, 0.0
    %v1560 = vmax.f32 %v1544, 0.0
    %v1561 = vmax.f32 %v1545, 0.0
    %v1562 = vmax.f32 %v1546, 0.0
    %v1563 = vmax.f32 %v1547, 0.0
    %v1564 = vmax.f32 %v1548, 0.0
    %v1565 = vmax.f32 %v1549, 0.0
    %v1566 = vmax.f32 %v1550, 0.0
    %v1567 = vmax.f32 %v1551, 0.0
    %v1568 = vmax.f32 %v1552, 0.0
    %v1569 = vmax.f32 %v1553, 0.0
    %v1570 = vmax.f32 %v1554, 0.0
    %v1571 = vmax.f32 %v1555, 0.0
    %v1572 = vmax.f32 %v1556, 0.0
    %v1573 = vmax.f32 %v1557, 0.0
    %v1574 = vmax.f32 %v1558, 0.0
    %v1575 = vld [vmem:[#allocation2] sm:$0xff]
    %v1576 = vld [vmem:[#allocation2 + $0x8] sm:$0xff]
    %v1577 = vld [vmem:[#allocation2 + $0x10] sm:$0xff]
    %v1578 = vld [vmem:[#allocation2 + $0x18] sm:$0xff]
    %v1579 = vld [vmem:[#allocation2 + $0x20] sm:$0xff]
    %v1580 = vld [vmem:[#allocation2 + $0x28] sm:$0xff]
    %v1581 = vld [vmem:[#allocation2 + $0x30] sm:$0xff]
    %v1582 = vld [vmem:[#allocation2 + $0x38] sm:$0xff]
    %v1583 = vld [vmem:[#allocation2 + $0x40] sm:$0xff]
    %v1584 = vld [vmem:[#allocation2 + $0x48] sm:$0xff]
    %v1585 = vld [vmem:[#allocation2 + $0x50] sm:$0xff]
    %v1586 = vld [vmem:[#allocation2 + $0x58] sm:$0xff]
    %v1587 = vld [vmem:[#allocation2 + $0x60] sm:$0xff]
    %v1588 = vld [vmem:[#allocation2 + $0x68] sm:$0xff]
    %v1589 = vld [vmem:[#allocation2 + $0x70] sm:$0xff]
    %v1590 = vld [vmem:[#allocation2 + $0x78] sm:$0xff]
    %v1591 = vadd.f32 %v1559, %v1575
    %v1592 = vadd.f32 %v1560, %v1576
    %v1593 = vadd.f32 %v1561, %v1577
    %v1594 = vadd.f32 %v1562, %v1578
    %v1595 = vadd.f32 %v1563, %v1579
    %v1596 = vadd.f32 %v1564, %v1580
    %v1597 = vadd.f32 %v1565, %v1581
    %v1598 = vadd.f32 %v1566, %v1582
    %v1599 = vadd.f32 %v1567, %v1583
    %v1600 = vadd.f32 %v1568, %v1584
    %v1601 = vadd.f32 %v1569, %v1585
    %v1602 = vadd.f32 %v1570, %v1586
    %v1603 = vadd.f32 %v1571, %v1587
    %v1604 = vadd.f32 %v1572, %v1588
    %v1605 = vadd.f32 %v1573, %v1589
    %v1606 = vadd.f32 %v1574, %v1590
    %1607 = vst [vmem:[#allocation2] sm:$0xff] %v1591
    %1608 = vst [vmem:[#allocation2 + $0x8] sm:$0xff] %v1592
    %1609 = vst [vmem:[#allocation2 + $0x10] sm:$0xff] %v1593
    %1610 = vst [vmem:[#allocation2 + $0x18] sm:$0xff] %v1594
    %1611 = vst [vmem:[#allocation2 + $0x20] sm:$0xff] %v1595
    %1612 = vst [vmem:[#allocation2 + $0x28] sm:$0xff] %v1596
    %1613 = vst [vmem:[#allocation2 + $0x30] sm:$0xff] %v1597
    %1614 = vst [vmem:[#allocation2 + $0x38] sm:$0xff] %v1598
    %1615 = vst [vmem:[#allocation2 + $0x40] sm:$0xff] %v1599
    %1616 = vst [vmem:[#allocation2 + $0x48] sm:$0xff] %v1600
    %1617 = vst [vmem:[#allocation2 + $0x50] sm:$0xff] %v1601
    %1618 = vst [vmem:[#allocation2 + $0x58] sm:$0xff] %v1602
    %1619 = vst [vmem:[#allocation2 + $0x60] sm:$0xff] %v1603
    %1620 = vst [vmem:[#allocation2 + $0x68] sm:$0xff] %v1604
    %1621 = vst [vmem:[#allocation2 + $0x70] sm:$0xff] %v1605
    %1622 = vst [vmem:[#allocation2 + $0x78] sm:$0xff] %v1606
    %s1623 = scalar_lea.vmem [#allocation13], 128
    %v1624 = vld [vmem:[%s1623] sm:$0xf]
    %v1625 = vld [vmem:[%s1623 + $0x4] sm:$0xf]
    %v1626 = vld [vmem:[%s1623 + $0x8] sm:$0xf]
    %v1627 = vld [vmem:[%s1623 + $0xc] sm:$0xf]
    %v1628 = vld [vmem:[%s1623 + $0x10] sm:$0xf]
    %v1629 = vld [vmem:[%s1623 + $0x14] sm:$0xf]
    %v1630 = vld [vmem:[%s1623 + $0x18] sm:$0xf]
    %v1631 = vld [vmem:[%s1623 + $0x1c] sm:$0xf]
    %v1632 = vld [vmem:[%s1623 + $0x20] sm:$0xf]
    %v1633 = vld [vmem:[%s1623 + $0x24] sm:$0xf]
    %v1634 = vld [vmem:[%s1623 + $0x28] sm:$0xf]
    %v1635 = vld [vmem:[%s1623 + $0x2c] sm:$0xf]
    %v1636 = vld [vmem:[%s1623 + $0x30] sm:$0xf]
    %v1637 = vld [vmem:[%s1623 + $0x34] sm:$0xf]
    %v1638 = vld [vmem:[%s1623 + $0x38] sm:$0xf]
    %v1639 = vld [vmem:[%s1623 + $0x3c] sm:$0xf]
    %v1640 = vld [vmem:[%s5 + $0x2] sm:$0x1]
    %v1641 = vld [vmem:[#allocation14 + $0x2] sm:$0x1]
    %v1642 = vld [vmem:[#allocation16 + $0x2] sm:$0x1]
    %v1643 = vld [vmem:[#allocation2] sm:$0xff]
    %v1644 = vld [vmem:[#allocation2 + $0x8] sm:$0xff]
    %v1645 = vld [vmem:[#allocation2 + $0x10] sm:$0xff]
    %v1646 = vld [vmem:[#allocation2 + $0x18] sm:$0xff]
    %v1647 = vld [vmem:[#allocation2 + $0x20] sm:$0xff]
    %v1648 = vld [vmem:[#allocation2 + $0x28] sm:$0xff]
    %v1649 = vld [vmem:[#allocation2 + $0x30] sm:$0xff]
    %v1650 = vld [vmem:[#allocation2 + $0x38] sm:$0xff]
    %v1651 = vld [vmem:[#allocation2 + $0x40] sm:$0xff]
    %v1652 = vld [vmem:[#allocation2 + $0x48] sm:$0xff]
    %v1653 = vld [vmem:[#allocation2 + $0x50] sm:$0xff]
    %v1654 = vld [vmem:[#allocation2 + $0x58] sm:$0xff]
    %v1655 = vld [vmem:[#allocation2 + $0x60] sm:$0xff]
    %v1656 = vld [vmem:[#allocation2 + $0x68] sm:$0xff]
    %v1657 = vld [vmem:[#allocation2 + $0x70] sm:$0xff]
    %v1658 = vld [vmem:[#allocation2 + $0x78] sm:$0xff]
    %v1659 = vpack.c.bf16 %v1644, %v1643
    %v1660 = vpack.c.bf16 %v1646, %v1645
    %v1661 = vpack.c.bf16 %v1648, %v1647
    %v1662 = vpack.c.bf16 %v1650, %v1649
    %v1663 = vpack.c.bf16 %v1652, %v1651
    %v1664 = vpack.c.bf16 %v1654, %v1653
    %v1665 = vpack.c.bf16 %v1656, %v1655
    %v1666 = vpack.c.bf16 %v1658, %v1657
    %v1683 = vunpack.c.l.b16 %v1624
    %v1684 = vunpack.c.l.b16 %v1625
    %v1685 = vunpack.c.l.b16 %v1626
    %v1686 = vunpack.c.l.b16 %v1627
    %v1687 = vunpack.c.l.b16 %v1628
    %v1688 = vunpack.c.l.b16 %v1629
    %v1689 = vunpack.c.l.b16 %v1630
    %v1690 = vunpack.c.l.b16 %v1631
    %v1691 = vunpack.c.l.b16 %v1632
    %v1692 = vunpack.c.l.b16 %v1633
    %v1693 = vunpack.c.l.b16 %v1634
    %v1694 = vunpack.c.l.b16 %v1635
    %v1695 = vunpack.c.l.b16 %v1636
    %v1696 = vunpack.c.l.b16 %v1637
    %v1697 = vunpack.c.l.b16 %v1638
    %v1698 = vunpack.c.l.b16 %v1639
    %v1699 = vpack.c.b16 %v1684, %v1683
    %v1700 = vpack.c.b16 %v1686, %v1685
    %v1701 = vpack.c.b16 %v1688, %v1687
    %v1702 = vpack.c.b16 %v1690, %v1689
    %v1703 = vpack.c.b16 %v1692, %v1691
    %v1704 = vpack.c.b16 %v1694, %v1693
    %v1705 = vpack.c.b16 %v1696, %v1695
    %v1706 = vpack.c.b16 %v1698, %v1697
    %1715 = vmatpush.bf16.msra.mxu0 %v1706
    %1716 = vmatpush.bf16.msra.mxu0 %v1705
    %1717 = vmatpush.bf16.msra.mxu0 %v1704
    %1718 = vmatpush.bf16.msra.mxu0 %v1703
    %1719 = vmatpush.bf16.msra.mxu0 %v1702
    %1720 = vmatpush.bf16.msra.mxu0 %v1701
    %1721 = vmatpush.bf16.msra.mxu0 %v1700
    %1722 = vmatpush.bf16.msra.mxu0 %v1699
    %1723 = vmatmul.bf16.gmra.mxu0 %v1659
    %v1724 = vpop.f32.mrf.mxu0
    %v1725 = vadd.f32 0.0, %v1724
    %v1726 = vpop.f32.mrf.mxu0
    %v1727 = vadd.f32 0.0, %v1726
    %1728 = vmatmul.bf16.gmra.mxu0 %v1660
    %v1729 = vpop.f32.mrf.mxu0
    %v1730 = vadd.f32 0.0, %v1729
    %v1731 = vpop.f32.mrf.mxu0
    %v1732 = vadd.f32 0.0, %v1731
    %1733 = vmatmul.bf16.gmra.mxu0 %v1661
    %v1734 = vpop.f32.mrf.mxu0
    %v1735 = vadd.f32 0.0, %v1734
    %v1736 = vpop.f32.mrf.mxu0
    %v1737 = vadd.f32 0.0, %v1736
    %1738 = vmatmul.bf16.gmra.mxu0 %v1662
    %v1739 = vpop.f32.mrf.mxu0
    %v1740 = vadd.f32 0.0, %v1739
    %v1741 = vpop.f32.mrf.mxu0
    %v1742 = vadd.f32 0.0, %v1741
    %1743 = vmatmul.bf16.gmra.mxu0 %v1663
    %v1744 = vpop.f32.mrf.mxu0
    %v1745 = vadd.f32 0.0, %v1744
    %v1746 = vpop.f32.mrf.mxu0
    %v1747 = vadd.f32 0.0, %v1746
    %1748 = vmatmul.bf16.gmra.mxu0 %v1664
    %v1749 = vpop.f32.mrf.mxu0
    %v1750 = vadd.f32 0.0, %v1749
    %v1751 = vpop.f32.mrf.mxu0
    %v1752 = vadd.f32 0.0, %v1751
    %1753 = vmatmul.bf16.gmra.mxu0 %v1665
    %v1754 = vpop.f32.mrf.mxu0
    %v1755 = vadd.f32 0.0, %v1754
    %v1756 = vpop.f32.mrf.mxu0
    %v1757 = vadd.f32 0.0, %v1756
    %1758 = vmatmul.bf16.gmra.mxu0 %v1666
    %v1759 = vpop.f32.mrf.mxu0
    %v1760 = vadd.f32 0.0, %v1759
    %v1761 = vpop.f32.mrf.mxu0
    %v1762 = vadd.f32 0.0, %v1761
    %1763 = vdwg.mxu0
    %v1764 = vpack.c.bf16 %v1725, %v1725
    %v1765 = vpack.c.bf16 %v1727, %v1727
    %v1766 = vpack.c.bf16 %v1730, %v1730
    %v1767 = vpack.c.bf16 %v1732, %v1732
    %v1768 = vpack.c.bf16 %v1735, %v1735
    %v1769 = vpack.c.bf16 %v1737, %v1737
    %v1770 = vpack.c.bf16 %v1740, %v1740
    %v1771 = vpack.c.bf16 %v1742, %v1742
    %v1772 = vpack.c.bf16 %v1745, %v1745
    %v1773 = vpack.c.bf16 %v1747, %v1747
    %v1774 = vpack.c.bf16 %v1750, %v1750
    %v1775 = vpack.c.bf16 %v1752, %v1752
    %v1776 = vpack.c.bf16 %v1755, %v1755
    %v1777 = vpack.c.bf16 %v1757, %v1757
    %v1778 = vpack.c.bf16 %v1760, %v1760
    %v1779 = vpack.c.bf16 %v1762, %v1762
    %1780 = vst [vmem:[#allocation3] sm:$0xf] %v1764
    %1781 = vst [vmem:[#allocation3 + $0x4] sm:$0xf] %v1765
    %1782 = vst [vmem:[#allocation3 + $0x8] sm:$0xf] %v1766
    %1783 = vst [vmem:[#allocation3 + $0xc] sm:$0xf] %v1767
    %1784 = vst [vmem:[#allocation3 + $0x10] sm:$0xf] %v1768
    %1785 = vst [vmem:[#allocation3 + $0x14] sm:$0xf] %v1769
    %1786 = vst [vmem:[#allocation3 + $0x18] sm:$0xf] %v1770
    %1787 = vst [vmem:[#allocation3 + $0x1c] sm:$0xf] %v1771
    %1788 = vst [vmem:[#allocation3 + $0x20] sm:$0xf] %v1772
    %1789 = vst [vmem:[#allocation3 + $0x24] sm:$0xf] %v1773
    %1790 = vst [vmem:[#allocation3 + $0x28] sm:$0xf] %v1774
    %1791 = vst [vmem:[#allocation3 + $0x2c] sm:$0xf] %v1775
    %1792 = vst [vmem:[#allocation3 + $0x30] sm:$0xf] %v1776
    %1793 = vst [vmem:[#allocation3 + $0x34] sm:$0xf] %v1777
    %1794 = vst [vmem:[#allocation3 + $0x38] sm:$0xf] %v1778
    %1795 = vst [vmem:[#allocation3 + $0x3c] sm:$0xf] %v1779
    %v1796 = vld [vmem:[#allocation22] sm:$0xf]
    %v1797 = vld [vmem:[#allocation22 + $0x4] sm:$0xf]
    %v1798 = vld [vmem:[#allocation22 + $0x8] sm:$0xf]
    %v1799 = vld [vmem:[#allocation22 + $0xc] sm:$0xf]
    %v1800 = vld [vmem:[#allocation22 + $0x10] sm:$0xf]
    %v1801 = vld [vmem:[#allocation22 + $0x14] sm:$0xf]
    %v1802 = vld [vmem:[#allocation22 + $0x18] sm:$0xf]
    %v1803 = vld [vmem:[#allocation22 + $0x1c] sm:$0xf]
    %v1804 = vld [vmem:[#allocation22 + $0x20] sm:$0xf]
    %v1805 = vld [vmem:[#allocation22 + $0x24] sm:$0xf]
    %v1806 = vld [vmem:[#allocation22 + $0x28] sm:$0xf]
    %v1807 = vld [vmem:[#allocation22 + $0x2c] sm:$0xf]
    %v1808 = vld [vmem:[#allocation22 + $0x30] sm:$0xf]
    %v1809 = vld [vmem:[#allocation22 + $0x34] sm:$0xf]
    %v1810 = vld [vmem:[#allocation22 + $0x38] sm:$0xf]
    %v1811 = vld [vmem:[#allocation22 + $0x3c] sm:$0xf]
    %v1812 = vld [vmem:[#allocation3] sm:$0xf]
    %v1813 = vld [vmem:[#allocation3 + $0x4] sm:$0xf]
    %v1814 = vld [vmem:[#allocation3 + $0x8] sm:$0xf]
    %v1815 = vld [vmem:[#allocation3 + $0xc] sm:$0xf]
    %v1816 = vld [vmem:[#allocation3 + $0x10] sm:$0xf]
    %v1817 = vld [vmem:[#allocation3 + $0x14] sm:$0xf]
    %v1818 = vld [vmem:[#allocation3 + $0x18] sm:$0xf]
    %v1819 = vld [vmem:[#allocation3 + $0x1c] sm:$0xf]
    %v1820 = vld [vmem:[#allocation3 + $0x20] sm:$0xf]
    %v1821 = vld [vmem:[#allocation3 + $0x24] sm:$0xf]
    %v1822 = vld [vmem:[#allocation3 + $0x28] sm:$0xf]
    %v1823 = vld [vmem:[#allocation3 + $0x2c] sm:$0xf]
    %v1824 = vld [vmem:[#allocation3 + $0x30] sm:$0xf]
    %v1825 = vld [vmem:[#allocation3 + $0x34] sm:$0xf]
    %v1826 = vld [vmem:[#allocation3 + $0x38] sm:$0xf]
    %v1827 = vld [vmem:[#allocation3 + $0x3c] sm:$0xf]
    %v1828 = vperm.slane %v1640, 0
    %v1845 = vunpack.c.l.b16 %v1796
    %v1846 = vunpack.c.l.b16 %v1797
    %v1847 = vunpack.c.l.b16 %v1798
    %v1848 = vunpack.c.l.b16 %v1799
    %v1849 = vunpack.c.l.b16 %v1800
    %v1850 = vunpack.c.l.b16 %v1801
    %v1851 = vunpack.c.l.b16 %v1802
    %v1852 = vunpack.c.l.b16 %v1803
    %v1853 = vunpack.c.l.b16 %v1804
    %v1854 = vunpack.c.l.b16 %v1805
    %v1855 = vunpack.c.l.b16 %v1806
    %v1856 = vunpack.c.l.b16 %v1807
    %v1857 = vunpack.c.l.b16 %v1808
    %v1858 = vunpack.c.l.b16 %v1809
    %v1859 = vunpack.c.l.b16 %v1810
    %v1860 = vunpack.c.l.b16 %v1811
    %v1861 = vpack.c.b16 %v1846, %v1845
    %v1862 = vpack.c.b16 %v1848, %v1847
    %v1863 = vpack.c.b16 %v1850, %v1849
    %v1864 = vpack.c.b16 %v1852, %v1851
    %v1865 = vpack.c.b16 %v1854, %v1853
    %v1866 = vpack.c.b16 %v1856, %v1855
    %v1867 = vpack.c.b16 %v1858, %v1857
    %v1868 = vpack.c.b16 %v1860, %v1859
    %v1893 = vunpack.c.l.b16 %v1812
    %v1894 = vunpack.c.l.b16 %v1813
    %v1895 = vunpack.c.l.b16 %v1814
    %v1896 = vunpack.c.l.b16 %v1815
    %v1897 = vunpack.c.l.b16 %v1816
    %v1898 = vunpack.c.l.b16 %v1817
    %v1899 = vunpack.c.l.b16 %v1818
    %v1900 = vunpack.c.l.b16 %v1819
    %v1901 = vunpack.c.l.b16 %v1820
    %v1902 = vunpack.c.l.b16 %v1821
    %v1903 = vunpack.c.l.b16 %v1822
    %v1904 = vunpack.c.l.b16 %v1823
    %v1905 = vunpack.c.l.b16 %v1824
    %v1906 = vunpack.c.l.b16 %v1825
    %v1907 = vunpack.c.l.b16 %v1826
    %v1908 = vunpack.c.l.b16 %v1827
    %v1909 = vpack.c.b16 %v1894, %v1893
    %v1910 = vpack.c.b16 %v1896, %v1895
    %v1911 = vpack.c.b16 %v1898, %v1897
    %v1912 = vpack.c.b16 %v1900, %v1899
    %v1913 = vpack.c.b16 %v1902, %v1901
    %v1914 = vpack.c.b16 %v1904, %v1903
    %v1915 = vpack.c.b16 %v1906, %v1905
    %v1916 = vpack.c.b16 %v1908, %v1907
    %1925 = vmatpush.bf16.msra.mxu0 %v1916
    %1926 = vmatpush.bf16.msra.mxu0 %v1915
    %1927 = vmatpush.bf16.msra.mxu0 %v1914
    %1928 = vmatpush.bf16.msra.mxu0 %v1913
    %1929 = vmatpush.bf16.msra.mxu0 %v1912
    %1930 = vmatpush.bf16.msra.mxu0 %v1911
    %1931 = vmatpush.bf16.msra.mxu0 %v1910
    %1932 = vmatpush.bf16.msra.mxu0 %v1909
    %1933 = vmatmul.bf16.gmra.mxu0 %v1861
    %v1934 = vpop.f32.mrf.mxu0
    %v1935 = vadd.f32 %v1828, %v1934
    %v1936 = vpop.f32.mrf.mxu0
    %v1937 = vadd.f32 %v1828, %v1936
    %1938 = vmatmul.bf16.gmra.mxu0 %v1862
    %v1939 = vpop.f32.mrf.mxu0
    %v1940 = vadd.f32 %v1828, %v1939
    %v1941 = vpop.f32.mrf.mxu0
    %v1942 = vadd.f32 %v1828, %v1941
    %1943 = vmatmul.bf16.gmra.mxu0 %v1863
    %v1944 = vpop.f32.mrf.mxu0
    %v1945 = vadd.f32 %v1828, %v1944
    %v1946 = vpop.f32.mrf.mxu0
    %v1947 = vadd.f32 %v1828, %v1946
    %1948 = vmatmul.bf16.gmra.mxu0 %v1864
    %v1949 = vpop.f32.mrf.mxu0
    %v1950 = vadd.f32 %v1828, %v1949
    %v1951 = vpop.f32.mrf.mxu0
    %v1952 = vadd.f32 %v1828, %v1951
    %1953 = vmatmul.bf16.gmra.mxu0 %v1865
    %v1954 = vpop.f32.mrf.mxu0
    %v1955 = vadd.f32 %v1828, %v1954
    %v1956 = vpop.f32.mrf.mxu0
    %v1957 = vadd.f32 %v1828, %v1956
    %1958 = vmatmul.bf16.gmra.mxu0 %v1866
    %v1959 = vpop.f32.mrf.mxu0
    %v1960 = vadd.f32 %v1828, %v1959
    %v1961 = vpop.f32.mrf.mxu0
    %v1962 = vadd.f32 %v1828, %v1961
    %1963 = vmatmul.bf16.gmra.mxu0 %v1867
    %v1964 = vpop.f32.mrf.mxu0
    %v1965 = vadd.f32 %v1828, %v1964
    %v1966 = vpop.f32.mrf.mxu0
    %v1967 = vadd.f32 %v1828, %v1966
    %1968 = vmatmul.bf16.gmra.mxu0 %v1868
    %v1969 = vpop.f32.mrf.mxu0
    %v1970 = vadd.f32 %v1828, %v1969
    %v1971 = vpop.f32.mrf.mxu0
    %v1972 = vadd.f32 %v1828, %v1971
    %1973 = vdwg.mxu0
    %1974 = vst [vmem:[#allocation4] sm:$0xff] %v1935
    %1975 = vst [vmem:[#allocation4 + $0x8] sm:$0xff] %v1937
    %1976 = vst [vmem:[#allocation4 + $0x10] sm:$0xff] %v1940
    %1977 = vst [vmem:[#allocation4 + $0x18] sm:$0xff] %v1942
    %1978 = vst [vmem:[#allocation4 + $0x20] sm:$0xff] %v1945
    %1979 = vst [vmem:[#allocation4 + $0x28] sm:$0xff] %v1947
    %1980 = vst [vmem:[#allocation4 + $0x30] sm:$0xff] %v1950
    %1981 = vst [vmem:[#allocation4 + $0x38] sm:$0xff] %v1952
    %1982 = vst [vmem:[#allocation4 + $0x40] sm:$0xff] %v1955
    %1983 = vst [vmem:[#allocation4 + $0x48] sm:$0xff] %v1957
    %1984 = vst [vmem:[#allocation4 + $0x50] sm:$0xff] %v1960
    %1985 = vst [vmem:[#allocation4 + $0x58] sm:$0xff] %v1962
    %1986 = vst [vmem:[#allocation4 + $0x60] sm:$0xff] %v1965
    %1987 = vst [vmem:[#allocation4 + $0x68] sm:$0xff] %v1967
    %1988 = vst [vmem:[#allocation4 + $0x70] sm:$0xff] %v1970
    %1989 = vst [vmem:[#allocation4 + $0x78] sm:$0xff] %v1972
    %v1990 = vld [vmem:[#allocation4] sm:$0xff]
    %v1991 = vld [vmem:[#allocation4 + $0x8] sm:$0xff]
    %v1992 = vld [vmem:[#allocation4 + $0x10] sm:$0xff]
    %v1993 = vld [vmem:[#allocation4 + $0x18] sm:$0xff]
    %v1994 = vld [vmem:[#allocation4 + $0x20] sm:$0xff]
    %v1995 = vld [vmem:[#allocation4 + $0x28] sm:$0xff]
    %v1996 = vld [vmem:[#allocation4 + $0x30] sm:$0xff]
    %v1997 = vld [vmem:[#allocation4 + $0x38] sm:$0xff]
    %v1998 = vld [vmem:[#allocation4 + $0x40] sm:$0xff]
    %v1999 = vld [vmem:[#allocation4 + $0x48] sm:$0xff]
    %v2000 = vld [vmem:[#allocation4 + $0x50] sm:$0xff]
    %v2001 = vld [vmem:[#allocation4 + $0x58] sm:$0xff]
    %v2002 = vld [vmem:[#allocation4 + $0x60] sm:$0xff]
    %v2003 = vld [vmem:[#allocation4 + $0x68] sm:$0xff]
    %v2004 = vld [vmem:[#allocation4 + $0x70] sm:$0xff]
    %v2005 = vld [vmem:[#allocation4 + $0x78] sm:$0xff]
    %v2006 = vmul.f32 %v1990, %v460
    %v2007 = vmul.f32 %v1991, %v461
    %v2008 = vmul.f32 %v1992, %v462
    %v2009 = vmul.f32 %v1993, %v463
    %v2010 = vmul.f32 %v1994, %v464
    %v2011 = vmul.f32 %v1995, %v465
    %v2012 = vmul.f32 %v1996, %v466
    %v2013 = vmul.f32 %v1997, %v467
    %v2014 = vmul.f32 %v1998, %v468
    %v2015 = vmul.f32 %v1999, %v469
    %v2016 = vmul.f32 %v2000, %v470
    %v2017 = vmul.f32 %v2001, %v471
    %v2018 = vmul.f32 %v2002, %v472
    %v2019 = vmul.f32 %v2003, %v473
    %v2020 = vmul.f32 %v2004, %v474
    %v2021 = vmul.f32 %v2005, %v475
    %v2022 = vadd.f32 %v2006, %v2007
    %v2023 = vadd.f32 %v2022, %v2008
    %v2024 = vadd.f32 %v2023, %v2009
    %v2025 = vadd.f32 %v2024, %v2010
    %v2026 = vadd.f32 %v2025, %v2011
    %v2027 = vadd.f32 %v2026, %v2012
    %v2028 = vadd.f32 %v2027, %v2013
    %v2029 = vadd.f32 %v2028, %v2014
    %v2030 = vadd.f32 %v2029, %v2015
    %v2031 = vadd.f32 %v2030, %v2016
    %v2032 = vadd.f32 %v2031, %v2017
    %v2033 = vadd.f32 %v2032, %v2018
    %v2034 = vadd.f32 %v2033, %v2019
    %v2035 = vadd.f32 %v2034, %v2020
    %v2036 = vadd.f32 %v2035, %v2021
    %v2037 = vrot.slane %v2036, 4
    %v2038 = vadd.f32 %v2036, %v2037
    %v2039 = vrot.slane %v2038, 2
    %v2040 = vadd.f32 %v2038, %v2039
    %v2041 = vrot.slane %v2040, 1
    %v2042 = vadd.f32 %v2040, %v2041
    %v2043 = vmul.f32 %v2006, %v1990
    %v2044 = vmul.f32 %v2007, %v1991
    %v2045 = vmul.f32 %v2008, %v1992
    %v2046 = vmul.f32 %v2009, %v1993
    %v2047 = vmul.f32 %v2010, %v1994
    %v2048 = vmul.f32 %v2011, %v1995
    %v2049 = vmul.f32 %v2012, %v1996
    %v2050 = vmul.f32 %v2013, %v1997
    %v2051 = vmul.f32 %v2014, %v1998
    %v2052 = vmul.f32 %v2015, %v1999
    %v2053 = vmul.f32 %v2016, %v2000
    %v2054 = vmul.f32 %v2017, %v2001
    %v2055 = vmul.f32 %v2018, %v2002
    %v2056 = vmul.f32 %v2019, %v2003
    %v2057 = vmul.f32 %v2020, %v2004
    %v2058 = vmul.f32 %v2021, %v2005
    %v2059 = vadd.f32 %v2043, %v2044
    %v2060 = vadd.f32 %v2059, %v2045
    %v2061 = vadd.f32 %v2060, %v2046
    %v2062 = vadd.f32 %v2061, %v2047
    %v2063 = vadd.f32 %v2062, %v2048
    %v2064 = vadd.f32 %v2063, %v2049
    %v2065 = vadd.f32 %v2064, %v2050
    %v2066 = vadd.f32 %v2065, %v2051
    %v2067 = vadd.f32 %v2066, %v2052
    %v2068 = vadd.f32 %v2067, %v2053
    %v2069 = vadd.f32 %v2068, %v2054
    %v2070 = vadd.f32 %v2069, %v2055
    %v2071 = vadd.f32 %v2070, %v2056
    %v2072 = vadd.f32 %v2071, %v2057
    %v2073 = vadd.f32 %v2072, %v2058
    %v2074 = vrot.slane %v2073, 4
    %v2075 = vadd.f32 %v2073, %v2074
    %v2076 = vrot.slane %v2075, 2
    %v2077 = vadd.f32 %v2075, %v2076
    %v2078 = vrot.slane %v2077, 1
    %v2079 = vadd.f32 %v2077, %v2078
    %v2080 = vmul.f32 %v2042, 0.03125
    %v2081 = vmul.f32 %v2079, 0.03125
    %v2082 = vmul.f32 %v2080, %v2080
    %v2083 = vsub.f32 %v2081, %v2082
    %v2084 = vmax.f32 %v2083, 0.0
    %v2085 = vadd.f32 %v2084, 1e-05
    %v2086 = vrsqrt.pop %v2085
    %v2087 = vmul.f32 %v2086, %v2085
    %v2088 = vmul.f32 %v2087, %v2086
    %v2089 = vmul.f32 0.5, %v2088
    %v2090 = vsub.f32 1.5, %v2089
    %v2091 = vmul.f32 %v2086, %v2090
    %vm2092 = vweird.f32 %v2085
    %vm2093 = vweird.f32 %v2086
    %vm2094 = vmor %vm2092, %vm2093
    %v2095 = vsel %vm2094, %v2086, %v2091
    %v2096 = vmul.f32 %v1641, %v2095
    %v2097 = vmul.f32 %v2080, %v2096
    %v2098 = vsub.f32 %v1642, %v2097
    %v2099 = vperm.slane %v2096, 0
    %v2100 = vmul.f32 %v1990, %v2099
    %v2101 = vmul.f32 %v1991, %v2099
    %v2102 = vmul.f32 %v1992, %v2099
    %v2103 = vmul.f32 %v1993, %v2099
    %v2104 = vmul.f32 %v1994, %v2099
    %v2105 = vmul.f32 %v1995, %v2099
    %v2106 = vmul.f32 %v1996, %v2099
    %v2107 = vmul.f32 %v1997, %v2099
    %v2108 = vmul.f32 %v1998, %v2099
    %v2109 = vmul.f32 %v1999, %v2099
    %v2110 = vmul.f32 %v2000, %v2099
    %v2111 = vmul.f32 %v2001, %v2099
    %v2112 = vmul.f32 %v2002, %v2099
    %v2113 = vmul.f32 %v2003, %v2099
    %v2114 = vmul.f32 %v2004, %v2099
    %v2115 = vmul.f32 %v2005, %v2099
    %v2116 = vperm.slane %v2098, 0
    %v2117 = vadd.f32 %v2100, %v2116
    %v2118 = vadd.f32 %v2101, %v2116
    %v2119 = vadd.f32 %v2102, %v2116
    %v2120 = vadd.f32 %v2103, %v2116
    %v2121 = vadd.f32 %v2104, %v2116
    %v2122 = vadd.f32 %v2105, %v2116
    %v2123 = vadd.f32 %v2106, %v2116
    %v2124 = vadd.f32 %v2107, %v2116
    %v2125 = vadd.f32 %v2108, %v2116
    %v2126 = vadd.f32 %v2109, %v2116
    %v2127 = vadd.f32 %v2110, %v2116
    %v2128 = vadd.f32 %v2111, %v2116
    %v2129 = vadd.f32 %v2112, %v2116
    %v2130 = vadd.f32 %v2113, %v2116
    %v2131 = vadd.f32 %v2114, %v2116
    %v2132 = vadd.f32 %v2115, %v2116
    %v2133 = vmax.f32 %v2117, 0.0
    %v2134 = vmax.f32 %v2118, 0.0
    %v2135 = vmax.f32 %v2119, 0.0
    %v2136 = vmax.f32 %v2120, 0.0
    %v2137 = vmax.f32 %v2121, 0.0
    %v2138 = vmax.f32 %v2122, 0.0
    %v2139 = vmax.f32 %v2123, 0.0
    %v2140 = vmax.f32 %v2124, 0.0
    %v2141 = vmax.f32 %v2125, 0.0
    %v2142 = vmax.f32 %v2126, 0.0
    %v2143 = vmax.f32 %v2127, 0.0
    %v2144 = vmax.f32 %v2128, 0.0
    %v2145 = vmax.f32 %v2129, 0.0
    %v2146 = vmax.f32 %v2130, 0.0
    %v2147 = vmax.f32 %v2131, 0.0
    %v2148 = vmax.f32 %v2132, 0.0
    %v2149 = vld [vmem:[#allocation2] sm:$0xff]
    %v2150 = vld [vmem:[#allocation2 + $0x8] sm:$0xff]
    %v2151 = vld [vmem:[#allocation2 + $0x10] sm:$0xff]
    %v2152 = vld [vmem:[#allocation2 + $0x18] sm:$0xff]
    %v2153 = vld [vmem:[#allocation2 + $0x20] sm:$0xff]
    %v2154 = vld [vmem:[#allocation2 + $0x28] sm:$0xff]
    %v2155 = vld [vmem:[#allocation2 + $0x30] sm:$0xff]
    %v2156 = vld [vmem:[#allocation2 + $0x38] sm:$0xff]
    %v2157 = vld [vmem:[#allocation2 + $0x40] sm:$0xff]
    %v2158 = vld [vmem:[#allocation2 + $0x48] sm:$0xff]
    %v2159 = vld [vmem:[#allocation2 + $0x50] sm:$0xff]
    %v2160 = vld [vmem:[#allocation2 + $0x58] sm:$0xff]
    %v2161 = vld [vmem:[#allocation2 + $0x60] sm:$0xff]
    %v2162 = vld [vmem:[#allocation2 + $0x68] sm:$0xff]
    %v2163 = vld [vmem:[#allocation2 + $0x70] sm:$0xff]
    %v2164 = vld [vmem:[#allocation2 + $0x78] sm:$0xff]
    %v2165 = vadd.f32 %v2133, %v2149
    %v2166 = vadd.f32 %v2134, %v2150
    %v2167 = vadd.f32 %v2135, %v2151
    %v2168 = vadd.f32 %v2136, %v2152
    %v2169 = vadd.f32 %v2137, %v2153
    %v2170 = vadd.f32 %v2138, %v2154
    %v2171 = vadd.f32 %v2139, %v2155
    %v2172 = vadd.f32 %v2140, %v2156
    %v2173 = vadd.f32 %v2141, %v2157
    %v2174 = vadd.f32 %v2142, %v2158
    %v2175 = vadd.f32 %v2143, %v2159
    %v2176 = vadd.f32 %v2144, %v2160
    %v2177 = vadd.f32 %v2145, %v2161
    %v2178 = vadd.f32 %v2146, %v2162
    %v2179 = vadd.f32 %v2147, %v2163
    %v2180 = vadd.f32 %v2148, %v2164
    %2181 = vst [vmem:[#allocation2] sm:$0xff] %v2165
    %2182 = vst [vmem:[#allocation2 + $0x8] sm:$0xff] %v2166
    %2183 = vst [vmem:[#allocation2 + $0x10] sm:$0xff] %v2167
    %2184 = vst [vmem:[#allocation2 + $0x18] sm:$0xff] %v2168
    %2185 = vst [vmem:[#allocation2 + $0x20] sm:$0xff] %v2169
    %2186 = vst [vmem:[#allocation2 + $0x28] sm:$0xff] %v2170
    %2187 = vst [vmem:[#allocation2 + $0x30] sm:$0xff] %v2171
    %2188 = vst [vmem:[#allocation2 + $0x38] sm:$0xff] %v2172
    %2189 = vst [vmem:[#allocation2 + $0x40] sm:$0xff] %v2173
    %2190 = vst [vmem:[#allocation2 + $0x48] sm:$0xff] %v2174
    %2191 = vst [vmem:[#allocation2 + $0x50] sm:$0xff] %v2175
    %2192 = vst [vmem:[#allocation2 + $0x58] sm:$0xff] %v2176
    %2193 = vst [vmem:[#allocation2 + $0x60] sm:$0xff] %v2177
    %2194 = vst [vmem:[#allocation2 + $0x68] sm:$0xff] %v2178
    %2195 = vst [vmem:[#allocation2 + $0x70] sm:$0xff] %v2179
    %2196 = vst [vmem:[#allocation2 + $0x78] sm:$0xff] %v2180
    %s2197 = scalar_lea.vmem [#allocation13], 192
    %v2198 = vld [vmem:[%s2197] sm:$0xf]
    %v2199 = vld [vmem:[%s2197 + $0x4] sm:$0xf]
    %v2200 = vld [vmem:[%s2197 + $0x8] sm:$0xf]
    %v2201 = vld [vmem:[%s2197 + $0xc] sm:$0xf]
    %v2202 = vld [vmem:[%s2197 + $0x10] sm:$0xf]
    %v2203 = vld [vmem:[%s2197 + $0x14] sm:$0xf]
    %v2204 = vld [vmem:[%s2197 + $0x18] sm:$0xf]
    %v2205 = vld [vmem:[%s2197 + $0x1c] sm:$0xf]
    %v2206 = vld [vmem:[%s2197 + $0x20] sm:$0xf]
    %v2207 = vld [vmem:[%s2197 + $0x24] sm:$0xf]
    %v2208 = vld [vmem:[%s2197 + $0x28] sm:$0xf]
    %v2209 = vld [vmem:[%s2197 + $0x2c] sm:$0xf]
    %v2210 = vld [vmem:[%s2197 + $0x30] sm:$0xf]
    %v2211 = vld [vmem:[%s2197 + $0x34] sm:$0xf]
    %v2212 = vld [vmem:[%s2197 + $0x38] sm:$0xf]
    %v2213 = vld [vmem:[%s2197 + $0x3c] sm:$0xf]
    %v2214 = vld [vmem:[%s5 + $0x3] sm:$0x1]
    %v2215 = vld [vmem:[#allocation14 + $0x3] sm:$0x1]
    %v2216 = vld [vmem:[#allocation16 + $0x3] sm:$0x1]
    %v2217 = vld [vmem:[#allocation2] sm:$0xff]
    %v2218 = vld [vmem:[#allocation2 + $0x8] sm:$0xff]
    %v2219 = vld [vmem:[#allocation2 + $0x10] sm:$0xff]
    %v2220 = vld [vmem:[#allocation2 + $0x18] sm:$0xff]
    %v2221 = vld [vmem:[#allocation2 + $0x20] sm:$0xff]
    %v2222 = vld [vmem:[#allocation2 + $0x28] sm:$0xff]
    %v2223 = vld [vmem:[#allocation2 + $0x30] sm:$0xff]
    %v2224 = vld [vmem:[#allocation2 + $0x38] sm:$0xff]
    %v2225 = vld [vmem:[#allocation2 + $0x40] sm:$0xff]
    %v2226 = vld [vmem:[#allocation2 + $0x48] sm:$0xff]
    %v2227 = vld [vmem:[#allocation2 + $0x50] sm:$0xff]
    %v2228 = vld [vmem:[#allocation2 + $0x58] sm:$0xff]
    %v2229 = vld [vmem:[#allocation2 + $0x60] sm:$0xff]
    %v2230 = vld [vmem:[#allocation2 + $0x68] sm:$0xff]
    %v2231 = vld [vmem:[#allocation2 + $0x70] sm:$0xff]
    %v2232 = vld [vmem:[#allocation2 + $0x78] sm:$0xff]
    %v2233 = vpack.c.bf16 %v2218, %v2217
    %v2234 = vpack.c.bf16 %v2220, %v2219
    %v2235 = vpack.c.bf16 %v2222, %v2221
    %v2236 = vpack.c.bf16 %v2224, %v2223
    %v2237 = vpack.c.bf16 %v2226, %v2225
    %v2238 = vpack.c.bf16 %v2228, %v2227
    %v2239 = vpack.c.bf16 %v2230, %v2229
    %v2240 = vpack.c.bf16 %v2232, %v2231
    %v2257 = vunpack.c.l.b16 %v2198
    %v2258 = vunpack.c.l.b16 %v2199
    %v2259 = vunpack.c.l.b16 %v2200
    %v2260 = vunpack.c.l.b16 %v2201
    %v2261 = vunpack.c.l.b16 %v2202
    %v2262 = vunpack.c.l.b16 %v2203
    %v2263 = vunpack.c.l.b16 %v2204
    %v2264 = vunpack.c.l.b16 %v2205
    %v2265 = vunpack.c.l.b16 %v2206
    %v2266 = vunpack.c.l.b16 %v2207
    %v2267 = vunpack.c.l.b16 %v2208
    %v2268 = vunpack.c.l.b16 %v2209
    %v2269 = vunpack.c.l.b16 %v2210
    %v2270 = vunpack.c.l.b16 %v2211
    %v2271 = vunpack.c.l.b16 %v2212
    %v2272 = vunpack.c.l.b16 %v2213
    %v2273 = vpack.c.b16 %v2258, %v2257
    %v2274 = vpack.c.b16 %v2260, %v2259
    %v2275 = vpack.c.b16 %v2262, %v2261
    %v2276 = vpack.c.b16 %v2264, %v2263
    %v2277 = vpack.c.b16 %v2266, %v2265
    %v2278 = vpack.c.b16 %v2268, %v2267
    %v2279 = vpack.c.b16 %v2270, %v2269
    %v2280 = vpack.c.b16 %v2272, %v2271
    %2289 = vmatpush.bf16.msra.mxu0 %v2280
    %2290 = vmatpush.bf16.msra.mxu0 %v2279
    %2291 = vmatpush.bf16.msra.mxu0 %v2278
    %2292 = vmatpush.bf16.msra.mxu0 %v2277
    %2293 = vmatpush.bf16.msra.mxu0 %v2276
    %2294 = vmatpush.bf16.msra.mxu0 %v2275
    %2295 = vmatpush.bf16.msra.mxu0 %v2274
    %2296 = vmatpush.bf16.msra.mxu0 %v2273
    %2297 = vmatmul.bf16.gmra.mxu0 %v2233
    %v2298 = vpop.f32.mrf.mxu0
    %v2299 = vadd.f32 0.0, %v2298
    %v2300 = vpop.f32.mrf.mxu0
    %v2301 = vadd.f32 0.0, %v2300
    %2302 = vmatmul.bf16.gmra.mxu0 %v2234
    %v2303 = vpop.f32.mrf.mxu0
    %v2304 = vadd.f32 0.0, %v2303
    %v2305 = vpop.f32.mrf.mxu0
    %v2306 = vadd.f32 0.0, %v2305
    %2307 = vmatmul.bf16.gmra.mxu0 %v2235
    %v2308 = vpop.f32.mrf.mxu0
    %v2309 = vadd.f32 0.0, %v2308
    %v2310 = vpop.f32.mrf.mxu0
    %v2311 = vadd.f32 0.0, %v2310
    %2312 = vmatmul.bf16.gmra.mxu0 %v2236
    %v2313 = vpop.f32.mrf.mxu0
    %v2314 = vadd.f32 0.0, %v2313
    %v2315 = vpop.f32.mrf.mxu0
    %v2316 = vadd.f32 0.0, %v2315
    %2317 = vmatmul.bf16.gmra.mxu0 %v2237
    %v2318 = vpop.f32.mrf.mxu0
    %v2319 = vadd.f32 0.0, %v2318
    %v2320 = vpop.f32.mrf.mxu0
    %v2321 = vadd.f32 0.0, %v2320
    %2322 = vmatmul.bf16.gmra.mxu0 %v2238
    %v2323 = vpop.f32.mrf.mxu0
    %v2324 = vadd.f32 0.0, %v2323
    %v2325 = vpop.f32.mrf.mxu0
    %v2326 = vadd.f32 0.0, %v2325
    %2327 = vmatmul.bf16.gmra.mxu0 %v2239
    %v2328 = vpop.f32.mrf.mxu0
    %v2329 = vadd.f32 0.0, %v2328
    %v2330 = vpop.f32.mrf.mxu0
    %v2331 = vadd.f32 0.0, %v2330
    %2332 = vmatmul.bf16.gmra.mxu0 %v2240
    %v2333 = vpop.f32.mrf.mxu0
    %v2334 = vadd.f32 0.0, %v2333
    %v2335 = vpop.f32.mrf.mxu0
    %v2336 = vadd.f32 0.0, %v2335
    %2337 = vdwg.mxu0
    %v2338 = vpack.c.bf16 %v2299, %v2299
    %v2339 = vpack.c.bf16 %v2301, %v2301
    %v2340 = vpack.c.bf16 %v2304, %v2304
    %v2341 = vpack.c.bf16 %v2306, %v2306
    %v2342 = vpack.c.bf16 %v2309, %v2309
    %v2343 = vpack.c.bf16 %v2311, %v2311
    %v2344 = vpack.c.bf16 %v2314, %v2314
    %v2345 = vpack.c.bf16 %v2316, %v2316
    %v2346 = vpack.c.bf16 %v2319, %v2319
    %v2347 = vpack.c.bf16 %v2321, %v2321
    %v2348 = vpack.c.bf16 %v2324, %v2324
    %v2349 = vpack.c.bf16 %v2326, %v2326
    %v2350 = vpack.c.bf16 %v2329, %v2329
    %v2351 = vpack.c.bf16 %v2331, %v2331
    %v2352 = vpack.c.bf16 %v2334, %v2334
    %v2353 = vpack.c.bf16 %v2336, %v2336
    %2354 = vst [vmem:[#allocation3] sm:$0xf] %v2338
    %2355 = vst [vmem:[#allocation3 + $0x4] sm:$0xf] %v2339
    %2356 = vst [vmem:[#allocation3 + $0x8] sm:$0xf] %v2340
    %2357 = vst [vmem:[#allocation3 + $0xc] sm:$0xf] %v2341
    %2358 = vst [vmem:[#allocation3 + $0x10] sm:$0xf] %v2342
    %2359 = vst [vmem:[#allocation3 + $0x14] sm:$0xf] %v2343
    %2360 = vst [vmem:[#allocation3 + $0x18] sm:$0xf] %v2344
    %2361 = vst [vmem:[#allocation3 + $0x1c] sm:$0xf] %v2345
    %2362 = vst [vmem:[#allocation3 + $0x20] sm:$0xf] %v2346
    %2363 = vst [vmem:[#allocation3 + $0x24] sm:$0xf] %v2347
    %2364 = vst [vmem:[#allocation3 + $0x28] sm:$0xf] %v2348
    %2365 = vst [vmem:[#allocation3 + $0x2c] sm:$0xf] %v2349
    %2366 = vst [vmem:[#allocation3 + $0x30] sm:$0xf] %v2350
    %2367 = vst [vmem:[#allocation3 + $0x34] sm:$0xf] %v2351
    %2368 = vst [vmem:[#allocation3 + $0x38] sm:$0xf] %v2352
    %2369 = vst [vmem:[#allocation3 + $0x3c] sm:$0xf] %v2353
    %v2370 = vld [vmem:[#allocation22] sm:$0xf]
    %v2371 = vld [vmem:[#allocation22 + $0x4] sm:$0xf]
    %v2372 = vld [vmem:[#allocation22 + $0x8] sm:$0xf]
    %v2373 = vld [vmem:[#allocation22 + $0xc] sm:$0xf]
    %v2374 = vld [vmem:[#allocation22 + $0x10] sm:$0xf]
    %v2375 = vld [vmem:[#allocation22 + $0x14] sm:$0xf]
    %v2376 = vld [vmem:[#allocation22 + $0x18] sm:$0xf]
    %v2377 = vld [vmem:[#allocation22 + $0x1c] sm:$0xf]
    %v2378 = vld [vmem:[#allocation22 + $0x20] sm:$0xf]
    %v2379 = vld [vmem:[#allocation22 + $0x24] sm:$0xf]
    %v2380 = vld [vmem:[#allocation22 + $0x28] sm:$0xf]
    %v2381 = vld [vmem:[#allocation22 + $0x2c] sm:$0xf]
    %v2382 = vld [vmem:[#allocation22 + $0x30] sm:$0xf]
    %v2383 = vld [vmem:[#allocation22 + $0x34] sm:$0xf]
    %v2384 = vld [vmem:[#allocation22 + $0x38] sm:$0xf]
    %v2385 = vld [vmem:[#allocation22 + $0x3c] sm:$0xf]
    %v2386 = vld [vmem:[#allocation3] sm:$0xf]
    %v2387 = vld [vmem:[#allocation3 + $0x4] sm:$0xf]
    %v2388 = vld [vmem:[#allocation3 + $0x8] sm:$0xf]
    %v2389 = vld [vmem:[#allocation3 + $0xc] sm:$0xf]
    %v2390 = vld [vmem:[#allocation3 + $0x10] sm:$0xf]
    %v2391 = vld [vmem:[#allocation3 + $0x14] sm:$0xf]
    %v2392 = vld [vmem:[#allocation3 + $0x18] sm:$0xf]
    %v2393 = vld [vmem:[#allocation3 + $0x1c] sm:$0xf]
    %v2394 = vld [vmem:[#allocation3 + $0x20] sm:$0xf]
    %v2395 = vld [vmem:[#allocation3 + $0x24] sm:$0xf]
    %v2396 = vld [vmem:[#allocation3 + $0x28] sm:$0xf]
    %v2397 = vld [vmem:[#allocation3 + $0x2c] sm:$0xf]
    %v2398 = vld [vmem:[#allocation3 + $0x30] sm:$0xf]
    %v2399 = vld [vmem:[#allocation3 + $0x34] sm:$0xf]
    %v2400 = vld [vmem:[#allocation3 + $0x38] sm:$0xf]
    %v2401 = vld [vmem:[#allocation3 + $0x3c] sm:$0xf]
    %v2402 = vperm.slane %v2214, 0
    %v2419 = vunpack.c.l.b16 %v2370
    %v2420 = vunpack.c.l.b16 %v2371
    %v2421 = vunpack.c.l.b16 %v2372
    %v2422 = vunpack.c.l.b16 %v2373
    %v2423 = vunpack.c.l.b16 %v2374
    %v2424 = vunpack.c.l.b16 %v2375
    %v2425 = vunpack.c.l.b16 %v2376
    %v2426 = vunpack.c.l.b16 %v2377
    %v2427 = vunpack.c.l.b16 %v2378
    %v2428 = vunpack.c.l.b16 %v2379
    %v2429 = vunpack.c.l.b16 %v2380
    %v2430 = vunpack.c.l.b16 %v2381
    %v2431 = vunpack.c.l.b16 %v2382
    %v2432 = vunpack.c.l.b16 %v2383
    %v2433 = vunpack.c.l.b16 %v2384
    %v2434 = vunpack.c.l.b16 %v2385
    %v2435 = vpack.c.b16 %v2420, %v2419
    %v2436 = vpack.c.b16 %v2422, %v2421
    %v2437 = vpack.c.b16 %v2424, %v2423
    %v2438 = vpack.c.b16 %v2426, %v2425
    %v2439 = vpack.c.b16 %v2428, %v2427
    %v2440 = vpack.c.b16 %v2430, %v2429
    %v2441 = vpack.c.b16 %v2432, %v2431
    %v2442 = vpack.c.b16 %v2434, %v2433
    %v2467 = vunpack.c.l.b16 %v2386
    %v2468 = vunpack.c.l.b16 %v2387
    %v2469 = vunpack.c.l.b16 %v2388
    %v2470 = vunpack.c.l.b16 %v2389
    %v2471 = vunpack.c.l.b16 %v2390
    %v2472 = vunpack.c.l.b16 %v2391
    %v2473 = vunpack.c.l.b16 %v2392
    %v2474 = vunpack.c.l.b16 %v2393
    %v2475 = vunpack.c.l.b16 %v2394
    %v2476 = vunpack.c.l.b16 %v2395
    %v2477 = vunpack.c.l.b16 %v2396
    %v2478 = vunpack.c.l.b16 %v2397
    %v2479 = vunpack.c.l.b16 %v2398
    %v2480 = vunpack.c.l.b16 %v2399
    %v2481 = vunpack.c.l.b16 %v2400
    %v2482 = vunpack.c.l.b16 %v2401
    %v2483 = vpack.c.b16 %v2468, %v2467
    %v2484 = vpack.c.b16 %v2470, %v2469
    %v2485 = vpack.c.b16 %v2472, %v2471
    %v2486 = vpack.c.b16 %v2474, %v2473
    %v2487 = vpack.c.b16 %v2476, %v2475
    %v2488 = vpack.c.b16 %v2478, %v2477
    %v2489 = vpack.c.b16 %v2480, %v2479
    %v2490 = vpack.c.b16 %v2482, %v2481
    %2499 = vmatpush.bf16.msra.mxu0 %v2490
    %2500 = vmatpush.bf16.msra.mxu0 %v2489
    %2501 = vmatpush.bf16.msra.mxu0 %v2488
    %2502 = vmatpush.bf16.msra.mxu0 %v2487
    %2503 = vmatpush.bf16.msra.mxu0 %v2486
    %2504 = vmatpush.bf16.msra.mxu0 %v2485
    %2505 = vmatpush.bf16.msra.mxu0 %v2484
    %2506 = vmatpush.bf16.msra.mxu0 %v2483
    %2507 = vmatmul.bf16.gmra.mxu0 %v2435
    %v2508 = vpop.f32.mrf.mxu0
    %v2509 = vadd.f32 %v2402, %v2508
    %v2510 = vpop.f32.mrf.mxu0
    %v2511 = vadd.f32 %v2402, %v2510
    %2512 = vmatmul.bf16.gmra.mxu0 %v2436
    %v2513 = vpop.f32.mrf.mxu0
    %v2514 = vadd.f32 %v2402, %v2513
    %v2515 = vpop.f32.mrf.mxu0
    %v2516 = vadd.f32 %v2402, %v2515
    %2517 = vmatmul.bf16.gmra.mxu0 %v2437
    %v2518 = vpop.f32.mrf.mxu0
    %v2519 = vadd.f32 %v2402, %v2518
    %v2520 = vpop.f32.mrf.mxu0
    %v2521 = vadd.f32 %v2402, %v2520
    %2522 = vmatmul.bf16.gmra.mxu0 %v2438
    %v2523 = vpop.f32.mrf.mxu0
    %v2524 = vadd.f32 %v2402, %v2523
    %v2525 = vpop.f32.mrf.mxu0
    %v2526 = vadd.f32 %v2402, %v2525
    %2527 = vmatmul.bf16.gmra.mxu0 %v2439
    %v2528 = vpop.f32.mrf.mxu0
    %v2529 = vadd.f32 %v2402, %v2528
    %v2530 = vpop.f32.mrf.mxu0
    %v2531 = vadd.f32 %v2402, %v2530
    %2532 = vmatmul.bf16.gmra.mxu0 %v2440
    %v2533 = vpop.f32.mrf.mxu0
    %v2534 = vadd.f32 %v2402, %v2533
    %v2535 = vpop.f32.mrf.mxu0
    %v2536 = vadd.f32 %v2402, %v2535
    %2537 = vmatmul.bf16.gmra.mxu0 %v2441
    %v2538 = vpop.f32.mrf.mxu0
    %v2539 = vadd.f32 %v2402, %v2538
    %v2540 = vpop.f32.mrf.mxu0
    %v2541 = vadd.f32 %v2402, %v2540
    %2542 = vmatmul.bf16.gmra.mxu0 %v2442
    %v2543 = vpop.f32.mrf.mxu0
    %v2544 = vadd.f32 %v2402, %v2543
    %v2545 = vpop.f32.mrf.mxu0
    %v2546 = vadd.f32 %v2402, %v2545
    %2547 = vdwg.mxu0
    %2548 = vst [vmem:[#allocation4] sm:$0xff] %v2509
    %2549 = vst [vmem:[#allocation4 + $0x8] sm:$0xff] %v2511
    %2550 = vst [vmem:[#allocation4 + $0x10] sm:$0xff] %v2514
    %2551 = vst [vmem:[#allocation4 + $0x18] sm:$0xff] %v2516
    %2552 = vst [vmem:[#allocation4 + $0x20] sm:$0xff] %v2519
    %2553 = vst [vmem:[#allocation4 + $0x28] sm:$0xff] %v2521
    %2554 = vst [vmem:[#allocation4 + $0x30] sm:$0xff] %v2524
    %2555 = vst [vmem:[#allocation4 + $0x38] sm:$0xff] %v2526
    %2556 = vst [vmem:[#allocation4 + $0x40] sm:$0xff] %v2529
    %2557 = vst [vmem:[#allocation4 + $0x48] sm:$0xff] %v2531
    %2558 = vst [vmem:[#allocation4 + $0x50] sm:$0xff] %v2534
    %2559 = vst [vmem:[#allocation4 + $0x58] sm:$0xff] %v2536
    %2560 = vst [vmem:[#allocation4 + $0x60] sm:$0xff] %v2539
    %2561 = vst [vmem:[#allocation4 + $0x68] sm:$0xff] %v2541
    %2562 = vst [vmem:[#allocation4 + $0x70] sm:$0xff] %v2544
    %2563 = vst [vmem:[#allocation4 + $0x78] sm:$0xff] %v2546
    %v2564 = vld [vmem:[#allocation4] sm:$0xff]
    %v2565 = vld [vmem:[#allocation4 + $0x8] sm:$0xff]
    %v2566 = vld [vmem:[#allocation4 + $0x10] sm:$0xff]
    %v2567 = vld [vmem:[#allocation4 + $0x18] sm:$0xff]
    %v2568 = vld [vmem:[#allocation4 + $0x20] sm:$0xff]
    %v2569 = vld [vmem:[#allocation4 + $0x28] sm:$0xff]
    %v2570 = vld [vmem:[#allocation4 + $0x30] sm:$0xff]
    %v2571 = vld [vmem:[#allocation4 + $0x38] sm:$0xff]
    %v2572 = vld [vmem:[#allocation4 + $0x40] sm:$0xff]
    %v2573 = vld [vmem:[#allocation4 + $0x48] sm:$0xff]
    %v2574 = vld [vmem:[#allocation4 + $0x50] sm:$0xff]
    %v2575 = vld [vmem:[#allocation4 + $0x58] sm:$0xff]
    %v2576 = vld [vmem:[#allocation4 + $0x60] sm:$0xff]
    %v2577 = vld [vmem:[#allocation4 + $0x68] sm:$0xff]
    %v2578 = vld [vmem:[#allocation4 + $0x70] sm:$0xff]
    %v2579 = vld [vmem:[#allocation4 + $0x78] sm:$0xff]
    %v2580 = vmul.f32 %v2564, %v460
    %v2581 = vmul.f32 %v2565, %v461
    %v2582 = vmul.f32 %v2566, %v462
    %v2583 = vmul.f32 %v2567, %v463
    %v2584 = vmul.f32 %v2568, %v464
    %v2585 = vmul.f32 %v2569, %v465
    %v2586 = vmul.f32 %v2570, %v466
    %v2587 = vmul.f32 %v2571, %v467
    %v2588 = vmul.f32 %v2572, %v468
    %v2589 = vmul.f32 %v2573, %v469
    %v2590 = vmul.f32 %v2574, %v470
    %v2591 = vmul.f32 %v2575, %v471
    %v2592 = vmul.f32 %v2576, %v472
    %v2593 = vmul.f32 %v2577, %v473
    %v2594 = vmul.f32 %v2578, %v474
    %v2595 = vmul.f32 %v2579, %v475
    %v2596 = vadd.f32 %v2580, %v2581
    %v2597 = vadd.f32 %v2596, %v2582
    %v2598 = vadd.f32 %v2597, %v2583
    %v2599 = vadd.f32 %v2598, %v2584
    %v2600 = vadd.f32 %v2599, %v2585
    %v2601 = vadd.f32 %v2600, %v2586
    %v2602 = vadd.f32 %v2601, %v2587
    %v2603 = vadd.f32 %v2602, %v2588
    %v2604 = vadd.f32 %v2603, %v2589
    %v2605 = vadd.f32 %v2604, %v2590
    %v2606 = vadd.f32 %v2605, %v2591
    %v2607 = vadd.f32 %v2606, %v2592
    %v2608 = vadd.f32 %v2607, %v2593
    %v2609 = vadd.f32 %v2608, %v2594
    %v2610 = vadd.f32 %v2609, %v2595
    %v2611 = vrot.slane %v2610, 4
    %v2612 = vadd.f32 %v2610, %v2611
    %v2613 = vrot.slane %v2612, 2
    %v2614 = vadd.f32 %v2612, %v2613
    %v2615 = vrot.slane %v2614, 1
    %v2616 = vadd.f32 %v2614, %v2615
    %v2617 = vmul.f32 %v2580, %v2564
    %v2618 = vmul.f32 %v2581, %v2565
    %v2619 = vmul.f32 %v2582, %v2566
    %v2620 = vmul.f32 %v2583, %v2567
    %v2621 = vmul.f32 %v2584, %v2568
    %v2622 = vmul.f32 %v2585, %v2569
    %v2623 = vmul.f32 %v2586, %v2570
    %v2624 = vmul.f32 %v2587, %v2571
    %v2625 = vmul.f32 %v2588, %v2572
    %v2626 = vmul.f32 %v2589, %v2573
    %v2627 = vmul.f32 %v2590, %v2574
    %v2628 = vmul.f32 %v2591, %v2575
    %v2629 = vmul.f32 %v2592, %v2576
    %v2630 = vmul.f32 %v2593, %v2577
    %v2631 = vmul.f32 %v2594, %v2578
    %v2632 = vmul.f32 %v2595, %v2579
    %v2633 = vadd.f32 %v2617, %v2618
    %v2634 = vadd.f32 %v2633, %v2619
    %v2635 = vadd.f32 %v2634, %v2620
    %v2636 = vadd.f32 %v2635, %v2621
    %v2637 = vadd.f32 %v2636, %v2622
    %v2638 = vadd.f32 %v2637, %v2623
    %v2639 = vadd.f32 %v2638, %v2624
    %v2640 = vadd.f32 %v2639, %v2625
    %v2641 = vadd.f32 %v2640, %v2626
    %v2642 = vadd.f32 %v2641, %v2627
    %v2643 = vadd.f32 %v2642, %v2628
    %v2644 = vadd.f32 %v2643, %v2629
    %v2645 = vadd.f32 %v2644, %v2630
    %v2646 = vadd.f32 %v2645, %v2631
    %v2647 = vadd.f32 %v2646, %v2632
    %v2648 = vrot.slane %v2647, 4
    %v2649 = vadd.f32 %v2647, %v2648
    %v2650 = vrot.slane %v2649, 2
    %v2651 = vadd.f32 %v2649, %v2650
    %v2652 = vrot.slane %v2651, 1
    %v2653 = vadd.f32 %v2651, %v2652
    %v2654 = vmul.f32 %v2616, 0.03125
    %v2655 = vmul.f32 %v2653, 0.03125
    %v2656 = vmul.f32 %v2654, %v2654
    %v2657 = vsub.f32 %v2655, %v2656
    %v2658 = vmax.f32 %v2657, 0.0
    %v2659 = vadd.f32 %v2658, 1e-05
    %v2660 = vrsqrt.pop %v2659
    %v2661 = vmul.f32 %v2660, %v2659
    %v2662 = vmul.f32 %v2661, %v2660
    %v2663 = vmul.f32 0.5, %v2662
    %v2664 = vsub.f32 1.5, %v2663
    %v2665 = vmul.f32 %v2660, %v2664
    %vm2666 = vweird.f32 %v2659
    %vm2667 = vweird.f32 %v2660
    %vm2668 = vmor %vm2666, %vm2667
    %v2669 = vsel %vm2668, %v2660, %v2665
    %v2670 = vmul.f32 %v2215, %v2669
    %v2671 = vmul.f32 %v2654, %v2670
    %v2672 = vsub.f32 %v2216, %v2671
    %v2673 = vperm.slane %v2670, 0
    %v2674 = vmul.f32 %v2564, %v2673
    %v2675 = vmul.f32 %v2565, %v2673
    %v2676 = vmul.f32 %v2566, %v2673
    %v2677 = vmul.f32 %v2567, %v2673
    %v2678 = vmul.f32 %v2568, %v2673
    %v2679 = vmul.f32 %v2569, %v2673
    %v2680 = vmul.f32 %v2570, %v2673
    %v2681 = vmul.f32 %v2571, %v2673
    %v2682 = vmul.f32 %v2572, %v2673
    %v2683 = vmul.f32 %v2573, %v2673
    %v2684 = vmul.f32 %v2574, %v2673
    %v2685 = vmul.f32 %v2575, %v2673
    %v2686 = vmul.f32 %v2576, %v2673
    %v2687 = vmul.f32 %v2577, %v2673
    %v2688 = vmul.f32 %v2578, %v2673
    %v2689 = vmul.f32 %v2579, %v2673
    %v2690 = vperm.slane %v2672, 0
    %v2691 = vadd.f32 %v2674, %v2690
    %v2692 = vadd.f32 %v2675, %v2690
    %v2693 = vadd.f32 %v2676, %v2690
    %v2694 = vadd.f32 %v2677, %v2690
    %v2695 = vadd.f32 %v2678, %v2690
    %v2696 = vadd.f32 %v2679, %v2690
    %v2697 = vadd.f32 %v2680, %v2690
    %v2698 = vadd.f32 %v2681, %v2690
    %v2699 = vadd.f32 %v2682, %v2690
    %v2700 = vadd.f32 %v2683, %v2690
    %v2701 = vadd.f32 %v2684, %v2690
    %v2702 = vadd.f32 %v2685, %v2690
    %v2703 = vadd.f32 %v2686, %v2690
    %v2704 = vadd.f32 %v2687, %v2690
    %v2705 = vadd.f32 %v2688, %v2690
    %v2706 = vadd.f32 %v2689, %v2690
    %v2707 = vmax.f32 %v2691, 0.0
    %v2708 = vmax.f32 %v2692, 0.0
    %v2709 = vmax.f32 %v2693, 0.0
    %v2710 = vmax.f32 %v2694, 0.0
    %v2711 = vmax.f32 %v2695, 0.0
    %v2712 = vmax.f32 %v2696, 0.0
    %v2713 = vmax.f32 %v2697, 0.0
    %v2714 = vmax.f32 %v2698, 0.0
    %v2715 = vmax.f32 %v2699, 0.0
    %v2716 = vmax.f32 %v2700, 0.0
    %v2717 = vmax.f32 %v2701, 0.0
    %v2718 = vmax.f32 %v2702, 0.0
    %v2719 = vmax.f32 %v2703, 0.0
    %v2720 = vmax.f32 %v2704, 0.0
    %v2721 = vmax.f32 %v2705, 0.0
    %v2722 = vmax.f32 %v2706, 0.0
    %v2723 = vld [vmem:[#allocation2] sm:$0xff]
    %v2724 = vld [vmem:[#allocation2 + $0x8] sm:$0xff]
    %v2725 = vld [vmem:[#allocation2 + $0x10] sm:$0xff]
    %v2726 = vld [vmem:[#allocation2 + $0x18] sm:$0xff]
    %v2727 = vld [vmem:[#allocation2 + $0x20] sm:$0xff]
    %v2728 = vld [vmem:[#allocation2 + $0x28] sm:$0xff]
    %v2729 = vld [vmem:[#allocation2 + $0x30] sm:$0xff]
    %v2730 = vld [vmem:[#allocation2 + $0x38] sm:$0xff]
    %v2731 = vld [vmem:[#allocation2 + $0x40] sm:$0xff]
    %v2732 = vld [vmem:[#allocation2 + $0x48] sm:$0xff]
    %v2733 = vld [vmem:[#allocation2 + $0x50] sm:$0xff]
    %v2734 = vld [vmem:[#allocation2 + $0x58] sm:$0xff]
    %v2735 = vld [vmem:[#allocation2 + $0x60] sm:$0xff]
    %v2736 = vld [vmem:[#allocation2 + $0x68] sm:$0xff]
    %v2737 = vld [vmem:[#allocation2 + $0x70] sm:$0xff]
    %v2738 = vld [vmem:[#allocation2 + $0x78] sm:$0xff]
    %v2739 = vadd.f32 %v2707, %v2723
    %v2740 = vadd.f32 %v2708, %v2724
    %v2741 = vadd.f32 %v2709, %v2725
    %v2742 = vadd.f32 %v2710, %v2726
    %v2743 = vadd.f32 %v2711, %v2727
    %v2744 = vadd.f32 %v2712, %v2728
    %v2745 = vadd.f32 %v2713, %v2729
    %v2746 = vadd.f32 %v2714, %v2730
    %v2747 = vadd.f32 %v2715, %v2731
    %v2748 = vadd.f32 %v2716, %v2732
    %v2749 = vadd.f32 %v2717, %v2733
    %v2750 = vadd.f32 %v2718, %v2734
    %v2751 = vadd.f32 %v2719, %v2735
    %v2752 = vadd.f32 %v2720, %v2736
    %v2753 = vadd.f32 %v2721, %v2737
    %v2754 = vadd.f32 %v2722, %v2738
    %2755 = vst [vmem:[#allocation2] sm:$0xff] %v2739
    %2756 = vst [vmem:[#allocation2 + $0x8] sm:$0xff] %v2740
    %2757 = vst [vmem:[#allocation2 + $0x10] sm:$0xff] %v2741
    %2758 = vst [vmem:[#allocation2 + $0x18] sm:$0xff] %v2742
    %2759 = vst [vmem:[#allocation2 + $0x20] sm:$0xff] %v2743
    %2760 = vst [vmem:[#allocation2 + $0x28] sm:$0xff] %v2744
    %2761 = vst [vmem:[#allocation2 + $0x30] sm:$0xff] %v2745
    %2762 = vst [vmem:[#allocation2 + $0x38] sm:$0xff] %v2746
    %2763 = vst [vmem:[#allocation2 + $0x40] sm:$0xff] %v2747
    %2764 = vst [vmem:[#allocation2 + $0x48] sm:$0xff] %v2748
    %2765 = vst [vmem:[#allocation2 + $0x50] sm:$0xff] %v2749
    %2766 = vst [vmem:[#allocation2 + $0x58] sm:$0xff] %v2750
    %2767 = vst [vmem:[#allocation2 + $0x60] sm:$0xff] %v2751
    %2768 = vst [vmem:[#allocation2 + $0x68] sm:$0xff] %v2752
    %2769 = vst [vmem:[#allocation2 + $0x70] sm:$0xff] %v2753
    %2770 = vst [vmem:[#allocation2 + $0x78] sm:$0xff] %v2754
    %v2771 = vld [vmem:[#allocation8] sm:$0xf]
    %v2772 = vld [vmem:[#allocation2] sm:$0xff]
    %v2773 = vld [vmem:[#allocation2 + $0x8] sm:$0xff]
    %v2774 = vld [vmem:[#allocation2 + $0x10] sm:$0xff]
    %v2775 = vld [vmem:[#allocation2 + $0x18] sm:$0xff]
    %v2776 = vld [vmem:[#allocation2 + $0x20] sm:$0xff]
    %v2777 = vld [vmem:[#allocation2 + $0x28] sm:$0xff]
    %v2778 = vld [vmem:[#allocation2 + $0x30] sm:$0xff]
    %v2779 = vld [vmem:[#allocation2 + $0x38] sm:$0xff]
    %v2780 = vld [vmem:[#allocation2 + $0x40] sm:$0xff]
    %v2781 = vld [vmem:[#allocation2 + $0x48] sm:$0xff]
    %v2782 = vld [vmem:[#allocation2 + $0x50] sm:$0xff]
    %v2783 = vld [vmem:[#allocation2 + $0x58] sm:$0xff]
    %v2784 = vld [vmem:[#allocation2 + $0x60] sm:$0xff]
    %v2785 = vld [vmem:[#allocation2 + $0x68] sm:$0xff]
    %v2786 = vld [vmem:[#allocation2 + $0x70] sm:$0xff]
    %v2787 = vld [vmem:[#allocation2 + $0x78] sm:$0xff]
    %v2788 = vpack.c.bf16 %v2773, %v2772
    %v2789 = vpack.c.bf16 %v2775, %v2774
    %v2790 = vpack.c.bf16 %v2777, %v2776
    %v2791 = vpack.c.bf16 %v2779, %v2778
    %v2792 = vpack.c.bf16 %v2781, %v2780
    %v2793 = vpack.c.bf16 %v2783, %v2782
    %v2794 = vpack.c.bf16 %v2785, %v2784
    %v2795 = vpack.c.bf16 %v2787, %v2786
    %2796 = vmatpush.bf16.msra.mxu0 %v2795
    %2797 = vmatpush.bf16.msra.mxu0 %v2794
    %2798 = vmatpush.bf16.msra.mxu0 %v2793
    %2799 = vmatpush.bf16.msra.mxu0 %v2792
    %2800 = vmatpush.bf16.msra.mxu0 %v2791
    %2801 = vmatpush.bf16.msra.mxu0 %v2790
    %2802 = vmatpush.bf16.msra.mxu0 %v2789
    %2803 = vmatpush.bf16.msra.mxu0 %v2788
    %2804 = vmatmul.bf16.gmra.mxu0 %v2771
    %v2805 = vpop.f32.mrf.mxu0
    %v2806 = vadd.f32 0.0, %v2805
    %v2807 = vpop.f32.mrf.mxu0
    %2808 = vdwg.mxu0
    %v2809 = vpack.c.bf16 %v2806, %v2806
    %v2810 = vld [vmem:[#allocation17] sm:$0xf]
    %v2811 = vld [vmem:[#allocation17 + $0x4] sm:$0xf]
    %v2812 = vld [vmem:[#allocation17 + $0x8] sm:$0xf]
    %v2813 = vld [vmem:[#allocation17 + $0xc] sm:$0xf]
    %v2814 = vld [vmem:[#allocation17 + $0x10] sm:$0xf]
    %v2815 = vld [vmem:[#allocation17 + $0x14] sm:$0xf]
    %v2816 = vld [vmem:[#allocation17 + $0x18] sm:$0xf]
    %v2817 = vld [vmem:[#allocation17 + $0x1c] sm:$0xf]
    %v2818 = vld [vmem:[#allocation17 + $0x20] sm:$0xf]
    %v2819 = vld [vmem:[#allocation17 + $0x24] sm:$0xf]
    %v2820 = vld [vmem:[#allocation17 + $0x28] sm:$0xf]
    %v2821 = vld [vmem:[#allocation17 + $0x2c] sm:$0xf]
    %v2822 = vld [vmem:[#allocation17 + $0x30] sm:$0xf]
    %v2823 = vld [vmem:[#allocation17 + $0x34] sm:$0xf]
    %v2824 = vld [vmem:[#allocation17 + $0x38] sm:$0xf]
    %v2825 = vld [vmem:[#allocation17 + $0x3c] sm:$0xf]
    %v2826 = vld [vmem:[%s9] sm:$0x1]
    %v2828 = vperm.slane %v2826, 0
    %v2846 = vunpack.c.l.b16 %v2810
    %v2847 = vunpack.c.l.b16 %v2811
    %v2848 = vunpack.c.l.b16 %v2812
    %v2849 = vunpack.c.l.b16 %v2813
    %v2850 = vunpack.c.l.b16 %v2814
    %v2851 = vunpack.c.l.b16 %v2815
    %v2852 = vunpack.c.l.b16 %v2816
    %v2853 = vunpack.c.l.b16 %v2817
    %v2854 = vunpack.c.l.b16 %v2818
    %v2855 = vunpack.c.l.b16 %v2819
    %v2856 = vunpack.c.l.b16 %v2820
    %v2857 = vunpack.c.l.b16 %v2821
    %v2858 = vunpack.c.l.b16 %v2822
    %v2859 = vunpack.c.l.b16 %v2823
    %v2860 = vunpack.c.l.b16 %v2824
    %v2861 = vunpack.c.l.b16 %v2825
    %v2862 = vpack.c.b16 %v2847, %v2846
    %v2863 = vpack.c.b16 %v2849, %v2848
    %v2864 = vpack.c.b16 %v2851, %v2850
    %v2865 = vpack.c.b16 %v2853, %v2852
    %v2866 = vpack.c.b16 %v2855, %v2854
    %v2867 = vpack.c.b16 %v2857, %v2856
    %v2868 = vpack.c.b16 %v2859, %v2858
    %v2869 = vpack.c.b16 %v2861, %v2860
    %2878 = vmatpush.bf16.msra.mxu0 %v2869
    %2879 = vmatpush.bf16.msra.mxu0 %v2868
    %2880 = vmatpush.bf16.msra.mxu0 %v2867
    %2881 = vmatpush.bf16.msra.mxu0 %v2866
    %2882 = vmatpush.bf16.msra.mxu0 %v2865
    %2883 = vmatpush.bf16.msra.mxu0 %v2864
    %2884 = vmatpush.bf16.msra.mxu0 %v2863
    %2885 = vmatpush.bf16.msra.mxu0 %v2862
    %2886 = vmatmul.bf16.gmra.mxu0 %v2809
    %v2887 = vpop.f32.mrf.mxu0
    %v2888 = vadd.f32 %v2828, %v2887
    %v2889 = vpop.f32.mrf.mxu0
    %2890 = vdwg.mxu0
    %v2891 = vmax.f32 %v2888, 0.0
    %v2892 = vpack.c.bf16 %v2891, %v2891
    %v2893 = vld [vmem:[#allocation19] sm:$0xf]
    %v2894 = vld [vmem:[#allocation19 + $0x4] sm:$0xf]
    %v2895 = vld [vmem:[#allocation19 + $0x8] sm:$0xf]
    %v2896 = vld [vmem:[#allocation19 + $0xc] sm:$0xf]
    %v2897 = vld [vmem:[#allocation19 + $0x10] sm:$0xf]
    %v2898 = vld [vmem:[#allocation19 + $0x14] sm:$0xf]
    %v2899 = vld [vmem:[#allocation19 + $0x18] sm:$0xf]
    %v2900 = vld [vmem:[#allocation19 + $0x1c] sm:$0xf]
    %v2901 = vld [vmem:[#allocation19 + $0x20] sm:$0xf]
    %v2902 = vld [vmem:[#allocation19 + $0x24] sm:$0xf]
    %v2903 = vld [vmem:[#allocation19 + $0x28] sm:$0xf]
    %v2904 = vld [vmem:[#allocation19 + $0x2c] sm:$0xf]
    %v2905 = vld [vmem:[#allocation19 + $0x30] sm:$0xf]
    %v2906 = vld [vmem:[#allocation19 + $0x34] sm:$0xf]
    %v2907 = vld [vmem:[#allocation19 + $0x38] sm:$0xf]
    %v2908 = vld [vmem:[#allocation19 + $0x3c] sm:$0xf]
    %v2909 = vld [vmem:[%s11] sm:$0x1]
    %v2911 = vperm.slane %v2909, 0
    %v2929 = vunpack.c.l.b16 %v2893
    %v2930 = vunpack.c.l.b16 %v2894
    %v2931 = vunpack.c.l.b16 %v2895
    %v2932 = vunpack.c.l.b16 %v2896
    %v2933 = vunpack.c.l.b16 %v2897
    %v2934 = vunpack.c.l.b16 %v2898
    %v2935 = vunpack.c.l.b16 %v2899
    %v2936 = vunpack.c.l.b16 %v2900
    %v2937 = vunpack.c.l.b16 %v2901
    %v2938 = vunpack.c.l.b16 %v2902
    %v2939 = vunpack.c.l.b16 %v2903
    %v2940 = vunpack.c.l.b16 %v2904
    %v2941 = vunpack.c.l.b16 %v2905
    %v2942 = vunpack.c.l.b16 %v2906
    %v2943 = vunpack.c.l.b16 %v2907
    %v2944 = vunpack.c.l.b16 %v2908
    %v2945 = vpack.c.b16 %v2930, %v2929
    %v2946 = vpack.c.b16 %v2932, %v2931
    %v2947 = vpack.c.b16 %v2934, %v2933
    %v2948 = vpack.c.b16 %v2936, %v2935
    %v2949 = vpack.c.b16 %v2938, %v2937
    %v2950 = vpack.c.b16 %v2940, %v2939
    %v2951 = vpack.c.b16 %v2942, %v2941
    %v2952 = vpack.c.b16 %v2944, %v2943
    %2961 = vmatpush.bf16.msra.mxu0 %v2952
    %2962 = vmatpush.bf16.msra.mxu0 %v2951
    %2963 = vmatpush.bf16.msra.mxu0 %v2950
    %2964 = vmatpush.bf16.msra.mxu0 %v2949
    %2965 = vmatpush.bf16.msra.mxu0 %v2948
    %2966 = vmatpush.bf16.msra.mxu0 %v2947
    %2967 = vmatpush.bf16.msra.mxu0 %v2946
    %2968 = vmatpush.bf16.msra.mxu0 %v2945
    %2969 = vmatmul.bf16.gmra.mxu0 %v2892
    %v2970 = vpop.f32.mrf.mxu0
    %v2971 = vadd.f32 %v2911, %v2970
    %v2972 = vpop.f32.mrf.mxu0
    %2973 = vdwg.mxu0
    %v2974 = vmax.f32 %v2971, 0.0
    %v2975 = vpack.c.bf16 %v2974, %v2974
    %v2976 = vld [vmem:[#allocation20] sm:$0xf]
    %v2977 = vld [vmem:[#allocation20 + $0x4] sm:$0xf]
    %v2978 = vld [vmem:[#allocation20 + $0x8] sm:$0xf]
    %v2979 = vld [vmem:[#allocation20 + $0xc] sm:$0xf]
    %v2980 = vld [vmem:[#allocation20 + $0x10] sm:$0xf]
    %v2981 = vld [vmem:[#allocation20 + $0x14] sm:$0xf]
    %v2982 = vld [vmem:[#allocation20 + $0x18] sm:$0xf]
    %v2983 = vld [vmem:[#allocation20 + $0x1c] sm:$0xf]
    %v2984 = vld [vmem:[#allocation20 + $0x20] sm:$0xf]
    %v2985 = vld [vmem:[#allocation20 + $0x24] sm:$0xf]
    %v2986 = vld [vmem:[#allocation20 + $0x28] sm:$0xf]
    %v2987 = vld [vmem:[#allocation20 + $0x2c] sm:$0xf]
    %v2988 = vld [vmem:[#allocation20 + $0x30] sm:$0xf]
    %v2989 = vld [vmem:[#allocation20 + $0x34] sm:$0xf]
    %v2990 = vld [vmem:[#allocation20 + $0x38] sm:$0xf]
    %v2991 = vld [vmem:[#allocation20 + $0x3c] sm:$0xf]
    %v2992 = vld [vmem:[%s13] sm:$0x1]
    %v2994 = vperm.slane %v2992, 0
    %v3012 = vunpack.c.l.b16 %v2976
    %v3013 = vunpack.c.l.b16 %v2977
    %v3014 = vunpack.c.l.b16 %v2978
    %v3015 = vunpack.c.l.b16 %v2979
    %v3016 = vunpack.c.l.b16 %v2980
    %v3017 = vunpack.c.l.b16 %v2981
    %v3018 = vunpack.c.l.b16 %v2982
    %v3019 = vunpack.c.l.b16 %v2983
    %v3020 = vunpack.c.l.b16 %v2984
    %v3021 = vunpack.c.l.b16 %v2985
    %v3022 = vunpack.c.l.b16 %v2986
    %v3023 = vunpack.c.l.b16 %v2987
    %v3024 = vunpack.c.l.b16 %v2988
    %v3025 = vunpack.c.l.b16 %v2989
    %v3026 = vunpack.c.l.b16 %v2990
    %v3027 = vunpack.c.l.b16 %v2991
    %v3028 = vpack.c.b16 %v3013, %v3012
    %v3029 = vpack.c.b16 %v3015, %v3014
    %v3030 = vpack.c.b16 %v3017, %v3016
    %v3031 = vpack.c.b16 %v3019, %v3018
    %v3032 = vpack.c.b16 %v3021, %v3020
    %v3033 = vpack.c.b16 %v3023, %v3022
    %v3034 = vpack.c.b16 %v3025, %v3024
    %v3035 = vpack.c.b16 %v3027, %v3026
    %3044 = vmatpush.bf16.msra.mxu0 %v3035
    %3045 = vmatpush.bf16.msra.mxu0 %v3034
    %3046 = vmatpush.bf16.msra.mxu0 %v3033
    %3047 = vmatpush.bf16.msra.mxu0 %v3032
    %3048 = vmatpush.bf16.msra.mxu0 %v3031
    %3049 = vmatpush.bf16.msra.mxu0 %v3030
    %3050 = vmatpush.bf16.msra.mxu0 %v3029
    %3051 = vmatpush.bf16.msra.mxu0 %v3028
    %3052 = vmatmul.bf16.gmra.mxu0 %v2975
    %v3053 = vpop.f32.mrf.mxu0
    %v3054 = vadd.f32 %v2994, %v3053
    %v3055 = vpop.f32.mrf.mxu0
    %3056 = vdwg.mxu0
    %3057 = vst [vmem:[#allocation23] sm:$0xff] %v3054
    // Predicated region
    $region106: #{tpu_custom_call.1} parent=1 // pred_check
      _
    $region107: #{tpu_custom_call.1} parent=1 // pred_check_branch
      %3059 = sbr.rel (0) target = $region109
    $region108: #{tpu_custom_call.1} parent=1 // pred_region
      %3061 = vsyncadd [#allocation7], 0
      %s3063 = sshll.u32 [#allocation23], 4
      %s3064 = int_to_ptr.vmem [resolvable:$true] %s3063
      %s3065 = sshll.u32 %s15, 4
      %s3066 = int_to_ptr.hbm [resolvable:$true] %s3065
      %3068 = dma.vmem_to_hbm [thread:$0]  %s3064, 128, %s3066, [#allocation7]
    $region109: #{tpu_custom_call.1} parent=1 // pred_fallthru
      _
    // Predicated region
    $region110: #{tpu_custom_call.1} parent=1 // pred_check
      _
    $region111: #{tpu_custom_call.1} parent=1 // pred_check_branch
      %3070 = sbr.rel (0) target = $region113
    $region112: #{tpu_custom_call.1} parent=1 // pred_region
      %3072 = dma.done [#allocation7], 128
    $region113: #{tpu_custom_call.1} parent=1 // pred_fallthru
      _
    %3073 = vsyncpa [#allocation6], 1
    %3074 = vsyncpa [#allocation9], 1
    %3075 = vsyncpa [#allocation12], 1
    %3076 = vsyncpa [#allocation15], 1
    %3077 = vsyncpa [#allocation18], 1
    %3078 = vsyncpa [#allocation21], 1
    %3079 = vsyncpa [#allocation7], 1

</llo_original>
